<compile_context>
chip_gen: v7x
topology: tpu7x:2x2x1
jax: 0.10.0
libtpu: 0.0.40
codegen_flags: <defaults>
</compile_context>

<pallas_src>
import functools

import jax
import jax.numpy as jnp
from jax.experimental import pallas as pl
from jax.experimental.pallas import tpu as pltpu


def _convblock_kernel(x_ref, w1_ref, b1_ref, w2_ref, b2_ref, w3_ref, b3_ref,
                      o_ref, xp1_ref, xp2_ref, xp3_ref, acc_ref):
    T, TB, Cin = x_ref.shape
    K = w1_ref.shape[0]
    C1 = w1_ref.shape[2]
    C2 = w2_ref.shape[2]
    C3 = w3_ref.shape[2]
    P = K - 1
    t1 = T // 4
    t2 = t1 // 3
    f32 = jnp.float32

    # ---------------- stage 1: causal conv(8) -> avgpool(4,1) -> relu ----------
    # Causal zero-pad lives in a VMEM slab; zeroed every step so the kernel is
    # safe under megacore grid partitioning.
    xp1_ref[0:P] = jnp.zeros((P, TB, Cin), xp1_ref.dtype)
    xp1_ref[P:P + T] = x_ref[...]

    m1 = T * TB
    acc_ref[...] = jnp.dot(
        xp1_ref[0:T].reshape(m1, Cin).astype(jnp.bfloat16), w1_ref[0],
        preferred_element_type=f32)
    for k in range(1, K):
        acc_ref[...] += jnp.dot(
            xp1_ref[k:k + T].reshape(m1, Cin).astype(jnp.bfloat16), w1_ref[k],
            preferred_element_type=f32)

    y = (acc_ref[...] + b1_ref[0]).reshape(t1, 4, TB, C1)
    y = (y[:, 0] + y[:, 1] + y[:, 2] + y[:, 3]) * 0.25        # AvgPool2d((4,1))
    y = jnp.maximum(y, 0.0)                                   # ReLU -> (t1, TB, C1)

    # ---------------- stage 2: causal conv(8) -> avgpool(3,1) -> relu ----------
    xp2_ref[0:P] = jnp.zeros((P, TB, C1), xp2_ref.dtype)
    xp2_ref[P:P + t1] = y

    m2 = t1 * TB
    acc_ref[0:m2, :] = jnp.dot(
        xp2_ref[0:t1].reshape(m2, C1).astype(jnp.bfloat16), w2_ref[0],
        preferred_element_type=f32)
    for k in range(1, K):
        acc_ref[0:m2, :] += jnp.dot(
            xp2_ref[k:k + t1].reshape(m2, C1).astype(jnp.bfloat16), w2_ref[k],
            preferred_element_type=f32)

    y = (acc_ref[0:m2, :] + b2_ref[0]).reshape(t2, 3, TB, C2)
    y = (y[:, 0] + y[:, 1] + y[:, 2]) * (1.0 / 3.0)           # AvgPool2d((3,1))
    y = jnp.maximum(y, 0.0)                                   # ReLU -> (t2, TB, C2)

    # ---------------- stage 3: causal conv(8) -> tanh (kept in f32, tiny) ------
    xp3_ref[0:P] = jnp.zeros((P, TB, C2), xp3_ref.dtype)
    xp3_ref[P:P + t2] = y

    m3 = t2 * TB
    acc3 = jnp.dot(xp3_ref[0:t2].reshape(m3, C2), w3_ref[0],
                   preferred_element_type=f32)
    for k in range(1, K):
        acc3 = acc3 + jnp.dot(xp3_ref[k:k + t2].reshape(m3, C2), w3_ref[k],
                              preferred_element_type=f32)

    y = jnp.tanh(acc3 + b3_ref[0])                            # (m3, C3)
    o_ref[...] = y.reshape(t2, TB, C3).astype(o_ref.dtype)


def conv_block_forward(x_nchw, params, *, rows_target=512):
    """ConvBlock forward. x_nchw: (N, 128, H, W) -> (N, 4, H//12, W)."""
    (w1, b1), (w2, b2), (w3, b3) = params        # w: (K, Cin, Cout), b: (Cout,)
    N, C, H, W = x_nchw.shape
    K, Cin, C1 = w1.shape
    C2 = w2.shape[2]
    C3 = w3.shape[2]
    assert C == Cin == 128
    assert C1 == C2 == 128       # stage-1/2 share the f32 accumulator scratch
    # TODO(synk): H not divisible by 12 (floor-mode AvgPool tails) is not
    # supported; PyTorch would silently drop trailing rows in that case.
    assert H % 12 == 0
    T, t1, t2 = H, H // 4, H // 12
    B = N * W

    # NCHW -> time-major (T, B=N*W, C): W is a pure batch dim (kernel width 1),
    # channels land on the 128-lane axis so each conv tap is an MXU matmul.
    x = jnp.transpose(x_nchw, (2, 0, 3, 1)).reshape(T, B, C)

    # Batch tile: multiple of 8 (so (T,TB,C)<->(T*TB,C) casts are layout no-ops),
    # M = T*TB ~ rows_target per tap, and >= 2 grid steps when B allows so both
    # TensorCores get work on v7x under dimension_semantics=("parallel",).
    TB = max(8, 8 * (rows_target // (8 * T)))
    while TB > 8 and -(-B // TB) < 2:
        TB -= 8
    Bp = -(-B // TB) * TB
    if Bp != B:
        x = jnp.pad(x, ((0, 0), (0, Bp - B), (0, 0)))

    out = pl.pallas_call(
        _convblock_kernel,
        out_shape=jax.ShapeDtypeStruct((t2, Bp, C3), x_nchw.dtype),
        grid=(Bp // TB,),
        in_specs=[
            pl.BlockSpec((T, TB, Cin), lambda i: (0, i, 0)),
            pl.BlockSpec((K, Cin, C1), lambda i: (0, 0, 0)),
            pl.BlockSpec((1, C1), lambda i: (0, 0)),
            pl.BlockSpec((K, C1, C2), lambda i: (0, 0, 0)),
            pl.BlockSpec((1, C2), lambda i: (0, 0)),
            pl.BlockSpec((K, C2, C3), lambda i: (0, 0, 0)),
            pl.BlockSpec((1, C3), lambda i: (0, 0)),
        ],
        out_specs=pl.BlockSpec((t2, TB, C3), lambda i: (0, i, 0)),
        scratch_shapes=[
            pltpu.VMEM((T + K - 1, TB, Cin), jnp.float32),    # stage-1 padded slab
            pltpu.VMEM((t1 + K - 1, TB, C1), jnp.float32),    # stage-2 padded slab
            pltpu.VMEM((t2 + K - 1, TB, C2), jnp.float32),    # stage-3 padded slab
            pltpu.VMEM((T * TB, C1), jnp.float32),            # shared f32 accumulator
        ],
        compiler_params=pltpu.CompilerParams(
            dimension_semantics=("parallel",),
            vmem_limit_bytes=64 * 1024 * 1024),
    )(x,
      w1.astype(jnp.bfloat16), b1.reshape(1, C1).astype(jnp.float32),
      w2.astype(jnp.bfloat16), b2.reshape(1, C2).astype(jnp.float32),
      w3.astype(jnp.float32), b3.reshape(1, C3).astype(jnp.float32))

    out = out[:, :B, :]                                       # drop batch padding
    # (t2, N*W, 4) -> (N, 4, t2, W)
    return jnp.transpose(out.reshape(t2, N, W, C3), (1, 3, 0, 2))


def reference_forward(x_nchw, torch_params,
                      matmul_dtypes=(jnp.float32, jnp.float32, jnp.float32)):
    """Pure-JAX NCHW reference mirroring the PyTorch module.

    `matmul_dtypes` lets the reference reproduce the kernel's per-stage matmul
    input dtypes (bf16, bf16, f32) for a tight structural comparison; the
    default (all f32, HIGHEST precision) is the PyTorch-faithful reference.
    """
    def conv(x, w, b, mm_dtype):               # w: (Cout, Cin, K, 1) PyTorch layout
        K = w.shape[2]
        H = x.shape[2]
        prec = (jax.lax.Precision.HIGHEST if mm_dtype == jnp.float32
                else jax.lax.Precision.DEFAULT)
        xc = x.astype(mm_dtype)
        wc = w[:, :, :, 0].astype(mm_dtype)
        xp = jnp.pad(xc, ((0, 0), (0, 0), (K - 1, 0), (0, 0)))
        out = jnp.zeros((x.shape[0], w.shape[0], H, x.shape[3]), jnp.float32)
        for k in range(K):
            out = out + jnp.einsum("nchw,oc->nohw", xp[:, :, k:k + H, :], wc[:, :, k],
                                   precision=prec,
                                   preferred_element_type=jnp.float32)
        return out + b[None, :, None, None]

    def avgpool_h(x, p):
        n, c, h, w = x.shape
        ho = h // p
        return x[:, :, :ho * p, :].reshape(n, c, ho, p, w).mean(axis=3)

    (w1, b1), (w2, b2), (w3, b3) = torch_params
    d1, d2, d3 = matmul_dtypes
    y = jax.nn.relu(avgpool_h(conv(x_nchw, w1, b1, d1), 4))
    y = jax.nn.relu(avgpool_h(conv(y, w2, b2, d2), 3))
    return jnp.tanh(conv(y, w3, b3, d3))


def make_params(key):
    """Deterministic params in PyTorch Conv2d layout (Cout, Cin, K, 1)."""
    ks = jax.random.split(key, 6)
    shapes = [(128, 128, 8, 1), (128, 128, 8, 1), (4, 128, 8, 1)]
    torch_params = []
    for i, shp in enumerate(shapes):
        w = jax.random.normal(ks[2 * i], shp, jnp.float32) * 0.05
        b = jax.random.normal(ks[2 * i + 1], (shp[0],), jnp.float32) * 0.01
        torch_params.append((w, b))
    # Kernel layout: (K, Cin, Cout)
    kernel_params = [(jnp.transpose(w[:, :, :, 0], (2, 1, 0)), b)
                     for (w, b) in torch_params]
    return torch_params, kernel_params


if __name__ == "__main__":
    key = jax.random.PRNGKey(0)
    kx, kp = jax.random.split(key)

    # Small shapes consistent with the module: C_in is fixed at 128 by the
    # convs; H must be divisible by 12 (4x then 3x avg-pooling along H).
    N, C, H, W = 2, 128, 24, 8
    x = jax.random.normal(kx, (N, C, H, W), jnp.float32)

    torch_params, kernel_params = make_params(kp)

    out = jax.jit(conv_block_forward)(x, kernel_params)
    out = jax.block_until_ready(out)
    assert out.shape == (N, 4, H // 12, W), out.shape

    # 1) Structural check: reference using the kernel's per-stage matmul dtypes
    #    (bf16, bf16, f32) must match tightly.
    ref_matched = reference_forward(
        x, torch_params, matmul_dtypes=(jnp.bfloat16, jnp.bfloat16, jnp.float32))
    assert jnp.allclose(out, ref_matched, rtol=2e-3, atol=2e-3), (
        float(jnp.max(jnp.abs(out - ref_matched))))

    # 2) Semantics check vs the full-f32 PyTorch-equivalent reference; the gap
    #    is only the bf16-vs-f32 matmul delta of stages 1-2.
    ref_exact = reference_forward(x, torch_params)
    assert jnp.allclose(out, ref_exact, rtol=5e-2, atol=5e-2), (
        float(jnp.max(jnp.abs(out - ref_exact))))

    print("KERNEL_OK")
</pallas_src>

<mosaic_0001>
module attributes {stable_mosaic.version = 11 : i64} {
  func.func @_convblock_kernel(%arg0: i32, %arg1: memref<24x8x128xf32, #tpu.memory_space<vmem>>, %arg2: memref<8x128x128xbf16, #tpu.memory_space<vmem>>, %arg3: memref<1x128xf32, #tpu.memory_space<vmem>>, %arg4: memref<8x128x128xbf16, #tpu.memory_space<vmem>>, %arg5: memref<1x128xf32, #tpu.memory_space<vmem>>, %arg6: memref<8x128x4xf32, #tpu.memory_space<vmem>>, %arg7: memref<1x4xf32, #tpu.memory_space<vmem>>, %arg8: memref<2x8x4xf32, #tpu.memory_space<vmem>>, %arg9: memref<31x8x128xf32, #tpu.memory_space<vmem>>, %arg10: memref<13x8x128xf32, #tpu.memory_space<vmem>>, %arg11: memref<9x8x128xf32, #tpu.memory_space<vmem>>, %arg12: memref<192x128xf32, #tpu.memory_space<vmem>>) attributes {dimension_semantics = [#tpu.dimension_semantics<parallel>], iteration_bounds = array<i64: 2>, scalar_prefetch = 0 : i64, scratch_operands = 4 : i64, tpu.core_type = #tpu.core_type<tc>, window_params = [{transform_indices = @transform_0, window_bounds = array<i64: 24, 8, 128>}, {pipeline_mode = #tpu.pipeline_mode<synchronous>, transform_indices = @transform_1, window_bounds = array<i64: 8, 128, 128>}, {pipeline_mode = #tpu.pipeline_mode<synchronous>, transform_indices = @transform_2, window_bounds = array<i64: 1, 128>}, {pipeline_mode = #tpu.pipeline_mode<synchronous>, transform_indices = @transform_3, window_bounds = array<i64: 8, 128, 128>}, {pipeline_mode = #tpu.pipeline_mode<synchronous>, transform_indices = @transform_4, window_bounds = array<i64: 1, 128>}, {pipeline_mode = #tpu.pipeline_mode<synchronous>, transform_indices = @transform_5, window_bounds = array<i64: 8, 128, 4>}, {pipeline_mode = #tpu.pipeline_mode<synchronous>, transform_indices = @transform_6, window_bounds = array<i64: 1, 4>}, {transform_indices = @transform_7, window_bounds = array<i64: 2, 8, 4>}]} {
    %cst = arith.constant 0.000000e+00 : f32
    %0 = vector.broadcast %cst : f32 to vector<7x8x128xf32>
    %c0 = arith.constant 0 : index
    %c0_0 = arith.constant 0 : index
    %c0_1 = arith.constant 0 : index
    %1 = vector.load %arg9[%c0, %c0_0, %c0_1] : memref<31x8x128xf32, #tpu.memory_space<vmem>>, vector<7x8x128xf32>
    tpu.vector_store %arg9[%c0, %c0_0, %c0_1], %0 {strides = array<i32>} : memref<31x8x128xf32, #tpu.memory_space<vmem>>, vector<7x8x128xf32>,
    %c0_2 = arith.constant 0 : index
    %c0_3 = arith.constant 0 : index
    %c0_4 = arith.constant 0 : index
    %2 = vector.load %arg1[%c0_2, %c0_3, %c0_4] : memref<24x8x128xf32, #tpu.memory_space<vmem>>, vector<24x8x128xf32>
    %c7 = arith.constant 7 : index
    %c0_5 = arith.constant 0 : index
    %c0_6 = arith.constant 0 : index
    %3 = vector.load %arg9[%c7, %c0_5, %c0_6] : memref<31x8x128xf32, #tpu.memory_space<vmem>>, vector<24x8x128xf32>
    tpu.vector_store %arg9[%c7, %c0_5, %c0_6], %2 {strides = array<i32>} : memref<31x8x128xf32, #tpu.memory_space<vmem>>, vector<24x8x128xf32>,
    %c0_7 = arith.constant 0 : index
    %c0_8 = arith.constant 0 : index
    %c0_9 = arith.constant 0 : index
    %4 = vector.load %arg9[%c0_7, %c0_8, %c0_9] : memref<31x8x128xf32, #tpu.memory_space<vmem>>, vector<24x8x128xf32>
    %5 = vector.shape_cast %4 : vector<24x8x128xf32> to vector<192x128xf32>
    %6 = arith.truncf %5 : vector<192x128xf32> to vector<192x128xbf16>
    %c0_10 = arith.constant 0 : index
    %c0_11 = arith.constant 0 : index
    %c0_12 = arith.constant 0 : index
    %7 = vector.load %arg2[%c0_10, %c0_11, %c0_12] : memref<8x128x128xbf16, #tpu.memory_space<vmem>>, vector<1x128x128xbf16>
    %8 = vector.shape_cast %7 : vector<1x128x128xbf16> to vector<128x128xbf16>
    %cst_13 = arith.constant dense<0.000000e+00> : vector<192x128xf32>
    %9 = tpu.matmul %6, %8, %cst_13 {dimension_numbers = #tpu.dot_dimension_numbers<[1], [0], [0], [1], [0, 0, 1, 1], [], []>} : vector<192x128xbf16>, vector<128x128xbf16>, vector<192x128xf32> -> vector<192x128xf32>
    %c0_14 = arith.constant 0 : index
    %c0_15 = arith.constant 0 : index
    %10 = vector.load %arg12[%c0_14, %c0_15] : memref<192x128xf32, #tpu.memory_space<vmem>>, vector<192x128xf32>
    tpu.vector_store %arg12[%c0_14, %c0_15], %9 {strides = array<i32>} : memref<192x128xf32, #tpu.memory_space<vmem>>, vector<192x128xf32>,
    %c0_16 = arith.constant 0 : index
    %c0_17 = arith.constant 0 : index
    %11 = vector.load %arg12[%c0_16, %c0_17] : memref<192x128xf32, #tpu.memory_space<vmem>>, vector<192x128xf32>
    %c1 = arith.constant 1 : index
    %c0_18 = arith.constant 0 : index
    %c0_19 = arith.constant 0 : index
    %12 = vector.load %arg9[%c1, %c0_18, %c0_19] : memref<31x8x128xf32, #tpu.memory_space<vmem>>, vector<24x8x128xf32>
    %13 = vector.shape_cast %12 : vector<24x8x128xf32> to vector<192x128xf32>
    %14 = arith.truncf %13 : vector<192x128xf32> to vector<192x128xbf16>
    %c1_20 = arith.constant 1 : index
    %c0_21 = arith.constant 0 : index
    %c0_22 = arith.constant 0 : index
    %15 = vector.load %arg2[%c1_20, %c0_21, %c0_22] : memref<8x128x128xbf16, #tpu.memory_space<vmem>>, vector<1x128x128xbf16>
    %16 = vector.shape_cast %15 : vector<1x128x128xbf16> to vector<128x128xbf16>
    %cst_23 = arith.constant dense<0.000000e+00> : vector<192x128xf32>
    %17 = tpu.matmul %14, %16, %cst_23 {dimension_numbers = #tpu.dot_dimension_numbers<[1], [0], [0], [1], [0, 0, 1, 1], [], []>} : vector<192x128xbf16>, vector<128x128xbf16>, vector<192x128xf32> -> vector<192x128xf32>
    %18 = arith.addf %11, %17 : vector<192x128xf32>
    %c0_24 = arith.constant 0 : index
    %c0_25 = arith.constant 0 : index
    %19 = vector.load %arg12[%c0_24, %c0_25] : memref<192x128xf32, #tpu.memory_space<vmem>>, vector<192x128xf32>
    tpu.vector_store %arg12[%c0_24, %c0_25], %18 {strides = array<i32>} : memref<192x128xf32, #tpu.memory_space<vmem>>, vector<192x128xf32>,
    %c0_26 = arith.constant 0 : index
    %c0_27 = arith.constant 0 : index
    %20 = vector.load %arg12[%c0_26, %c0_27] : memref<192x128xf32, #tpu.memory_space<vmem>>, vector<192x128xf32>
    %c2 = arith.constant 2 : index
    %c0_28 = arith.constant 0 : index
    %c0_29 = arith.constant 0 : index
    %21 = vector.load %arg9[%c2, %c0_28, %c0_29] : memref<31x8x128xf32, #tpu.memory_space<vmem>>, vector<24x8x128xf32>
    %22 = vector.shape_cast %21 : vector<24x8x128xf32> to vector<192x128xf32>
    %23 = arith.truncf %22 : vector<192x128xf32> to vector<192x128xbf16>
    %c2_30 = arith.constant 2 : index
    %c0_31 = arith.constant 0 : index
    %c0_32 = arith.constant 0 : index
    %24 = vector.load %arg2[%c2_30, %c0_31, %c0_32] : memref<8x128x128xbf16, #tpu.memory_space<vmem>>, vector<1x128x128xbf16>
    %25 = vector.shape_cast %24 : vector<1x128x128xbf16> to vector<128x128xbf16>
    %cst_33 = arith.constant dense<0.000000e+00> : vector<192x128xf32>
    %26 = tpu.matmul %23, %25, %cst_33 {dimension_numbers = #tpu.dot_dimension_numbers<[1], [0], [0], [1], [0, 0, 1, 1], [], []>} : vector<192x128xbf16>, vector<128x128xbf16>, vector<192x128xf32> -> vector<192x128xf32>
    %27 = arith.addf %20, %26 : vector<192x128xf32>
    %c0_34 = arith.constant 0 : index
    %c0_35 = arith.constant 0 : index
    %28 = vector.load %arg12[%c0_34, %c0_35] : memref<192x128xf32, #tpu.memory_space<vmem>>, vector<192x128xf32>
    tpu.vector_store %arg12[%c0_34, %c0_35], %27 {strides = array<i32>} : memref<192x128xf32, #tpu.memory_space<vmem>>, vector<192x128xf32>,
    %c0_36 = arith.constant 0 : index
    %c0_37 = arith.constant 0 : index
    %29 = vector.load %arg12[%c0_36, %c0_37] : memref<192x128xf32, #tpu.memory_space<vmem>>, vector<192x128xf32>
    %c3 = arith.constant 3 : index
    %c0_38 = arith.constant 0 : index
    %c0_39 = arith.constant 0 : index
    %30 = vector.load %arg9[%c3, %c0_38, %c0_39] : memref<31x8x128xf32, #tpu.memory_space<vmem>>, vector<24x8x128xf32>
    %31 = vector.shape_cast %30 : vector<24x8x128xf32> to vector<192x128xf32>
    %32 = arith.truncf %31 : vector<192x128xf32> to vector<192x128xbf16>
    %c3_40 = arith.constant 3 : index
    %c0_41 = arith.constant 0 : index
    %c0_42 = arith.constant 0 : index
    %33 = vector.load %arg2[%c3_40, %c0_41, %c0_42] : memref<8x128x128xbf16, #tpu.memory_space<vmem>>, vector<1x128x128xbf16>
    %34 = vector.shape_cast %33 : vector<1x128x128xbf16> to vector<128x128xbf16>
    %cst_43 = arith.constant dense<0.000000e+00> : vector<192x128xf32>
    %35 = tpu.matmul %32, %34, %cst_43 {dimension_numbers = #tpu.dot_dimension_numbers<[1], [0], [0], [1], [0, 0, 1, 1], [], []>} : vector<192x128xbf16>, vector<128x128xbf16>, vector<192x128xf32> -> vector<192x128xf32>
    %36 = arith.addf %29, %35 : vector<192x128xf32>
    %c0_44 = arith.constant 0 : index
    %c0_45 = arith.constant 0 : index
    %37 = vector.load %arg12[%c0_44, %c0_45] : memref<192x128xf32, #tpu.memory_space<vmem>>, vector<192x128xf32>
    tpu.vector_store %arg12[%c0_44, %c0_45], %36 {strides = array<i32>} : memref<192x128xf32, #tpu.memory_space<vmem>>, vector<192x128xf32>,
    %c0_46 = arith.constant 0 : index
    %c0_47 = arith.constant 0 : index
    %38 = vector.load %arg12[%c0_46, %c0_47] : memref<192x128xf32, #tpu.memory_space<vmem>>, vector<192x128xf32>
    %c4 = arith.constant 4 : index
    %c0_48 = arith.constant 0 : index
    %c0_49 = arith.constant 0 : index
    %39 = vector.load %arg9[%c4, %c0_48, %c0_49] : memref<31x8x128xf32, #tpu.memory_space<vmem>>, vector<24x8x128xf32>
    %40 = vector.shape_cast %39 : vector<24x8x128xf32> to vector<192x128xf32>
    %41 = arith.truncf %40 : vector<192x128xf32> to vector<192x128xbf16>
    %c4_50 = arith.constant 4 : index
    %c0_51 = arith.constant 0 : index
    %c0_52 = arith.constant 0 : index
    %42 = vector.load %arg2[%c4_50, %c0_51, %c0_52] : memref<8x128x128xbf16, #tpu.memory_space<vmem>>, vector<1x128x128xbf16>
    %43 = vector.shape_cast %42 : vector<1x128x128xbf16> to vector<128x128xbf16>
    %cst_53 = arith.constant dense<0.000000e+00> : vector<192x128xf32>
    %44 = tpu.matmul %41, %43, %cst_53 {dimension_numbers = #tpu.dot_dimension_numbers<[1], [0], [0], [1], [0, 0, 1, 1], [], []>} : vector<192x128xbf16>, vector<128x128xbf16>, vector<192x128xf32> -> vector<192x128xf32>
    %45 = arith.addf %38, %44 : vector<192x128xf32>
    %c0_54 = arith.constant 0 : index
    %c0_55 = arith.constant 0 : index
    %46 = vector.load %arg12[%c0_54, %c0_55] : memref<192x128xf32, #tpu.memory_space<vmem>>, vector<192x128xf32>
    tpu.vector_store %arg12[%c0_54, %c0_55], %45 {strides = array<i32>} : memref<192x128xf32, #tpu.memory_space<vmem>>, vector<192x128xf32>,
    %c0_56 = arith.constant 0 : index
    %c0_57 = arith.constant 0 : index
    %47 = vector.load %arg12[%c0_56, %c0_57] : memref<192x128xf32, #tpu.memory_space<vmem>>, vector<192x128xf32>
    %c5 = arith.constant 5 : index
    %c0_58 = arith.constant 0 : index
    %c0_59 = arith.constant 0 : index
    %48 = vector.load %arg9[%c5, %c0_58, %c0_59] : memref<31x8x128xf32, #tpu.memory_space<vmem>>, vector<24x8x128xf32>
    %49 = vector.shape_cast %48 : vector<24x8x128xf32> to vector<192x128xf32>
    %50 = arith.truncf %49 : vector<192x128xf32> to vector<192x128xbf16>
    %c5_60 = arith.constant 5 : index
    %c0_61 = arith.constant 0 : index
    %c0_62 = arith.constant 0 : index
    %51 = vector.load %arg2[%c5_60, %c0_61, %c0_62] : memref<8x128x128xbf16, #tpu.memory_space<vmem>>, vector<1x128x128xbf16>
    %52 = vector.shape_cast %51 : vector<1x128x128xbf16> to vector<128x128xbf16>
    %cst_63 = arith.constant dense<0.000000e+00> : vector<192x128xf32>
    %53 = tpu.matmul %50, %52, %cst_63 {dimension_numbers = #tpu.dot_dimension_numbers<[1], [0], [0], [1], [0, 0, 1, 1], [], []>} : vector<192x128xbf16>, vector<128x128xbf16>, vector<192x128xf32> -> vector<192x128xf32>
    %54 = arith.addf %47, %53 : vector<192x128xf32>
    %c0_64 = arith.constant 0 : index
    %c0_65 = arith.constant 0 : index
    %55 = vector.load %arg12[%c0_64, %c0_65] : memref<192x128xf32, #tpu.memory_space<vmem>>, vector<192x128xf32>
    tpu.vector_store %arg12[%c0_64, %c0_65], %54 {strides = array<i32>} : memref<192x128xf32, #tpu.memory_space<vmem>>, vector<192x128xf32>,
    %c0_66 = arith.constant 0 : index
    %c0_67 = arith.constant 0 : index
    %56 = vector.load %arg12[%c0_66, %c0_67] : memref<192x128xf32, #tpu.memory_space<vmem>>, vector<192x128xf32>
    %c6 = arith.constant 6 : index
    %c0_68 = arith.constant 0 : index
    %c0_69 = arith.constant 0 : index
    %57 = vector.load %arg9[%c6, %c0_68, %c0_69] : memref<31x8x128xf32, #tpu.memory_space<vmem>>, vector<24x8x128xf32>
    %58 = vector.shape_cast %57 : vector<24x8x128xf32> to vector<192x128xf32>
    %59 = arith.truncf %58 : vector<192x128xf32> to vector<192x128xbf16>
    %c6_70 = arith.constant 6 : index
    %c0_71 = arith.constant 0 : index
    %c0_72 = arith.constant 0 : index
    %60 = vector.load %arg2[%c6_70, %c0_71, %c0_72] : memref<8x128x128xbf16, #tpu.memory_space<vmem>>, vector<1x128x128xbf16>
    %61 = vector.shape_cast %60 : vector<1x128x128xbf16> to vector<128x128xbf16>
    %cst_73 = arith.constant dense<0.000000e+00> : vector<192x128xf32>
    %62 = tpu.matmul %59, %61, %cst_73 {dimension_numbers = #tpu.dot_dimension_numbers<[1], [0], [0], [1], [0, 0, 1, 1], [], []>} : vector<192x128xbf16>, vector<128x128xbf16>, vector<192x128xf32> -> vector<192x128xf32>
    %63 = arith.addf %56, %62 : vector<192x128xf32>
    %c0_74 = arith.constant 0 : index
    %c0_75 = arith.constant 0 : index
    %64 = vector.load %arg12[%c0_74, %c0_75] : memref<192x128xf32, #tpu.memory_space<vmem>>, vector<192x128xf32>
    tpu.vector_store %arg12[%c0_74, %c0_75], %63 {strides = array<i32>} : memref<192x128xf32, #tpu.memory_space<vmem>>, vector<192x128xf32>,
    %c0_76 = arith.constant 0 : index
    %c0_77 = arith.constant 0 : index
    %65 = vector.load %arg12[%c0_76, %c0_77] : memref<192x128xf32, #tpu.memory_space<vmem>>, vector<192x128xf32>
    %c7_78 = arith.constant 7 : index
    %c0_79 = arith.constant 0 : index
    %c0_80 = arith.constant 0 : index
    %66 = vector.load %arg9[%c7_78, %c0_79, %c0_80] : memref<31x8x128xf32, #tpu.memory_space<vmem>>, vector<24x8x128xf32>
    %67 = vector.shape_cast %66 : vector<24x8x128xf32> to vector<192x128xf32>
    %68 = arith.truncf %67 : vector<192x128xf32> to vector<192x128xbf16>
    %c7_81 = arith.constant 7 : index
    %c0_82 = arith.constant 0 : index
    %c0_83 = arith.constant 0 : index
    %69 = vector.load %arg2[%c7_81, %c0_82, %c0_83] : memref<8x128x128xbf16, #tpu.memory_space<vmem>>, vector<1x128x128xbf16>
    %70 = vector.shape_cast %69 : vector<1x128x128xbf16> to vector<128x128xbf16>
    %cst_84 = arith.constant dense<0.000000e+00> : vector<192x128xf32>
    %71 = tpu.matmul %68, %70, %cst_84 {dimension_numbers = #tpu.dot_dimension_numbers<[1], [0], [0], [1], [0, 0, 1, 1], [], []>} : vector<192x128xbf16>, vector<128x128xbf16>, vector<192x128xf32> -> vector<192x128xf32>
    %72 = arith.addf %65, %71 : vector<192x128xf32>
    %c0_85 = arith.constant 0 : index
    %c0_86 = arith.constant 0 : index
    %73 = vector.load %arg12[%c0_85, %c0_86] : memref<192x128xf32, #tpu.memory_space<vmem>>, vector<192x128xf32>
    tpu.vector_store %arg12[%c0_85, %c0_86], %72 {strides = array<i32>} : memref<192x128xf32, #tpu.memory_space<vmem>>, vector<192x128xf32>,
    %c0_87 = arith.constant 0 : index
    %c0_88 = arith.constant 0 : index
    %74 = vector.load %arg12[%c0_87, %c0_88] : memref<192x128xf32, #tpu.memory_space<vmem>>, vector<192x128xf32>
    %c0_89 = arith.constant 0 : index
    %c0_90 = arith.constant 0 : index
    %75 = vector.load %arg3[%c0_89, %c0_90] : memref<1x128xf32, #tpu.memory_space<vmem>>, vector<1x128xf32>
    %76 = vector.shape_cast %75 : vector<1x128xf32> to vector<128xf32>
    %77 = vector.shape_cast %76 : vector<128xf32> to vector<1x128xf32>
    %78 = vector.broadcast %77 : vector<1x128xf32> to vector<192x128xf32>
    %79 = arith.addf %74, %78 : vector<192x128xf32>
    %80 = vector.shape_cast %79 : vector<192x128xf32> to vector<6x4x8x128xf32>
    %81 = vector.extract_strided_slice %80 {offsets = [0, 0, 0, 0], sizes = [6, 1, 8, 128], strides = [1, 1, 1, 1]} : vector<6x4x8x128xf32> to vector<6x1x8x128xf32>
    %82 = vector.shape_cast %81 : vector<6x1x8x128xf32> to vector<6x8x128xf32>
    %83 = vector.extract_strided_slice %80 {offsets = [0, 1, 0, 0], sizes = [6, 1, 8, 128], strides = [1, 1, 1, 1]} : vector<6x4x8x128xf32> to vector<6x1x8x128xf32>
    %84 = vector.shape_cast %83 : vector<6x1x8x128xf32> to vector<6x8x128xf32>
    %85 = arith.addf %82, %84 : vector<6x8x128xf32>
    %86 = vector.extract_strided_slice %80 {offsets = [0, 2, 0, 0], sizes = [6, 1, 8, 128], strides = [1, 1, 1, 1]} : vector<6x4x8x128xf32> to vector<6x1x8x128xf32>
    %87 = vector.shape_cast %86 : vector<6x1x8x128xf32> to vector<6x8x128xf32>
    %88 = arith.addf %85, %87 : vector<6x8x128xf32>
    %89 = vector.extract_strided_slice %80 {offsets = [0, 3, 0, 0], sizes = [6, 1, 8, 128], strides = [1, 1, 1, 1]} : vector<6x4x8x128xf32> to vector<6x1x8x128xf32>
    %90 = vector.shape_cast %89 : vector<6x1x8x128xf32> to vector<6x8x128xf32>
    %91 = arith.addf %88, %90 : vector<6x8x128xf32>
    %cst_91 = arith.constant 2.500000e-01 : f32
    %92 = vector.broadcast %cst_91 : f32 to vector<6x8x128xf32>
    %93 = arith.mulf %91, %92 : vector<6x8x128xf32>
    %cst_92 = arith.constant 0.000000e+00 : f32
    %94 = vector.broadcast %cst_92 : f32 to vector<6x8x128xf32>
    %95 = arith.maximumf %93, %94 : vector<6x8x128xf32>
    %cst_93 = arith.constant 0.000000e+00 : f32
    %96 = vector.broadcast %cst_93 : f32 to vector<7x8x128xf32>
    %c0_94 = arith.constant 0 : index
    %c0_95 = arith.constant 0 : index
    %c0_96 = arith.constant 0 : index
    %97 = vector.load %arg10[%c0_94, %c0_95, %c0_96] : memref<13x8x128xf32, #tpu.memory_space<vmem>>, vector<7x8x128xf32>
    tpu.vector_store %arg10[%c0_94, %c0_95, %c0_96], %96 {strides = array<i32>} : memref<13x8x128xf32, #tpu.memory_space<vmem>>, vector<7x8x128xf32>,
    %c7_97 = arith.constant 7 : index
    %c0_98 = arith.constant 0 : index
    %c0_99 = arith.constant 0 : index
    %98 = vector.load %arg10[%c7_97, %c0_98, %c0_99] : memref<13x8x128xf32, #tpu.memory_space<vmem>>, vector<6x8x128xf32>
    tpu.vector_store %arg10[%c7_97, %c0_98, %c0_99], %95 {strides = array<i32>} : memref<13x8x128xf32, #tpu.memory_space<vmem>>, vector<6x8x128xf32>,
    %c0_100 = arith.constant 0 : index
    %c0_101 = arith.constant 0 : index
    %c0_102 = arith.constant 0 : index
    %99 = vector.load %arg10[%c0_100, %c0_101, %c0_102] : memref<13x8x128xf32, #tpu.memory_space<vmem>>, vector<6x8x128xf32>
    %100 = vector.shape_cast %99 : vector<6x8x128xf32> to vector<48x128xf32>
    %101 = arith.truncf %100 : vector<48x128xf32> to vector<48x128xbf16>
    %c0_103 = arith.constant 0 : index
    %c0_104 = arith.constant 0 : index
    %c0_105 = arith.constant 0 : index
    %102 = vector.load %arg4[%c0_103, %c0_104, %c0_105] : memref<8x128x128xbf16, #tpu.memory_space<vmem>>, vector<1x128x128xbf16>
    %103 = vector.shape_cast %102 : vector<1x128x128xbf16> to vector<128x128xbf16>
    %cst_106 = arith.constant dense<0.000000e+00> : vector<48x128xf32>
    %104 = tpu.matmul %101, %103, %cst_106 {dimension_numbers = #tpu.dot_dimension_numbers<[1], [0], [0], [1], [0, 0, 1, 1], [], []>} : vector<48x128xbf16>, vector<128x128xbf16>, vector<48x128xf32> -> vector<48x128xf32>
    %c0_107 = arith.constant 0 : index
    %c0_108 = arith.constant 0 : index
    %105 = vector.load %arg12[%c0_107, %c0_108] : memref<192x128xf32, #tpu.memory_space<vmem>>, vector<48x128xf32>
    tpu.vector_store %arg12[%c0_107, %c0_108], %104 {strides = array<i32>} : memref<192x128xf32, #tpu.memory_space<vmem>>, vector<48x128xf32>,
    %c0_109 = arith.constant 0 : index
    %c0_110 = arith.constant 0 : index
    %106 = vector.load %arg12[%c0_109, %c0_110] : memref<192x128xf32, #tpu.memory_space<vmem>>, vector<48x128xf32>
    %c1_111 = arith.constant 1 : index
    %c0_112 = arith.constant 0 : index
    %c0_113 = arith.constant 0 : index
    %107 = vector.load %arg10[%c1_111, %c0_112, %c0_113] : memref<13x8x128xf32, #tpu.memory_space<vmem>>, vector<6x8x128xf32>
    %108 = vector.shape_cast %107 : vector<6x8x128xf32> to vector<48x128xf32>
    %109 = arith.truncf %108 : vector<48x128xf32> to vector<48x128xbf16>
    %c1_114 = arith.constant 1 : index
    %c0_115 = arith.constant 0 : index
    %c0_116 = arith.constant 0 : index
    %110 = vector.load %arg4[%c1_114, %c0_115, %c0_116] : memref<8x128x128xbf16, #tpu.memory_space<vmem>>, vector<1x128x128xbf16>
    %111 = vector.shape_cast %110 : vector<1x128x128xbf16> to vector<128x128xbf16>
    %cst_117 = arith.constant dense<0.000000e+00> : vector<48x128xf32>
    %112 = tpu.matmul %109, %111, %cst_117 {dimension_numbers = #tpu.dot_dimension_numbers<[1], [0], [0], [1], [0, 0, 1, 1], [], []>} : vector<48x128xbf16>, vector<128x128xbf16>, vector<48x128xf32> -> vector<48x128xf32>
    %113 = arith.addf %106, %112 : vector<48x128xf32>
    %c0_118 = arith.constant 0 : index
    %c0_119 = arith.constant 0 : index
    %114 = vector.load %arg12[%c0_118, %c0_119] : memref<192x128xf32, #tpu.memory_space<vmem>>, vector<48x128xf32>
    tpu.vector_store %arg12[%c0_118, %c0_119], %113 {strides = array<i32>} : memref<192x128xf32, #tpu.memory_space<vmem>>, vector<48x128xf32>,
    %c0_120 = arith.constant 0 : index
    %c0_121 = arith.constant 0 : index
    %115 = vector.load %arg12[%c0_120, %c0_121] : memref<192x128xf32, #tpu.memory_space<vmem>>, vector<48x128xf32>
    %c2_122 = arith.constant 2 : index
    %c0_123 = arith.constant 0 : index
    %c0_124 = arith.constant 0 : index
    %116 = vector.load %arg10[%c2_122, %c0_123, %c0_124] : memref<13x8x128xf32, #tpu.memory_space<vmem>>, vector<6x8x128xf32>
    %117 = vector.shape_cast %116 : vector<6x8x128xf32> to vector<48x128xf32>
    %118 = arith.truncf %117 : vector<48x128xf32> to vector<48x128xbf16>
    %c2_125 = arith.constant 2 : index
    %c0_126 = arith.constant 0 : index
    %c0_127 = arith.constant 0 : index
    %119 = vector.load %arg4[%c2_125, %c0_126, %c0_127] : memref<8x128x128xbf16, #tpu.memory_space<vmem>>, vector<1x128x128xbf16>
    %120 = vector.shape_cast %119 : vector<1x128x128xbf16> to vector<128x128xbf16>
    %cst_128 = arith.constant dense<0.000000e+00> : vector<48x128xf32>
    %121 = tpu.matmul %118, %120, %cst_128 {dimension_numbers = #tpu.dot_dimension_numbers<[1], [0], [0], [1], [0, 0, 1, 1], [], []>} : vector<48x128xbf16>, vector<128x128xbf16>, vector<48x128xf32> -> vector<48x128xf32>
    %122 = arith.addf %115, %121 : vector<48x128xf32>
    %c0_129 = arith.constant 0 : index
    %c0_130 = arith.constant 0 : index
    %123 = vector.load %arg12[%c0_129, %c0_130] : memref<192x128xf32, #tpu.memory_space<vmem>>, vector<48x128xf32>
    tpu.vector_store %arg12[%c0_129, %c0_130], %122 {strides = array<i32>} : memref<192x128xf32, #tpu.memory_space<vmem>>, vector<48x128xf32>,
    %c0_131 = arith.constant 0 : index
    %c0_132 = arith.constant 0 : index
    %124 = vector.load %arg12[%c0_131, %c0_132] : memref<192x128xf32, #tpu.memory_space<vmem>>, vector<48x128xf32>
    %c3_133 = arith.constant 3 : index
    %c0_134 = arith.constant 0 : index
    %c0_135 = arith.constant 0 : index
    %125 = vector.load %arg10[%c3_133, %c0_134, %c0_135] : memref<13x8x128xf32, #tpu.memory_space<vmem>>, vector<6x8x128xf32>
    %126 = vector.shape_cast %125 : vector<6x8x128xf32> to vector<48x128xf32>
    %127 = arith.truncf %126 : vector<48x128xf32> to vector<48x128xbf16>
    %c3_136 = arith.constant 3 : index
    %c0_137 = arith.constant 0 : index
    %c0_138 = arith.constant 0 : index
    %128 = vector.load %arg4[%c3_136, %c0_137, %c0_138] : memref<8x128x128xbf16, #tpu.memory_space<vmem>>, vector<1x128x128xbf16>
    %129 = vector.shape_cast %128 : vector<1x128x128xbf16> to vector<128x128xbf16>
    %cst_139 = arith.constant dense<0.000000e+00> : vector<48x128xf32>
    %130 = tpu.matmul %127, %129, %cst_139 {dimension_numbers = #tpu.dot_dimension_numbers<[1], [0], [0], [1], [0, 0, 1, 1], [], []>} : vector<48x128xbf16>, vector<128x128xbf16>, vector<48x128xf32> -> vector<48x128xf32>
    %131 = arith.addf %124, %130 : vector<48x128xf32>
    %c0_140 = arith.constant 0 : index
    %c0_141 = arith.constant 0 : index
    %132 = vector.load %arg12[%c0_140, %c0_141] : memref<192x128xf32, #tpu.memory_space<vmem>>, vector<48x128xf32>
    tpu.vector_store %arg12[%c0_140, %c0_141], %131 {strides = array<i32>} : memref<192x128xf32, #tpu.memory_space<vmem>>, vector<48x128xf32>,
    %c0_142 = arith.constant 0 : index
    %c0_143 = arith.constant 0 : index
    %133 = vector.load %arg12[%c0_142, %c0_143] : memref<192x128xf32, #tpu.memory_space<vmem>>, vector<48x128xf32>
    %c4_144 = arith.constant 4 : index
    %c0_145 = arith.constant 0 : index
    %c0_146 = arith.constant 0 : index
    %134 = vector.load %arg10[%c4_144, %c0_145, %c0_146] : memref<13x8x128xf32, #tpu.memory_space<vmem>>, vector<6x8x128xf32>
    %135 = vector.shape_cast %134 : vector<6x8x128xf32> to vector<48x128xf32>
    %136 = arith.truncf %135 : vector<48x128xf32> to vector<48x128xbf16>
    %c4_147 = arith.constant 4 : index
    %c0_148 = arith.constant 0 : index
    %c0_149 = arith.constant 0 : index
    %137 = vector.load %arg4[%c4_147, %c0_148, %c0_149] : memref<8x128x128xbf16, #tpu.memory_space<vmem>>, vector<1x128x128xbf16>
    %138 = vector.shape_cast %137 : vector<1x128x128xbf16> to vector<128x128xbf16>
    %cst_150 = arith.constant dense<0.000000e+00> : vector<48x128xf32>
    %139 = tpu.matmul %136, %138, %cst_150 {dimension_numbers = #tpu.dot_dimension_numbers<[1], [0], [0], [1], [0, 0, 1, 1], [], []>} : vector<48x128xbf16>, vector<128x128xbf16>, vector<48x128xf32> -> vector<48x128xf32>
    %140 = arith.addf %133, %139 : vector<48x128xf32>
    %c0_151 = arith.constant 0 : index
    %c0_152 = arith.constant 0 : index
    %141 = vector.load %arg12[%c0_151, %c0_152] : memref<192x128xf32, #tpu.memory_space<vmem>>, vector<48x128xf32>
    tpu.vector_store %arg12[%c0_151, %c0_152], %140 {strides = array<i32>} : memref<192x128xf32, #tpu.memory_space<vmem>>, vector<48x128xf32>,
    %c0_153 = arith.constant 0 : index
    %c0_154 = arith.constant 0 : index
    %142 = vector.load %arg12[%c0_153, %c0_154] : memref<192x128xf32, #tpu.memory_space<vmem>>, vector<48x128xf32>
    %c5_155 = arith.constant 5 : index
    %c0_156 = arith.constant 0 : index
    %c0_157 = arith.constant 0 : index
    %143 = vector.load %arg10[%c5_155, %c0_156, %c0_157] : memref<13x8x128xf32, #tpu.memory_space<vmem>>, vector<6x8x128xf32>
    %144 = vector.shape_cast %143 : vector<6x8x128xf32> to vector<48x128xf32>
    %145 = arith.truncf %144 : vector<48x128xf32> to vector<48x128xbf16>
    %c5_158 = arith.constant 5 : index
    %c0_159 = arith.constant 0 : index
    %c0_160 = arith.constant 0 : index
    %146 = vector.load %arg4[%c5_158, %c0_159, %c0_160] : memref<8x128x128xbf16, #tpu.memory_space<vmem>>, vector<1x128x128xbf16>
    %147 = vector.shape_cast %146 : vector<1x128x128xbf16> to vector<128x128xbf16>
    %cst_161 = arith.constant dense<0.000000e+00> : vector<48x128xf32>
    %148 = tpu.matmul %145, %147, %cst_161 {dimension_numbers = #tpu.dot_dimension_numbers<[1], [0], [0], [1], [0, 0, 1, 1], [], []>} : vector<48x128xbf16>, vector<128x128xbf16>, vector<48x128xf32> -> vector<48x128xf32>
    %149 = arith.addf %142, %148 : vector<48x128xf32>
    %c0_162 = arith.constant 0 : index
    %c0_163 = arith.constant 0 : index
    %150 = vector.load %arg12[%c0_162, %c0_163] : memref<192x128xf32, #tpu.memory_space<vmem>>, vector<48x128xf32>
    tpu.vector_store %arg12[%c0_162, %c0_163], %149 {strides = array<i32>} : memref<192x128xf32, #tpu.memory_space<vmem>>, vector<48x128xf32>,
    %c0_164 = arith.constant 0 : index
    %c0_165 = arith.constant 0 : index
    %151 = vector.load %arg12[%c0_164, %c0_165] : memref<192x128xf32, #tpu.memory_space<vmem>>, vector<48x128xf32>
    %c6_166 = arith.constant 6 : index
    %c0_167 = arith.constant 0 : index
    %c0_168 = arith.constant 0 : index
    %152 = vector.load %arg10[%c6_166, %c0_167, %c0_168] : memref<13x8x128xf32, #tpu.memory_space<vmem>>, vector<6x8x128xf32>
    %153 = vector.shape_cast %152 : vector<6x8x128xf32> to vector<48x128xf32>
    %154 = arith.truncf %153 : vector<48x128xf32> to vector<48x128xbf16>
    %c6_169 = arith.constant 6 : index
    %c0_170 = arith.constant 0 : index
    %c0_171 = arith.constant 0 : index
    %155 = vector.load %arg4[%c6_169, %c0_170, %c0_171] : memref<8x128x128xbf16, #tpu.memory_space<vmem>>, vector<1x128x128xbf16>
    %156 = vector.shape_cast %155 : vector<1x128x128xbf16> to vector<128x128xbf16>
    %cst_172 = arith.constant dense<0.000000e+00> : vector<48x128xf32>
    %157 = tpu.matmul %154, %156, %cst_172 {dimension_numbers = #tpu.dot_dimension_numbers<[1], [0], [0], [1], [0, 0, 1, 1], [], []>} : vector<48x128xbf16>, vector<128x128xbf16>, vector<48x128xf32> -> vector<48x128xf32>
    %158 = arith.addf %151, %157 : vector<48x128xf32>
    %c0_173 = arith.constant 0 : index
    %c0_174 = arith.constant 0 : index
    %159 = vector.load %arg12[%c0_173, %c0_174] : memref<192x128xf32, #tpu.memory_space<vmem>>, vector<48x128xf32>
    tpu.vector_store %arg12[%c0_173, %c0_174], %158 {strides = array<i32>} : memref<192x128xf32, #tpu.memory_space<vmem>>, vector<48x128xf32>,
    %c0_175 = arith.constant 0 : index
    %c0_176 = arith.constant 0 : index
    %160 = vector.load %arg12[%c0_175, %c0_176] : memref<192x128xf32, #tpu.memory_space<vmem>>, vector<48x128xf32>
    %c7_177 = arith.constant 7 : index
    %c0_178 = arith.constant 0 : index
    %c0_179 = arith.constant 0 : index
    %161 = vector.load %arg10[%c7_177, %c0_178, %c0_179] : memref<13x8x128xf32, #tpu.memory_space<vmem>>, vector<6x8x128xf32>
    %162 = vector.shape_cast %161 : vector<6x8x128xf32> to vector<48x128xf32>
    %163 = arith.truncf %162 : vector<48x128xf32> to vector<48x128xbf16>
    %c7_180 = arith.constant 7 : index
    %c0_181 = arith.constant 0 : index
    %c0_182 = arith.constant 0 : index
    %164 = vector.load %arg4[%c7_180, %c0_181, %c0_182] : memref<8x128x128xbf16, #tpu.memory_space<vmem>>, vector<1x128x128xbf16>
    %165 = vector.shape_cast %164 : vector<1x128x128xbf16> to vector<128x128xbf16>
    %cst_183 = arith.constant dense<0.000000e+00> : vector<48x128xf32>
    %166 = tpu.matmul %163, %165, %cst_183 {dimension_numbers = #tpu.dot_dimension_numbers<[1], [0], [0], [1], [0, 0, 1, 1], [], []>} : vector<48x128xbf16>, vector<128x128xbf16>, vector<48x128xf32> -> vector<48x128xf32>
    %167 = arith.addf %160, %166 : vector<48x128xf32>
    %c0_184 = arith.constant 0 : index
    %c0_185 = arith.constant 0 : index
    %168 = vector.load %arg12[%c0_184, %c0_185] : memref<192x128xf32, #tpu.memory_space<vmem>>, vector<48x128xf32>
    tpu.vector_store %arg12[%c0_184, %c0_185], %167 {strides = array<i32>} : memref<192x128xf32, #tpu.memory_space<vmem>>, vector<48x128xf32>,
    %c0_186 = arith.constant 0 : index
    %c0_187 = arith.constant 0 : index
    %169 = vector.load %arg12[%c0_186, %c0_187] : memref<192x128xf32, #tpu.memory_space<vmem>>, vector<48x128xf32>
    %c0_188 = arith.constant 0 : index
    %c0_189 = arith.constant 0 : index
    %170 = vector.load %arg5[%c0_188, %c0_189] : memref<1x128xf32, #tpu.memory_space<vmem>>, vector<1x128xf32>
    %171 = vector.shape_cast %170 : vector<1x128xf32> to vector<128xf32>
    %172 = vector.shape_cast %171 : vector<128xf32> to vector<1x128xf32>
    %173 = vector.broadcast %172 : vector<1x128xf32> to vector<48x128xf32>
    %174 = arith.addf %169, %173 : vector<48x128xf32>
    %175 = vector.shape_cast %174 : vector<48x128xf32> to vector<2x3x8x128xf32>
    %176 = vector.extract_strided_slice %175 {offsets = [0, 0, 0, 0], sizes = [2, 1, 8, 128], strides = [1, 1, 1, 1]} : vector<2x3x8x128xf32> to vector<2x1x8x128xf32>
    %177 = vector.shape_cast %176 : vector<2x1x8x128xf32> to vector<2x8x128xf32>
    %178 = vector.extract_strided_slice %175 {offsets = [0, 1, 0, 0], sizes = [2, 1, 8, 128], strides = [1, 1, 1, 1]} : vector<2x3x8x128xf32> to vector<2x1x8x128xf32>
    %179 = vector.shape_cast %178 : vector<2x1x8x128xf32> to vector<2x8x128xf32>
    %180 = arith.addf %177, %179 : vector<2x8x128xf32>
    %181 = vector.extract_strided_slice %175 {offsets = [0, 2, 0, 0], sizes = [2, 1, 8, 128], strides = [1, 1, 1, 1]} : vector<2x3x8x128xf32> to vector<2x1x8x128xf32>
    %182 = vector.shape_cast %181 : vector<2x1x8x128xf32> to vector<2x8x128xf32>
    %183 = arith.addf %180, %182 : vector<2x8x128xf32>
    %cst_190 = arith.constant 0.333333343 : f32
    %184 = vector.broadcast %cst_190 : f32 to vector<2x8x128xf32>
    %185 = arith.mulf %183, %184 : vector<2x8x128xf32>
    %cst_191 = arith.constant 0.000000e+00 : f32
    %186 = vector.broadcast %cst_191 : f32 to vector<2x8x128xf32>
    %187 = arith.maximumf %185, %186 : vector<2x8x128xf32>
    %cst_192 = arith.constant 0.000000e+00 : f32
    %188 = vector.broadcast %cst_192 : f32 to vector<7x8x128xf32>
    %c0_193 = arith.constant 0 : index
    %c0_194 = arith.constant 0 : index
    %c0_195 = arith.constant 0 : index
    %189 = vector.load %arg11[%c0_193, %c0_194, %c0_195] : memref<9x8x128xf32, #tpu.memory_space<vmem>>, vector<7x8x128xf32>
    tpu.vector_store %arg11[%c0_193, %c0_194, %c0_195], %188 {strides = array<i32>} : memref<9x8x128xf32, #tpu.memory_space<vmem>>, vector<7x8x128xf32>,
    %c7_196 = arith.constant 7 : index
    %c0_197 = arith.constant 0 : index
    %c0_198 = arith.constant 0 : index
    %190 = vector.load %arg11[%c7_196, %c0_197, %c0_198] : memref<9x8x128xf32, #tpu.memory_space<vmem>>, vector<2x8x128xf32>
    tpu.vector_store %arg11[%c7_196, %c0_197, %c0_198], %187 {strides = array<i32>} : memref<9x8x128xf32, #tpu.memory_space<vmem>>, vector<2x8x128xf32>,
    %c0_199 = arith.constant 0 : index
    %c0_200 = arith.constant 0 : index
    %c0_201 = arith.constant 0 : index
    %191 = vector.load %arg11[%c0_199, %c0_200, %c0_201] : memref<9x8x128xf32, #tpu.memory_space<vmem>>, vector<2x8x128xf32>
    %192 = vector.shape_cast %191 : vector<2x8x128xf32> to vector<16x128xf32>
    %c0_202 = arith.constant 0 : index
    %c0_203 = arith.constant 0 : index
    %c0_204 = arith.constant 0 : index
    %193 = vector.load %arg6[%c0_202, %c0_203, %c0_204] : memref<8x128x4xf32, #tpu.memory_space<vmem>>, vector<1x128x4xf32>
    %194 = vector.shape_cast %193 : vector<1x128x4xf32> to vector<128x4xf32>
    %cst_205 = arith.constant dense<0.000000e+00> : vector<16x4xf32>
    %195 = tpu.matmul %192, %194, %cst_205 {dimension_numbers = #tpu.dot_dimension_numbers<[1], [0], [0], [1], [0, 0, 1, 1], [], []>} : vector<16x128xf32>, vector<128x4xf32>, vector<16x4xf32> -> vector<16x4xf32>
    %c1_206 = arith.constant 1 : index
    %c0_207 = arith.constant 0 : index
    %c0_208 = arith.constant 0 : index
    %196 = vector.load %arg11[%c1_206, %c0_207, %c0_208] : memref<9x8x128xf32, #tpu.memory_space<vmem>>, vector<2x8x128xf32>
    %197 = vector.shape_cast %196 : vector<2x8x128xf32> to vector<16x128xf32>
    %c1_209 = arith.constant 1 : index
    %c0_210 = arith.constant 0 : index
    %c0_211 = arith.constant 0 : index
    %198 = vector.load %arg6[%c1_209, %c0_210, %c0_211] : memref<8x128x4xf32, #tpu.memory_space<vmem>>, vector<1x128x4xf32>
    %199 = vector.shape_cast %198 : vector<1x128x4xf32> to vector<128x4xf32>
    %cst_212 = arith.constant dense<0.000000e+00> : vector<16x4xf32>
    %200 = tpu.matmul %197, %199, %cst_212 {dimension_numbers = #tpu.dot_dimension_numbers<[1], [0], [0], [1], [0, 0, 1, 1], [], []>} : vector<16x128xf32>, vector<128x4xf32>, vector<16x4xf32> -> vector<16x4xf32>
    %201 = arith.addf %195, %200 : vector<16x4xf32>
    %c2_213 = arith.constant 2 : index
    %c0_214 = arith.constant 0 : index
    %c0_215 = arith.constant 0 : index
    %202 = vector.load %arg11[%c2_213, %c0_214, %c0_215] : memref<9x8x128xf32, #tpu.memory_space<vmem>>, vector<2x8x128xf32>
    %203 = vector.shape_cast %202 : vector<2x8x128xf32> to vector<16x128xf32>
    %c2_216 = arith.constant 2 : index
    %c0_217 = arith.constant 0 : index
    %c0_218 = arith.constant 0 : index
    %204 = vector.load %arg6[%c2_216, %c0_217, %c0_218] : memref<8x128x4xf32, #tpu.memory_space<vmem>>, vector<1x128x4xf32>
    %205 = vector.shape_cast %204 : vector<1x128x4xf32> to vector<128x4xf32>
    %cst_219 = arith.constant dense<0.000000e+00> : vector<16x4xf32>
    %206 = tpu.matmul %203, %205, %cst_219 {dimension_numbers = #tpu.dot_dimension_numbers<[1], [0], [0], [1], [0, 0, 1, 1], [], []>} : vector<16x128xf32>, vector<128x4xf32>, vector<16x4xf32> -> vector<16x4xf32>
    %207 = arith.addf %201, %206 : vector<16x4xf32>
    %c3_220 = arith.constant 3 : index
    %c0_221 = arith.constant 0 : index
    %c0_222 = arith.constant 0 : index
    %208 = vector.load %arg11[%c3_220, %c0_221, %c0_222] : memref<9x8x128xf32, #tpu.memory_space<vmem>>, vector<2x8x128xf32>
    %209 = vector.shape_cast %208 : vector<2x8x128xf32> to vector<16x128xf32>
    %c3_223 = arith.constant 3 : index
    %c0_224 = arith.constant 0 : index
    %c0_225 = arith.constant 0 : index
    %210 = vector.load %arg6[%c3_223, %c0_224, %c0_225] : memref<8x128x4xf32, #tpu.memory_space<vmem>>, vector<1x128x4xf32>
    %211 = vector.shape_cast %210 : vector<1x128x4xf32> to vector<128x4xf32>
    %cst_226 = arith.constant dense<0.000000e+00> : vector<16x4xf32>
    %212 = tpu.matmul %209, %211, %cst_226 {dimension_numbers = #tpu.dot_dimension_numbers<[1], [0], [0], [1], [0, 0, 1, 1], [], []>} : vector<16x128xf32>, vector<128x4xf32>, vector<16x4xf32> -> vector<16x4xf32>
    %213 = arith.addf %207, %212 : vector<16x4xf32>
    %c4_227 = arith.constant 4 : index
    %c0_228 = arith.constant 0 : index
    %c0_229 = arith.constant 0 : index
    %214 = vector.load %arg11[%c4_227, %c0_228, %c0_229] : memref<9x8x128xf32, #tpu.memory_space<vmem>>, vector<2x8x128xf32>
    %215 = vector.shape_cast %214 : vector<2x8x128xf32> to vector<16x128xf32>
    %c4_230 = arith.constant 4 : index
    %c0_231 = arith.constant 0 : index
    %c0_232 = arith.constant 0 : index
    %216 = vector.load %arg6[%c4_230, %c0_231, %c0_232] : memref<8x128x4xf32, #tpu.memory_space<vmem>>, vector<1x128x4xf32>
    %217 = vector.shape_cast %216 : vector<1x128x4xf32> to vector<128x4xf32>
    %cst_233 = arith.constant dense<0.000000e+00> : vector<16x4xf32>
    %218 = tpu.matmul %215, %217, %cst_233 {dimension_numbers = #tpu.dot_dimension_numbers<[1], [0], [0], [1], [0, 0, 1, 1], [], []>} : vector<16x128xf32>, vector<128x4xf32>, vector<16x4xf32> -> vector<16x4xf32>
    %219 = arith.addf %213, %218 : vector<16x4xf32>
    %c5_234 = arith.constant 5 : index
    %c0_235 = arith.constant 0 : index
    %c0_236 = arith.constant 0 : index
    %220 = vector.load %arg11[%c5_234, %c0_235, %c0_236] : memref<9x8x128xf32, #tpu.memory_space<vmem>>, vector<2x8x128xf32>
    %221 = vector.shape_cast %220 : vector<2x8x128xf32> to vector<16x128xf32>
    %c5_237 = arith.constant 5 : index
    %c0_238 = arith.constant 0 : index
    %c0_239 = arith.constant 0 : index
    %222 = vector.load %arg6[%c5_237, %c0_238, %c0_239] : memref<8x128x4xf32, #tpu.memory_space<vmem>>, vector<1x128x4xf32>
    %223 = vector.shape_cast %222 : vector<1x128x4xf32> to vector<128x4xf32>
    %cst_240 = arith.constant dense<0.000000e+00> : vector<16x4xf32>
    %224 = tpu.matmul %221, %223, %cst_240 {dimension_numbers = #tpu.dot_dimension_numbers<[1], [0], [0], [1], [0, 0, 1, 1], [], []>} : vector<16x128xf32>, vector<128x4xf32>, vector<16x4xf32> -> vector<16x4xf32>
    %225 = arith.addf %219, %224 : vector<16x4xf32>
    %c6_241 = arith.constant 6 : index
    %c0_242 = arith.constant 0 : index
    %c0_243 = arith.constant 0 : index
    %226 = vector.load %arg11[%c6_241, %c0_242, %c0_243] : memref<9x8x128xf32, #tpu.memory_space<vmem>>, vector<2x8x128xf32>
    %227 = vector.shape_cast %226 : vector<2x8x128xf32> to vector<16x128xf32>
    %c6_244 = arith.constant 6 : index
    %c0_245 = arith.constant 0 : index
    %c0_246 = arith.constant 0 : index
    %228 = vector.load %arg6[%c6_244, %c0_245, %c0_246] : memref<8x128x4xf32, #tpu.memory_space<vmem>>, vector<1x128x4xf32>
    %229 = vector.shape_cast %228 : vector<1x128x4xf32> to vector<128x4xf32>
    %cst_247 = arith.constant dense<0.000000e+00> : vector<16x4xf32>
    %230 = tpu.matmul %227, %229, %cst_247 {dimension_numbers = #tpu.dot_dimension_numbers<[1], [0], [0], [1], [0, 0, 1, 1], [], []>} : vector<16x128xf32>, vector<128x4xf32>, vector<16x4xf32> -> vector<16x4xf32>
    %231 = arith.addf %225, %230 : vector<16x4xf32>
    %c7_248 = arith.constant 7 : index
    %c0_249 = arith.constant 0 : index
    %c0_250 = arith.constant 0 : index
    %232 = vector.load %arg11[%c7_248, %c0_249, %c0_250] : memref<9x8x128xf32, #tpu.memory_space<vmem>>, vector<2x8x128xf32>
    %233 = vector.shape_cast %232 : vector<2x8x128xf32> to vector<16x128xf32>
    %c7_251 = arith.constant 7 : index
    %c0_252 = arith.constant 0 : index
    %c0_253 = arith.constant 0 : index
    %234 = vector.load %arg6[%c7_251, %c0_252, %c0_253] : memref<8x128x4xf32, #tpu.memory_space<vmem>>, vector<1x128x4xf32>
    %235 = vector.shape_cast %234 : vector<1x128x4xf32> to vector<128x4xf32>
    %cst_254 = arith.constant dense<0.000000e+00> : vector<16x4xf32>
    %236 = tpu.matmul %233, %235, %cst_254 {dimension_numbers = #tpu.dot_dimension_numbers<[1], [0], [0], [1], [0, 0, 1, 1], [], []>} : vector<16x128xf32>, vector<128x4xf32>, vector<16x4xf32> -> vector<16x4xf32>
    %237 = arith.addf %231, %236 : vector<16x4xf32>
    %c0_255 = arith.constant 0 : index
    %c0_256 = arith.constant 0 : index
    %238 = vector.load %arg7[%c0_255, %c0_256] : memref<1x4xf32, #tpu.memory_space<vmem>>, vector<1x4xf32>
    %239 = vector.shape_cast %238 : vector<1x4xf32> to vector<4xf32>
    %240 = vector.shape_cast %239 : vector<4xf32> to vector<1x4xf32>
    %241 = vector.broadcast %240 : vector<1x4xf32> to vector<16x4xf32>
    %242 = arith.addf %237, %241 : vector<16x4xf32>
    %243 = math.tanh %242 : vector<16x4xf32>
    %244 = vector.shape_cast %243 : vector<16x4xf32> to vector<2x8x4xf32>
    %c0_257 = arith.constant 0 : index
    %c0_258 = arith.constant 0 : index
    %c0_259 = arith.constant 0 : index
    %245 = vector.load %arg8[%c0_257, %c0_258, %c0_259] : memref<2x8x4xf32, #tpu.memory_space<vmem>>, vector<2x8x4xf32>
    tpu.vector_store %arg8[%c0_257, %c0_258, %c0_259], %244 {strides = array<i32>} : memref<2x8x4xf32, #tpu.memory_space<vmem>>, vector<2x8x4xf32>,
    return
  }
  func.func @transform_0(%arg0: i32) -> (i32, i32, i32) {
    %c0_i32 = arith.constant 0 : i32
    %c0_i32_0 = arith.constant 0 : i32
    %c0_i32_1 = arith.constant 0 : i32
    return %c0_i32, %arg0, %c0_i32_0 : i32, i32, i32
  }
  func.func @transform_1(%arg0: i32) -> (i32, i32, i32) {
    %c0_i32 = arith.constant 0 : i32
    %c0_i32_0 = arith.constant 0 : i32
    %c0_i32_1 = arith.constant 0 : i32
    %c0_i32_2 = arith.constant 0 : i32
    return %c0_i32, %c0_i32_0, %c0_i32_1 : i32, i32, i32
  }
  func.func @transform_2(%arg0: i32) -> (i32, i32) {
    %c0_i32 = arith.constant 0 : i32
    %c0_i32_0 = arith.constant 0 : i32
    %c0_i32_1 = arith.constant 0 : i32
    return %c0_i32, %c0_i32_0 : i32, i32
  }
  func.func @transform_3(%arg0: i32) -> (i32, i32, i32) {
    %c0_i32 = arith.constant 0 : i32
    %c0_i32_0 = arith.constant 0 : i32
    %c0_i32_1 = arith.constant 0 : i32
    %c0_i32_2 = arith.constant 0 : i32
    return %c0_i32, %c0_i32_0, %c0_i32_1 : i32, i32, i32
  }
  func.func @transform_4(%arg0: i32) -> (i32, i32) {
    %c0_i32 = arith.constant 0 : i32
    %c0_i32_0 = arith.constant 0 : i32
    %c0_i32_1 = arith.constant 0 : i32
    return %c0_i32, %c0_i32_0 : i32, i32
  }
  func.func @transform_5(%arg0: i32) -> (i32, i32, i32) {
    %c0_i32 = arith.constant 0 : i32
    %c0_i32_0 = arith.constant 0 : i32
    %c0_i32_1 = arith.constant 0 : i32
    %c0_i32_2 = arith.constant 0 : i32
    return %c0_i32, %c0_i32_0, %c0_i32_1 : i32, i32, i32
  }
  func.func @transform_6(%arg0: i32) -> (i32, i32) {
    %c0_i32 = arith.constant 0 : i32
    %c0_i32_0 = arith.constant 0 : i32
    %c0_i32_1 = arith.constant 0 : i32
    return %c0_i32, %c0_i32_0 : i32, i32
  }
  func.func @transform_7(%arg0: i32) -> (i32, i32, i32) {
    %c0_i32 = arith.constant 0 : i32
    %c0_i32_0 = arith.constant 0 : i32
    %c0_i32_1 = arith.constant 0 : i32
    return %c0_i32, %arg0, %c0_i32_0 : i32, i32, i32
  }
}

</mosaic_0001>

<llo_original>
// kernel: conv_block_forward.1
$region0: #{conv_block_forward.1}
  #allocation0 [shape = 'u32[]', space=smem, size = 0x4, offset = 0x4, fixed_abs, tag = 'smem constant byte address 0x4 - core index']
  #allocation1 [shape = 'u32[144,128]{1,0:T(1,128)}', space=vmem, size = 0x12000, scoped, tag = 'internal scratch']
  #allocation2 [shape = 'f32[31,8,128]{2,1,0:T(8,128)}', space=vmem, size = 0x1f000, scoped, tag = 'scratch operand']
  #allocation3 [shape = 'f32[13,8,128]{2,1,0:T(8,128)}', space=vmem, size = 0xd000, scoped, tag = 'scratch operand']
  #allocation4 [shape = 'f32[9,8,128]{2,1,0:T(8,128)}', space=vmem, size = 0x9000, scoped, tag = 'scratch operand']
  #allocation5 [shape = 'f32[192,128]{1,0:T(8,128)}', space=vmem, size = 0x18000, scoped, tag = 'scratch operand']
  %s0 = inlined_call_operand.hbm [shape: f32[24,16,128], index: 0, kind: input, shape index: {}]
  %s1 = inlined_call_operand.hbm [shape: bf16[8,128,128], index: 1, kind: input, shape index: {}]
  %s2 = inlined_call_operand.hbm [shape: f32[1,128], index: 2, kind: input, shape index: {}]
  %s3 = inlined_call_operand.hbm [shape: bf16[8,128,128], index: 3, kind: input, shape index: {}]
  %s4 = inlined_call_operand.hbm [shape: f32[1,128], index: 4, kind: input, shape index: {}]
  %s5 = inlined_call_operand.hbm [shape: f32[8,128,4], index: 5, kind: input, shape index: {}]
  %s6 = inlined_call_operand.hbm [shape: f32[1,4], index: 6, kind: input, shape index: {}]
  %s7 = inlined_call_operand.hbm [shape: f32[2,16,4], index: 7, kind: output, shape index: {}]
  %s8 = sld [smem:[#allocation0]]
  $region89: #{conv_block_forward.1} parent=0
    _
  %s10 = ssub.s32 1, %s8
  %s11 = scalar_select 0, %s10, %s8
  $region1: #{conv_block_forward.1} parent=0
    #allocation6 [shape = 'u8[196608]{0}', space=vmem, size = 0x30000, scoped, tag = 'input window, operand 0']
    #allocation7 [shape = 's32[2]{0}', space=sflag, size = 0x8, scoped, tag = 'scoped memory for conv_block_forward.1']
    #allocation8 [shape = 's32[2]{0}', space=sflag, size = 0x8, scoped, tag = 'scoped memory for conv_block_forward.1']
    #allocation9 [shape = 'u8[262144]{0}', space=vmem, size = 0x40000, scoped, tag = 'input window, operand 1, single buffered']
    #allocation10 [shape = 's32[1]{0}', space=sflag, size = 0x4, scoped, tag = 'scoped memory for conv_block_forward.1']
    #allocation11 [shape = 'u8[512]{0}', space=vmem, size = 0x400, scoped, tag = 'input window, operand 2, single buffered']
    #allocation12 [shape = 'u8[262144]{0}', space=vmem, size = 0x40000, scoped, tag = 'input window, operand 3, single buffered']
    #allocation13 [shape = 's32[1]{0}', space=sflag, size = 0x4, scoped, tag = 'scoped memory for conv_block_forward.1']
    #allocation14 [shape = 'u8[512]{0}', space=vmem, size = 0x400, scoped, tag = 'input window, operand 4, single buffered']
    #allocation15 [shape = 'u8[524288]{0}', space=vmem, size = 0x80000, scoped, tag = 'input window, operand 5, single buffered']
    #allocation16 [shape = 's32[1]{0}', space=sflag, size = 0x4, scoped, tag = 'scoped memory for conv_block_forward.1']
    #allocation17 [shape = 'u8[512]{0}', space=vmem, size = 0x400, scoped, tag = 'input window, operand 6, single buffered']
    #allocation18 [shape = 'u8[16384]{0}', space=vmem, size = 0x4000, scoped, tag = 'output window, operand 0']
    %12 = vsyncpa [#allocation7], 0
    %s13 = scalar_lea.sflag [#allocation7], 1
    %14 = vsyncpa %s13, 0
    %15 = vsyncpa [#allocation10], 0
    %16 = vsyncpa [#allocation13], 0
    %17 = vsyncpa [#allocation16], 0
    %18 = vsyncpa [#allocation8], 0
    %s19 = scalar_lea.sflag [#allocation8], 1
    %20 = vsyncpa %s19, 0
    loop: start=0, step=1, limit=4
    $region2: #{conv_block_forward.1} parent=1 // loop_pre_header
      _
    $region3: #{conv_block_forward.1} parent=1 // loop_header
      %s22 = sphi 0, %s26
      %p23 = scmp.ge.s32.totalorder %s22, 4
      %s32 = sphi 0, %s34
      %s35 = sphi 0, %s32
      %s36 = sphi 0, %s35
      %s52 = sphi 0, %s36
      %s56 = sphi 0, %s56
      %s58 = sphi 0, %s56
      %s59 = sphi 0, %s58
      %s73 = sphi 0, %s59
      %s77 = sphi 0, %s77
      %s79 = sphi 0, %s77
      %s80 = sphi 0, %s79
      %s94 = sphi 0, %s80
      %s98 = sphi 0, %s98
      %s100 = sphi 0, %s98
      %s101 = sphi 0, %s100
      %s115 = sphi 0, %s101
      %s119 = sphi 0, %s119
      %s121 = sphi 0, %s119
      %s122 = sphi 0, %s121
      %s136 = sphi 0, %s122
      %s140 = sphi 0, %s140
      %s142 = sphi 0, %s140
      %s143 = sphi 0, %s142
      %s157 = sphi 0, %s143
      %s161 = sphi 0, %s161
      %s163 = sphi 0, %s161
      %s164 = sphi 0, %s163
      %s178 = sphi 0, %s164
      %s184 = sphi 0, %s186
      %s187 = sphi 0, %s184
      %s188 = sphi 0, %s187
      %s204 = sphi 0, %s188
    $region4: #{conv_block_forward.1} parent=1 // loop_header_branch
      %25 = sbr.rel (%p23) target = $region8
    $region5: #{conv_block_forward.1} parent=1 // loop_body
      %s27 = ssub.s32 %s22, 1
      %s28 = ssub.s32 %s22, 2
      %s29 = sadd.s32 %s22, 1
      %s30 = ssub.s32 %s22, %s29
      %p31 = scmp.eq.s32.totalorder %s30, 0
      %s33 = sadd.s32 %s32, 1
      %s34 = scalar_select %p31, %s32, %s33
      %p37 = pneg %p31
      %p38 = scmp.eq.s32.totalorder %s22, 1
      %p39 = por %p37, %p38
      %p40 = scmp.ne.s32.totalorder %s32, %s35
      %p41 = scmp.eq.s32.totalorder %s22, 0
      %p42 = por %p40, %p41
      %p43 = scmp.ne.s32.totalorder %s32, %s35
      %p44 = scmp.eq.s32.totalorder %s27, 1
      %p45 = por %p43, %p44
      %p46 = scmp.ne.s32.totalorder %s35, %s36
      %p47 = scmp.eq.s32.totalorder %s27, 0
      %p48 = por %p46, %p47
      %p49 = scmp.ne.s32.totalorder %s35, %s36
      %p50 = scmp.eq.s32.totalorder %s28, 1
      %p51 = por %p49, %p50
      %p53 = scmp.ne.s32.totalorder %s36, %s52
      %p54 = scmp.eq.s32.totalorder %s28, 0
      %p55 = por %p53, %p54
      %s57 = sadd.s32 %s56, 1
      %p60 = scmp.eq.s32.totalorder %s22, 1
      %p61 = scmp.ne.s32.totalorder %s56, %s58
      %p62 = scmp.eq.s32.totalorder %s22, 0
      %p63 = por %p61, %p62
      %p64 = scmp.ne.s32.totalorder %s56, %s58
      %p65 = scmp.eq.s32.totalorder %s27, 1
      %p66 = por %p64, %p65
      %p67 = scmp.ne.s32.totalorder %s58, %s59
      %p68 = scmp.eq.s32.totalorder %s27, 0
      %p69 = por %p67, %p68
      %p70 = scmp.ne.s32.totalorder %s58, %s59
      %p71 = scmp.eq.s32.totalorder %s28, 1
      %p72 = por %p70, %p71
      %p74 = scmp.ne.s32.totalorder %s59, %s73
      %p75 = scmp.eq.s32.totalorder %s28, 0
      %p76 = por %p74, %p75
      %s78 = sadd.s32 %s77, 1
      %p81 = scmp.eq.s32.totalorder %s22, 1
      %p82 = scmp.ne.s32.totalorder %s77, %s79
      %p83 = scmp.eq.s32.totalorder %s22, 0
      %p84 = por %p82, %p83
      %p85 = scmp.ne.s32.totalorder %s77, %s79
      %p86 = scmp.eq.s32.totalorder %s27, 1
      %p87 = por %p85, %p86
      %p88 = scmp.ne.s32.totalorder %s79, %s80
      %p89 = scmp.eq.s32.totalorder %s27, 0
      %p90 = por %p88, %p89
      %p91 = scmp.ne.s32.totalorder %s79, %s80
      %p92 = scmp.eq.s32.totalorder %s28, 1
      %p93 = por %p91, %p92
      %p95 = scmp.ne.s32.totalorder %s80, %s94
      %p96 = scmp.eq.s32.totalorder %s28, 0
      %p97 = por %p95, %p96
      %s99 = sadd.s32 %s98, 1
      %p102 = scmp.eq.s32.totalorder %s22, 1
      %p103 = scmp.ne.s32.totalorder %s98, %s100
      %p104 = scmp.eq.s32.totalorder %s22, 0
      %p105 = por %p103, %p104
      %p106 = scmp.ne.s32.totalorder %s98, %s100
      %p107 = scmp.eq.s32.totalorder %s27, 1
      %p108 = por %p106, %p107
      %p109 = scmp.ne.s32.totalorder %s100, %s101
      %p110 = scmp.eq.s32.totalorder %s27, 0
      %p111 = por %p109, %p110
      %p112 = scmp.ne.s32.totalorder %s100, %s101
      %p113 = scmp.eq.s32.totalorder %s28, 1
      %p114 = por %p112, %p113
      %p116 = scmp.ne.s32.totalorder %s101, %s115
      %p117 = scmp.eq.s32.totalorder %s28, 0
      %p118 = por %p116, %p117
      %s120 = sadd.s32 %s119, 1
      %p123 = scmp.eq.s32.totalorder %s22, 1
      %p124 = scmp.ne.s32.totalorder %s119, %s121
      %p125 = scmp.eq.s32.totalorder %s22, 0
      %p126 = por %p124, %p125
      %p127 = scmp.ne.s32.totalorder %s119, %s121
      %p128 = scmp.eq.s32.totalorder %s27, 1
      %p129 = por %p127, %p128
      %p130 = scmp.ne.s32.totalorder %s121, %s122
      %p131 = scmp.eq.s32.totalorder %s27, 0
      %p132 = por %p130, %p131
      %p133 = scmp.ne.s32.totalorder %s121, %s122
      %p134 = scmp.eq.s32.totalorder %s28, 1
      %p135 = por %p133, %p134
      %p137 = scmp.ne.s32.totalorder %s122, %s136
      %p138 = scmp.eq.s32.totalorder %s28, 0
      %p139 = por %p137, %p138
      %s141 = sadd.s32 %s140, 1
      %p144 = scmp.eq.s32.totalorder %s22, 1
      %p145 = scmp.ne.s32.totalorder %s140, %s142
      %p146 = scmp.eq.s32.totalorder %s22, 0
      %p147 = por %p145, %p146
      %p148 = scmp.ne.s32.totalorder %s140, %s142
      %p149 = scmp.eq.s32.totalorder %s27, 1
      %p150 = por %p148, %p149
      %p151 = scmp.ne.s32.totalorder %s142, %s143
      %p152 = scmp.eq.s32.totalorder %s27, 0
      %p153 = por %p151, %p152
      %p154 = scmp.ne.s32.totalorder %s142, %s143
      %p155 = scmp.eq.s32.totalorder %s28, 1
      %p156 = por %p154, %p155
      %p158 = scmp.ne.s32.totalorder %s143, %s157
      %p159 = scmp.eq.s32.totalorder %s28, 0
      %p160 = por %p158, %p159
      %s162 = sadd.s32 %s161, 1
      %p165 = scmp.eq.s32.totalorder %s22, 1
      %p166 = scmp.ne.s32.totalorder %s161, %s163
      %p167 = scmp.eq.s32.totalorder %s22, 0
      %p168 = por %p166, %p167
      %p169 = scmp.ne.s32.totalorder %s161, %s163
      %p170 = scmp.eq.s32.totalorder %s27, 1
      %p171 = por %p169, %p170
      %p172 = scmp.ne.s32.totalorder %s163, %s164
      %p173 = scmp.eq.s32.totalorder %s27, 0
      %p174 = por %p172, %p173
      %p175 = scmp.ne.s32.totalorder %s163, %s164
      %p176 = scmp.eq.s32.totalorder %s28, 1
      %p177 = por %p175, %p176
      %p179 = scmp.ne.s32.totalorder %s164, %s178
      %p180 = scmp.eq.s32.totalorder %s28, 0
      %p181 = por %p179, %p180
      %s182 = ssub.s32 %s22, %s29
      %p183 = scmp.eq.s32.totalorder %s182, 0
      %s185 = sadd.s32 %s184, 1
      %s186 = scalar_select %p183, %s184, %s185
      %p189 = pneg %p183
      %p190 = scmp.eq.s32.totalorder %s22, 1
      %p191 = por %p189, %p190
      %p192 = scmp.ne.s32.totalorder %s184, %s187
      %p193 = scmp.eq.s32.totalorder %s22, 0
      %p194 = por %p192, %p193
      %p195 = scmp.ne.s32.totalorder %s184, %s187
      %p196 = scmp.eq.s32.totalorder %s27, 1
      %p197 = por %p195, %p196
      %p198 = scmp.ne.s32.totalorder %s187, %s188
      %p199 = scmp.eq.s32.totalorder %s27, 0
      %p200 = por %p198, %p199
      %p201 = scmp.ne.s32.totalorder %s187, %s188
      %p202 = scmp.eq.s32.totalorder %s28, 1
      %p203 = por %p201, %p202
      %p205 = scmp.ne.s32.totalorder %s188, %s204
      %p206 = scmp.eq.s32.totalorder %s28, 0
      %p207 = por %p205, %p206
      %p208 = scmp.le.s32.totalorder 1, %s22
      %p209 = scmp.lt.s32.totalorder %s22, 3
      %p210 = pnand %p208, %p209
      %p211 = pneg %p210
      // Predicated region
      $region9: #{conv_block_forward.1} parent=5 // pred_check
        _
      $region10: #{conv_block_forward.1} parent=5 // pred_check_branch
        %213 = sbr.rel (%p210) target = $region12
      $region11: #{conv_block_forward.1} parent=5 // pred_region
        %s214 = ssub.s32 %s22, 1
        // Predicated region
        $region13: #{conv_block_forward.1} parent=11 // pred_check
          %p215 = pneg %p69
        $region14: #{conv_block_forward.1} parent=11 // pred_check_branch
          %217 = sbr.rel (%p215) target = $region16
        $region15: #{conv_block_forward.1} parent=11 // pred_region
          %s219 = ssub.s32 8192, 8192
          %220 = vsyncadd [#allocation10], %s219
          %s221 = sshll.u32 [#allocation9], 4
          %s222 = int_to_ptr.vmem [resolvable:$true] %s221
          %227 = dma.hbm_to_vmem [thread:$0]  %s1, 8192, %s222, [#allocation10], 64, 64, 4
        $region16: #{conv_block_forward.1} parent=11 // pred_fallthru
          _
        // Predicated region
        $region17: #{conv_block_forward.1} parent=11 // pred_check
          %p228 = pneg %p90
        $region18: #{conv_block_forward.1} parent=11 // pred_check_branch
          %230 = sbr.rel (%p228) target = $region20
        $region19: #{conv_block_forward.1} parent=11 // pred_region
          %s232 = ssub.s32 16, 16
          %233 = vsyncadd [#allocation10], %s232
          %s235 = sshll.u32 [#allocation11], 4
          %s236 = int_to_ptr.vmem [resolvable:$true] %s235
          %238 = dma.hbm_to_vmem [thread:$0]  %s2, 16, %s236, [#allocation10]
        $region20: #{conv_block_forward.1} parent=11 // pred_fallthru
          _
        // Predicated region
        $region21: #{conv_block_forward.1} parent=11 // pred_check
          %p239 = pneg %p111
        $region22: #{conv_block_forward.1} parent=11 // pred_check_branch
          %241 = sbr.rel (%p239) target = $region24
        $region23: #{conv_block_forward.1} parent=11 // pred_region
          %s243 = ssub.s32 8192, 8192
          %244 = vsyncadd [#allocation13], %s243
          %s245 = sshll.u32 [#allocation12], 4
          %s246 = int_to_ptr.vmem [resolvable:$true] %s245
          %251 = dma.hbm_to_vmem [thread:$0]  %s3, 8192, %s246, [#allocation13], 64, 64, 4
        $region24: #{conv_block_forward.1} parent=11 // pred_fallthru
          _
        // Predicated region
        $region25: #{conv_block_forward.1} parent=11 // pred_check
          %p252 = pneg %p132
        $region26: #{conv_block_forward.1} parent=11 // pred_check_branch
          %254 = sbr.rel (%p252) target = $region28
        $region27: #{conv_block_forward.1} parent=11 // pred_region
          %s256 = ssub.s32 16, 16
          %257 = vsyncadd [#allocation13], %s256
          %s259 = sshll.u32 [#allocation14], 4
          %s260 = int_to_ptr.vmem [resolvable:$true] %s259
          %262 = dma.hbm_to_vmem [thread:$0]  %s4, 16, %s260, [#allocation13]
        $region28: #{conv_block_forward.1} parent=11 // pred_fallthru
          _
        // Predicated region
        $region29: #{conv_block_forward.1} parent=11 // pred_check
          %p263 = pneg %p153
        $region30: #{conv_block_forward.1} parent=11 // pred_check_branch
          %265 = sbr.rel (%p263) target = $region32
        $region31: #{conv_block_forward.1} parent=11 // pred_region
          %s267 = ssub.s32 16384, 16384
          %268 = vsyncadd [#allocation16], %s267
          %s269 = sshll.u32 [#allocation15], 4
          %s270 = int_to_ptr.vmem [resolvable:$true] %s269
          %275 = dma.hbm_to_vmem [thread:$0]  %s5, 16384, %s270, [#allocation16], 128, 128, 8
        $region32: #{conv_block_forward.1} parent=11 // pred_fallthru
          _
        // Predicated region
        $region33: #{conv_block_forward.1} parent=11 // pred_check
          %p276 = pneg %p174
        $region34: #{conv_block_forward.1} parent=11 // pred_check_branch
          %278 = sbr.rel (%p276) target = $region36
        $region35: #{conv_block_forward.1} parent=11 // pred_region
          %s280 = ssub.s32 16, 16
          %281 = vsyncadd [#allocation16], %s280
          %s283 = sshll.u32 [#allocation17], 4
          %s284 = int_to_ptr.vmem [resolvable:$true] %s283
          %286 = dma.hbm_to_vmem [thread:$0]  %s6, 16, %s284, [#allocation16]
        $region36: #{conv_block_forward.1} parent=11 // pred_fallthru
          _
      $region12: #{conv_block_forward.1} parent=5 // pred_fallthru
        _
      %p287 = scmp.lt.s32.totalorder %s22, 2
      // Predicated region
      $region37: #{conv_block_forward.1} parent=5 // pred_check
        %p288 = pneg %p287
      $region38: #{conv_block_forward.1} parent=5 // pred_check_branch
        %290 = sbr.rel (%p288) target = $region40
      $region39: #{conv_block_forward.1} parent=5 // pred_region
        // Predicated region
        $region41: #{conv_block_forward.1} parent=39 // pred_check
          %p291 = pneg %p42
        $region42: #{conv_block_forward.1} parent=39 // pred_check_branch
          %293 = sbr.rel (%p291) target = $region44
        $region43: #{conv_block_forward.1} parent=39 // pred_region
          %s294 = sand.u32 %s32, 1
          %s295 = scalar_lea.sflag [#allocation7], %s294
          %s296 = sand.u32 %s32, 1
          %s297 = smul.addr %s296, 192
          %s298 = scalar_lea.vmem [#allocation6], %s297
          %s300 = ssub.s32 3072, 3072
          %301 = vsyncadd %s295, %s300
          %s302 = smul.addr %s22, 128
          %s303 = scalar_lea.hbm %s0, %s302
          %s304 = sshll.u32 %s298, 4
          %s305 = int_to_ptr.vmem [resolvable:$true] %s304
          %310 = dma.hbm_to_vmem [thread:$0]  %s303, 3072, %s305, %s295, 256, 128, 8
        $region44: #{conv_block_forward.1} parent=39 // pred_fallthru
          _
      $region40: #{conv_block_forward.1} parent=5 // pred_fallthru
        _
      %p311 = scmp.le.s32.totalorder 1, %s22
      %p312 = scmp.lt.s32.totalorder %s22, 3
      %p313 = pnand %p311, %p312
      %p314 = pneg %p313
      // Predicated region
      $region45: #{conv_block_forward.1} parent=5 // pred_check
        _
      $region46: #{conv_block_forward.1} parent=5 // pred_check_branch
        %316 = sbr.rel (%p313) target = $region48
      $region47: #{conv_block_forward.1} parent=5 // pred_region
        %s317 = ssub.s32 %s22, 1
        %s318 = sand.u32 %s35, 1
        %s319 = scalar_lea.sflag [#allocation7], %s318
        %s320 = sand.u32 %s35, 1
        %s321 = smul.addr %s320, 192
        %s322 = scalar_lea.vmem [#allocation6], %s321
        // Predicated region
        $region49: #{conv_block_forward.1} parent=47 // pred_check
          %p323 = pneg %p48
        $region50: #{conv_block_forward.1} parent=47 // pred_check_branch
          %325 = sbr.rel (%p323) target = $region52
        $region51: #{conv_block_forward.1} parent=47 // pred_region
          %326 = dma.done %s319, 3072
        $region52: #{conv_block_forward.1} parent=47 // pred_fallthru
          _
        // Predicated region
        $region53: #{conv_block_forward.1} parent=47 // pred_check
          %p327 = pneg %p69
        $region54: #{conv_block_forward.1} parent=47 // pred_check_branch
          %329 = sbr.rel (%p327) target = $region56
        $region55: #{conv_block_forward.1} parent=47 // pred_region
          %330 = dma.done [#allocation10], 8192
        $region56: #{conv_block_forward.1} parent=47 // pred_fallthru
          _
        // Predicated region
        $region57: #{conv_block_forward.1} parent=47 // pred_check
          %p331 = pneg %p90
        $region58: #{conv_block_forward.1} parent=47 // pred_check_branch
          %333 = sbr.rel (%p331) target = $region60
        $region59: #{conv_block_forward.1} parent=47 // pred_region
          %334 = dma.done [#allocation10], 16
        $region60: #{conv_block_forward.1} parent=47 // pred_fallthru
          _
        // Predicated region
        $region61: #{conv_block_forward.1} parent=47 // pred_check
          %p335 = pneg %p111
        $region62: #{conv_block_forward.1} parent=47 // pred_check_branch
          %337 = sbr.rel (%p335) target = $region64
        $region63: #{conv_block_forward.1} parent=47 // pred_region
          %338 = dma.done [#allocation13], 8192
        $region64: #{conv_block_forward.1} parent=47 // pred_fallthru
          _
        // Predicated region
        $region65: #{conv_block_forward.1} parent=47 // pred_check
          %p339 = pneg %p132
        $region66: #{conv_block_forward.1} parent=47 // pred_check_branch
          %341 = sbr.rel (%p339) target = $region68
        $region67: #{conv_block_forward.1} parent=47 // pred_region
          %342 = dma.done [#allocation13], 16
        $region68: #{conv_block_forward.1} parent=47 // pred_fallthru
          _
        // Predicated region
        $region69: #{conv_block_forward.1} parent=47 // pred_check
          %p343 = pneg %p153
        $region70: #{conv_block_forward.1} parent=47 // pred_check_branch
          %345 = sbr.rel (%p343) target = $region72
        $region71: #{conv_block_forward.1} parent=47 // pred_region
          %346 = dma.done [#allocation16], 16384
        $region72: #{conv_block_forward.1} parent=47 // pred_fallthru
          _
        // Predicated region
        $region73: #{conv_block_forward.1} parent=47 // pred_check
          %p347 = pneg %p174
        $region74: #{conv_block_forward.1} parent=47 // pred_check_branch
          %349 = sbr.rel (%p347) target = $region76
        $region75: #{conv_block_forward.1} parent=47 // pred_region
          %350 = dma.done [#allocation16], 16
        $region76: #{conv_block_forward.1} parent=47 // pred_fallthru
          _
        %s351 = sand.u32 %s35, 1
        %s352 = scalar_lea.sflag [#allocation7], %s351
        %s353 = sand.u32 %s35, 1
        %s354 = smul.addr %s353, 192
        %s355 = scalar_lea.vmem [#allocation6], %s354
        %p356 = pneg %p48
        %p357 = pneg %p45
        %p358 = pneg %p69
        %p359 = pneg %p66
        %p360 = pneg %p90
        %p361 = pneg %p87
        %p362 = pneg %p111
        %p363 = pneg %p108
        %p364 = pneg %p132
        %p365 = pneg %p129
        %p366 = pneg %p153
        %p367 = pneg %p150
        %p368 = pneg %p174
        %p369 = pneg %p171
        %p370 = pneg %p200
        %p371 = pneg %p197
        %s372 = sand.u32 %s187, 1
        %s373 = scalar_lea.sflag [#allocation8], %s372
        %s374 = sand.u32 %s187, 1
        %s375 = smul.addr %s374, 16
        %s376 = scalar_lea.vmem [#allocation18], %s375
        %378 = vst [vmem:[#allocation2] sm:$0xff] 0.0
        %379 = vst [vmem:[#allocation2 + $0x8] sm:$0xff] 0.0
        %380 = vst [vmem:[#allocation2 + $0x10] sm:$0xff] 0.0
        %381 = vst [vmem:[#allocation2 + $0x18] sm:$0xff] 0.0
        %382 = vst [vmem:[#allocation2 + $0x20] sm:$0xff] 0.0
        %383 = vst [vmem:[#allocation2 + $0x28] sm:$0xff] 0.0
        %384 = vst [vmem:[#allocation2 + $0x30] sm:$0xff] 0.0
        %v385 = vld [vmem:[%s322] sm:$0xff]
        %v386 = vld [vmem:[%s322 + $0x8] sm:$0xff]
        %v387 = vld [vmem:[%s322 + $0x10] sm:$0xff]
        %v388 = vld [vmem:[%s322 + $0x18] sm:$0xff]
        %v389 = vld [vmem:[%s322 + $0x20] sm:$0xff]
        %v390 = vld [vmem:[%s322 + $0x28] sm:$0xff]
        %v391 = vld [vmem:[%s322 + $0x30] sm:$0xff]
        %v392 = vld [vmem:[%s322 + $0x38] sm:$0xff]
        %v393 = vld [vmem:[%s322 + $0x40] sm:$0xff]
        %v394 = vld [vmem:[%s322 + $0x48] sm:$0xff]
        %v395 = vld [vmem:[%s322 + $0x50] sm:$0xff]
        %v396 = vld [vmem:[%s322 + $0x58] sm:$0xff]
        %v397 = vld [vmem:[%s322 + $0x60] sm:$0xff]
        %v398 = vld [vmem:[%s322 + $0x68] sm:$0xff]
        %v399 = vld [vmem:[%s322 + $0x70] sm:$0xff]
        %v400 = vld [vmem:[%s322 + $0x78] sm:$0xff]
        %v401 = vld [vmem:[%s322 + $0x80] sm:$0xff]
        %v402 = vld [vmem:[%s322 + $0x88] sm:$0xff]
        %v403 = vld [vmem:[%s322 + $0x90] sm:$0xff]
        %v404 = vld [vmem:[%s322 + $0x98] sm:$0xff]
        %v405 = vld [vmem:[%s322 + $0xa0] sm:$0xff]
        %v406 = vld [vmem:[%s322 + $0xa8] sm:$0xff]
        %v407 = vld [vmem:[%s322 + $0xb0] sm:$0xff]
        %v408 = vld [vmem:[%s322 + $0xb8] sm:$0xff]
        %s409 = scalar_lea.vmem [#allocation2], 56
        %410 = vst [vmem:[%s409] sm:$0xff] %v385
        %411 = vst [vmem:[%s409 + $0x8] sm:$0xff] %v386
        %412 = vst [vmem:[%s409 + $0x10] sm:$0xff] %v387
        %413 = vst [vmem:[%s409 + $0x18] sm:$0xff] %v388
        %414 = vst [vmem:[%s409 + $0x20] sm:$0xff] %v389
        %415 = vst [vmem:[%s409 + $0x28] sm:$0xff] %v390
        %416 = vst [vmem:[%s409 + $0x30] sm:$0xff] %v391
        %417 = vst [vmem:[%s409 + $0x38] sm:$0xff] %v392
        %418 = vst [vmem:[%s409 + $0x40] sm:$0xff] %v393
        %419 = vst [vmem:[%s409 + $0x48] sm:$0xff] %v394
        %420 = vst [vmem:[%s409 + $0x50] sm:$0xff] %v395
        %421 = vst [vmem:[%s409 + $0x58] sm:$0xff] %v396
        %422 = vst [vmem:[%s409 + $0x60] sm:$0xff] %v397
        %423 = vst [vmem:[%s409 + $0x68] sm:$0xff] %v398
        %424 = vst [vmem:[%s409 + $0x70] sm:$0xff] %v399
        %425 = vst [vmem:[%s409 + $0x78] sm:$0xff] %v400
        %426 = vst [vmem:[%s409 + $0x80] sm:$0xff] %v401
        %427 = vst [vmem:[%s409 + $0x88] sm:$0xff] %v402
        %428 = vst [vmem:[%s409 + $0x90] sm:$0xff] %v403
        %429 = vst [vmem:[%s409 + $0x98] sm:$0xff] %v404
        %430 = vst [vmem:[%s409 + $0xa0] sm:$0xff] %v405
        %431 = vst [vmem:[%s409 + $0xa8] sm:$0xff] %v406
        %432 = vst [vmem:[%s409 + $0xb0] sm:$0xff] %v407
        %433 = vst [vmem:[%s409 + $0xb8] sm:$0xff] %v408
        %v434 = vld [vmem:[#allocation2] sm:$0xff]
        %v435 = vld [vmem:[#allocation2 + $0x8] sm:$0xff]
        %v436 = vld [vmem:[#allocation2 + $0x10] sm:$0xff]
        %v437 = vld [vmem:[#allocation2 + $0x18] sm:$0xff]
        %v438 = vld [vmem:[#allocation2 + $0x20] sm:$0xff]
        %v439 = vld [vmem:[#allocation2 + $0x28] sm:$0xff]
        %v440 = vld [vmem:[#allocation2 + $0x30] sm:$0xff]
        %v441 = vld [vmem:[#allocation2 + $0x38] sm:$0xff]
        %v442 = vld [vmem:[#allocation2 + $0x40] sm:$0xff]
        %v443 = vld [vmem:[#allocation2 + $0x48] sm:$0xff]
        %v444 = vld [vmem:[#allocation2 + $0x50] sm:$0xff]
        %v445 = vld [vmem:[#allocation2 + $0x58] sm:$0xff]
        %v446 = vld [vmem:[#allocation2 + $0x60] sm:$0xff]
        %v447 = vld [vmem:[#allocation2 + $0x68] sm:$0xff]
        %v448 = vld [vmem:[#allocation2 + $0x70] sm:$0xff]
        %v449 = vld [vmem:[#allocation2 + $0x78] sm:$0xff]
        %v450 = vld [vmem:[#allocation2 + $0x80] sm:$0xff]
        %v451 = vld [vmem:[#allocation2 + $0x88] sm:$0xff]
        %v452 = vld [vmem:[#allocation2 + $0x90] sm:$0xff]
        %v453 = vld [vmem:[#allocation2 + $0x98] sm:$0xff]
        %v454 = vld [vmem:[#allocation2 + $0xa0] sm:$0xff]
        %v455 = vld [vmem:[#allocation2 + $0xa8] sm:$0xff]
        %v456 = vld [vmem:[#allocation2 + $0xb0] sm:$0xff]
        %v457 = vld [vmem:[#allocation2 + $0xb8] sm:$0xff]
        %v458 = vpack.c.bf16 %v435, %v434
        %v459 = vpack.c.bf16 %v437, %v436
        %v460 = vpack.c.bf16 %v439, %v438
        %v461 = vpack.c.bf16 %v441, %v440
        %v462 = vpack.c.bf16 %v443, %v442
        %v463 = vpack.c.bf16 %v445, %v444
        %v464 = vpack.c.bf16 %v447, %v446
        %v465 = vpack.c.bf16 %v449, %v448
        %v466 = vpack.c.bf16 %v451, %v450
        %v467 = vpack.c.bf16 %v453, %v452
        %v468 = vpack.c.bf16 %v455, %v454
        %v469 = vpack.c.bf16 %v457, %v456
        %v470 = vld [vmem:[#allocation9] sm:$0xf]
        %v471 = vld [vmem:[#allocation9 + $0x4] sm:$0xf]
        %v472 = vld [vmem:[#allocation9 + $0x8] sm:$0xf]
        %v473 = vld [vmem:[#allocation9 + $0xc] sm:$0xf]
        %v474 = vld [vmem:[#allocation9 + $0x10] sm:$0xf]
        %v475 = vld [vmem:[#allocation9 + $0x14] sm:$0xf]
        %v476 = vld [vmem:[#allocation9 + $0x18] sm:$0xf]
        %v477 = vld [vmem:[#allocation9 + $0x1c] sm:$0xf]
        %v478 = vld [vmem:[#allocation9 + $0x20] sm:$0xf]
        %v479 = vld [vmem:[#allocation9 + $0x24] sm:$0xf]
        %v480 = vld [vmem:[#allocation9 + $0x28] sm:$0xf]
        %v481 = vld [vmem:[#allocation9 + $0x2c] sm:$0xf]
        %v482 = vld [vmem:[#allocation9 + $0x30] sm:$0xf]
        %v483 = vld [vmem:[#allocation9 + $0x34] sm:$0xf]
        %v484 = vld [vmem:[#allocation9 + $0x38] sm:$0xf]
        %v485 = vld [vmem:[#allocation9 + $0x3c] sm:$0xf]
        %v502 = vunpack.c.l.b16 %v470
        %v503 = vunpack.c.l.b16 %v471
        %v504 = vunpack.c.l.b16 %v472
        %v505 = vunpack.c.l.b16 %v473
        %v506 = vunpack.c.l.b16 %v474
        %v507 = vunpack.c.l.b16 %v475
        %v508 = vunpack.c.l.b16 %v476
        %v509 = vunpack.c.l.b16 %v477
        %v510 = vunpack.c.l.b16 %v478
        %v511 = vunpack.c.l.b16 %v479
        %v512 = vunpack.c.l.b16 %v480
        %v513 = vunpack.c.l.b16 %v481
        %v514 = vunpack.c.l.b16 %v482
        %v515 = vunpack.c.l.b16 %v483
        %v516 = vunpack.c.l.b16 %v484
        %v517 = vunpack.c.l.b16 %v485
        %v518 = vpack.c.b16 %v503, %v502
        %v519 = vpack.c.b16 %v505, %v504
        %v520 = vpack.c.b16 %v507, %v506
        %v521 = vpack.c.b16 %v509, %v508
        %v522 = vpack.c.b16 %v511, %v510
        %v523 = vpack.c.b16 %v513, %v512
        %v524 = vpack.c.b16 %v515, %v514
        %v525 = vpack.c.b16 %v517, %v516
        %534 = vmatprep.subr.bf16.mxu0 0
        %535 = vmatpush1.bf16.msra.mxu0 %v518
        %536 = vmatprep.subr.bf16.mxu0 0
        %537 = vmatpush1.bf16.msra.mxu0 %v519
        %538 = vmatprep.subr.bf16.mxu0 0
        %539 = vmatpush1.bf16.msra.mxu0 %v520
        %540 = vmatprep.subr.bf16.mxu0 0
        %541 = vmatpush1.bf16.msra.mxu0 %v521
        %542 = vmatprep.subr.bf16.mxu0 0
        %543 = vmatpush1.bf16.msra.mxu0 %v522
        %544 = vmatprep.subr.bf16.mxu0 0
        %545 = vmatpush1.bf16.msra.mxu0 %v523
        %546 = vmatprep.subr.bf16.mxu0 0
        %547 = vmatpush1.bf16.msra.mxu0 %v524
        %548 = vmatprep.subr.bf16.mxu0 0
        %549 = vmatpush1.bf16.msra.mxu0 %v525
        %550 = vmatprep.subr.bf16.mxu0 0
        %551 = vmatpush1.bf16.msra.mxu0 0
        %552 = vmatprep.subr.bf16.mxu0 0
        %553 = vmatpush1.bf16.msra.mxu0 0
        %554 = vmatprep.subr.bf16.mxu0 0
        %555 = vmatpush1.bf16.msra.mxu0 0
        %556 = vmatprep.subr.bf16.mxu0 0
        %557 = vmatpush1.bf16.msra.mxu0 0
        %558 = vmatprep.subr.bf16.mxu0 0
        %559 = vmatpush1.bf16.msra.mxu0 0
        %560 = vmatprep.subr.bf16.mxu0 0
        %561 = vmatpush1.bf16.msra.mxu0 0
        %562 = vmatprep.subr.bf16.mxu0 0
        %563 = vmatpush1.bf16.msra.mxu0 0
        %564 = vmatprep.subr.bf16.mxu0 0
        %565 = vmatpush1.bf16.msra.mxu0 0
        %566 = vmatprep.mubr.bf16.mxu0 0
        %567 = vmatmul.mubr.bf16.gmra.mrb[0].mxu0 %v458
        %v568 = vpop.f32.mrb[0].mxu0
        %v569 = vadd.f32 0.0, %v568
        %v570 = vpop.f32.mrb[0].mxu0
        %v571 = vpop.f32.mrb[0].mxu0
        %v572 = vadd.f32 0.0, %v571
        %v573 = vpop.f32.mrb[0].mxu0
        %574 = vmatprep.mubr.bf16.mxu0 0
        %575 = vmatmul.mubr.bf16.gmra.mrb[0].mxu0 %v459
        %v576 = vpop.f32.mrb[0].mxu0
        %v577 = vadd.f32 0.0, %v576
        %v578 = vpop.f32.mrb[0].mxu0
        %v579 = vpop.f32.mrb[0].mxu0
        %v580 = vadd.f32 0.0, %v579
        %v581 = vpop.f32.mrb[0].mxu0
        %582 = vmatprep.mubr.bf16.mxu0 0
        %583 = vmatmul.mubr.bf16.gmra.mrb[0].mxu0 %v460
        %v584 = vpop.f32.mrb[0].mxu0
        %v585 = vadd.f32 0.0, %v584
        %v586 = vpop.f32.mrb[0].mxu0
        %v587 = vpop.f32.mrb[0].mxu0
        %v588 = vadd.f32 0.0, %v587
        %v589 = vpop.f32.mrb[0].mxu0
        %590 = vmatprep.mubr.bf16.mxu0 0
        %591 = vmatmul.mubr.bf16.gmra.mrb[0].mxu0 %v461
        %v592 = vpop.f32.mrb[0].mxu0
        %v593 = vadd.f32 0.0, %v592
        %v594 = vpop.f32.mrb[0].mxu0
        %v595 = vpop.f32.mrb[0].mxu0
        %v596 = vadd.f32 0.0, %v595
        %v597 = vpop.f32.mrb[0].mxu0
        %598 = vmatprep.mubr.bf16.mxu0 0
        %599 = vmatmul.mubr.bf16.gmra.mrb[0].mxu0 %v462
        %v600 = vpop.f32.mrb[0].mxu0
        %v601 = vadd.f32 0.0, %v600
        %v602 = vpop.f32.mrb[0].mxu0
        %v603 = vpop.f32.mrb[0].mxu0
        %v604 = vadd.f32 0.0, %v603
        %v605 = vpop.f32.mrb[0].mxu0
        %606 = vmatprep.mubr.bf16.mxu0 0
        %607 = vmatmul.mubr.bf16.gmra.mrb[0].mxu0 %v463
        %v608 = vpop.f32.mrb[0].mxu0
        %v609 = vadd.f32 0.0, %v608
        %v610 = vpop.f32.mrb[0].mxu0
        %v611 = vpop.f32.mrb[0].mxu0
        %v612 = vadd.f32 0.0, %v611
        %v613 = vpop.f32.mrb[0].mxu0
        %614 = vmatprep.mubr.bf16.mxu0 0
        %615 = vmatmul.mubr.bf16.gmra.mrb[0].mxu0 %v464
        %v616 = vpop.f32.mrb[0].mxu0
        %v617 = vadd.f32 0.0, %v616
        %v618 = vpop.f32.mrb[0].mxu0
        %v619 = vpop.f32.mrb[0].mxu0
        %v620 = vadd.f32 0.0, %v619
        %v621 = vpop.f32.mrb[0].mxu0
        %622 = vmatprep.mubr.bf16.mxu0 0
        %623 = vmatmul.mubr.bf16.gmra.mrb[0].mxu0 %v465
        %v624 = vpop.f32.mrb[0].mxu0
        %v625 = vadd.f32 0.0, %v624
        %v626 = vpop.f32.mrb[0].mxu0
        %v627 = vpop.f32.mrb[0].mxu0
        %v628 = vadd.f32 0.0, %v627
        %v629 = vpop.f32.mrb[0].mxu0
        %630 = vmatprep.mubr.bf16.mxu0 0
        %631 = vmatmul.mubr.bf16.gmra.mrb[0].mxu0 %v466
        %v632 = vpop.f32.mrb[0].mxu0
        %v633 = vadd.f32 0.0, %v632
        %v634 = vpop.f32.mrb[0].mxu0
        %v635 = vpop.f32.mrb[0].mxu0
        %v636 = vadd.f32 0.0, %v635
        %v637 = vpop.f32.mrb[0].mxu0
        %638 = vmatprep.mubr.bf16.mxu0 0
        %639 = vmatmul.mubr.bf16.gmra.mrb[0].mxu0 %v467
        %v640 = vpop.f32.mrb[0].mxu0
        %v641 = vadd.f32 0.0, %v640
        %v642 = vpop.f32.mrb[0].mxu0
        %v643 = vpop.f32.mrb[0].mxu0
        %v644 = vadd.f32 0.0, %v643
        %v645 = vpop.f32.mrb[0].mxu0
        %646 = vmatprep.mubr.bf16.mxu0 0
        %647 = vmatmul.mubr.bf16.gmra.mrb[0].mxu0 %v468
        %v648 = vpop.f32.mrb[0].mxu0
        %v649 = vadd.f32 0.0, %v648
        %v650 = vpop.f32.mrb[0].mxu0
        %v651 = vpop.f32.mrb[0].mxu0
        %v652 = vadd.f32 0.0, %v651
        %v653 = vpop.f32.mrb[0].mxu0
        %654 = vmatprep.mubr.bf16.mxu0 0
        %655 = vmatmul.mubr.bf16.gmra.mrb[0].mxu0 %v469
        %v656 = vpop.f32.mrb[0].mxu0
        %v657 = vadd.f32 0.0, %v656
        %v658 = vpop.f32.mrb[0].mxu0
        %v659 = vpop.f32.mrb[0].mxu0
        %v660 = vadd.f32 0.0, %v659
        %v661 = vpop.f32.mrb[0].mxu0
        %662 = vdwg.mxu0
        %663 = vst [vmem:[#allocation5] sm:$0xff] %v569
        %664 = vst [vmem:[#allocation5 + $0x8] sm:$0xff] %v572
        %665 = vst [vmem:[#allocation5 + $0x10] sm:$0xff] %v577
        %666 = vst [vmem:[#allocation5 + $0x18] sm:$0xff] %v580
        %667 = vst [vmem:[#allocation5 + $0x20] sm:$0xff] %v585
        %668 = vst [vmem:[#allocation5 + $0x28] sm:$0xff] %v588
        %669 = vst [vmem:[#allocation5 + $0x30] sm:$0xff] %v593
        %670 = vst [vmem:[#allocation5 + $0x38] sm:$0xff] %v596
        %671 = vst [vmem:[#allocation5 + $0x40] sm:$0xff] %v601
        %672 = vst [vmem:[#allocation5 + $0x48] sm:$0xff] %v604
        %673 = vst [vmem:[#allocation5 + $0x50] sm:$0xff] %v609
        %674 = vst [vmem:[#allocation5 + $0x58] sm:$0xff] %v612
        %675 = vst [vmem:[#allocation5 + $0x60] sm:$0xff] %v617
        %676 = vst [vmem:[#allocation5 + $0x68] sm:$0xff] %v620
        %677 = vst [vmem:[#allocation5 + $0x70] sm:$0xff] %v625
        %678 = vst [vmem:[#allocation5 + $0x78] sm:$0xff] %v628
        %679 = vst [vmem:[#allocation5 + $0x80] sm:$0xff] %v633
        %680 = vst [vmem:[#allocation5 + $0x88] sm:$0xff] %v636
        %681 = vst [vmem:[#allocation5 + $0x90] sm:$0xff] %v641
        %682 = vst [vmem:[#allocation5 + $0x98] sm:$0xff] %v644
        %683 = vst [vmem:[#allocation5 + $0xa0] sm:$0xff] %v649
        %684 = vst [vmem:[#allocation5 + $0xa8] sm:$0xff] %v652
        %685 = vst [vmem:[#allocation5 + $0xb0] sm:$0xff] %v657
        %686 = vst [vmem:[#allocation5 + $0xb8] sm:$0xff] %v660
        %v687 = vld [vmem:[#allocation5] sm:$0xff]
        %v688 = vld [vmem:[#allocation5 + $0x8] sm:$0xff]
        %v689 = vld [vmem:[#allocation5 + $0x10] sm:$0xff]
        %v690 = vld [vmem:[#allocation5 + $0x18] sm:$0xff]
        %v691 = vld [vmem:[#allocation5 + $0x20] sm:$0xff]
        %v692 = vld [vmem:[#allocation5 + $0x28] sm:$0xff]
        %v693 = vld [vmem:[#allocation5 + $0x30] sm:$0xff]
        %v694 = vld [vmem:[#allocation5 + $0x38] sm:$0xff]
        %v695 = vld [vmem:[#allocation5 + $0x40] sm:$0xff]
        %v696 = vld [vmem:[#allocation5 + $0x48] sm:$0xff]
        %v697 = vld [vmem:[#allocation5 + $0x50] sm:$0xff]
        %v698 = vld [vmem:[#allocation5 + $0x58] sm:$0xff]
        %v699 = vld [vmem:[#allocation5 + $0x60] sm:$0xff]
        %v700 = vld [vmem:[#allocation5 + $0x68] sm:$0xff]
        %v701 = vld [vmem:[#allocation5 + $0x70] sm:$0xff]
        %v702 = vld [vmem:[#allocation5 + $0x78] sm:$0xff]
        %v703 = vld [vmem:[#allocation5 + $0x80] sm:$0xff]
        %v704 = vld [vmem:[#allocation5 + $0x88] sm:$0xff]
        %v705 = vld [vmem:[#allocation5 + $0x90] sm:$0xff]
        %v706 = vld [vmem:[#allocation5 + $0x98] sm:$0xff]
        %v707 = vld [vmem:[#allocation5 + $0xa0] sm:$0xff]
        %v708 = vld [vmem:[#allocation5 + $0xa8] sm:$0xff]
        %v709 = vld [vmem:[#allocation5 + $0xb0] sm:$0xff]
        %v710 = vld [vmem:[#allocation5 + $0xb8] sm:$0xff]
        %s711 = scalar_lea.vmem [#allocation2], 8
        %v712 = vld [vmem:[%s711] sm:$0xff]
        %v713 = vld [vmem:[%s711 + $0x8] sm:$0xff]
        %v714 = vld [vmem:[%s711 + $0x10] sm:$0xff]
        %v715 = vld [vmem:[%s711 + $0x18] sm:$0xff]
        %v716 = vld [vmem:[%s711 + $0x20] sm:$0xff]
        %v717 = vld [vmem:[%s711 + $0x28] sm:$0xff]
        %v718 = vld [vmem:[%s711 + $0x30] sm:$0xff]
        %v719 = vld [vmem:[%s711 + $0x38] sm:$0xff]
        %v720 = vld [vmem:[%s711 + $0x40] sm:$0xff]
        %v721 = vld [vmem:[%s711 + $0x48] sm:$0xff]
        %v722 = vld [vmem:[%s711 + $0x50] sm:$0xff]
        %v723 = vld [vmem:[%s711 + $0x58] sm:$0xff]
        %v724 = vld [vmem:[%s711 + $0x60] sm:$0xff]
        %v725 = vld [vmem:[%s711 + $0x68] sm:$0xff]
        %v726 = vld [vmem:[%s711 + $0x70] sm:$0xff]
        %v727 = vld [vmem:[%s711 + $0x78] sm:$0xff]
        %v728 = vld [vmem:[%s711 + $0x80] sm:$0xff]
        %v729 = vld [vmem:[%s711 + $0x88] sm:$0xff]
        %v730 = vld [vmem:[%s711 + $0x90] sm:$0xff]
        %v731 = vld [vmem:[%s711 + $0x98] sm:$0xff]
        %v732 = vld [vmem:[%s711 + $0xa0] sm:$0xff]
        %v733 = vld [vmem:[%s711 + $0xa8] sm:$0xff]
        %v734 = vld [vmem:[%s711 + $0xb0] sm:$0xff]
        %v735 = vld [vmem:[%s711 + $0xb8] sm:$0xff]
        %v736 = vpack.c.bf16 %v713, %v712
        %v737 = vpack.c.bf16 %v715, %v714
        %v738 = vpack.c.bf16 %v717, %v716
        %v739 = vpack.c.bf16 %v719, %v718
        %v740 = vpack.c.bf16 %v721, %v720
        %v741 = vpack.c.bf16 %v723, %v722
        %v742 = vpack.c.bf16 %v725, %v724
        %v743 = vpack.c.bf16 %v727, %v726
        %v744 = vpack.c.bf16 %v729, %v728
        %v745 = vpack.c.bf16 %v731, %v730
        %v746 = vpack.c.bf16 %v733, %v732
        %v747 = vpack.c.bf16 %v735, %v734
        %s748 = scalar_lea.vmem [#allocation9], 64
        %v749 = vld [vmem:[%s748] sm:$0xf]
        %v750 = vld [vmem:[%s748 + $0x4] sm:$0xf]
        %v751 = vld [vmem:[%s748 + $0x8] sm:$0xf]
        %v752 = vld [vmem:[%s748 + $0xc] sm:$0xf]
        %v753 = vld [vmem:[%s748 + $0x10] sm:$0xf]
        %v754 = vld [vmem:[%s748 + $0x14] sm:$0xf]
        %v755 = vld [vmem:[%s748 + $0x18] sm:$0xf]
        %v756 = vld [vmem:[%s748 + $0x1c] sm:$0xf]
        %v757 = vld [vmem:[%s748 + $0x20] sm:$0xf]
        %v758 = vld [vmem:[%s748 + $0x24] sm:$0xf]
        %v759 = vld [vmem:[%s748 + $0x28] sm:$0xf]
        %v760 = vld [vmem:[%s748 + $0x2c] sm:$0xf]
        %v761 = vld [vmem:[%s748 + $0x30] sm:$0xf]
        %v762 = vld [vmem:[%s748 + $0x34] sm:$0xf]
        %v763 = vld [vmem:[%s748 + $0x38] sm:$0xf]
        %v764 = vld [vmem:[%s748 + $0x3c] sm:$0xf]
        %v781 = vunpack.c.l.b16 %v749
        %v782 = vunpack.c.l.b16 %v750
        %v783 = vunpack.c.l.b16 %v751
        %v784 = vunpack.c.l.b16 %v752
        %v785 = vunpack.c.l.b16 %v753
        %v786 = vunpack.c.l.b16 %v754
        %v787 = vunpack.c.l.b16 %v755
        %v788 = vunpack.c.l.b16 %v756
        %v789 = vunpack.c.l.b16 %v757
        %v790 = vunpack.c.l.b16 %v758
        %v791 = vunpack.c.l.b16 %v759
        %v792 = vunpack.c.l.b16 %v760
        %v793 = vunpack.c.l.b16 %v761
        %v794 = vunpack.c.l.b16 %v762
        %v795 = vunpack.c.l.b16 %v763
        %v796 = vunpack.c.l.b16 %v764
        %v797 = vpack.c.b16 %v782, %v781
        %v798 = vpack.c.b16 %v784, %v783
        %v799 = vpack.c.b16 %v786, %v785
        %v800 = vpack.c.b16 %v788, %v787
        %v801 = vpack.c.b16 %v790, %v789
        %v802 = vpack.c.b16 %v792, %v791
        %v803 = vpack.c.b16 %v794, %v793
        %v804 = vpack.c.b16 %v796, %v795
        %813 = vmatprep.subr.bf16.mxu0 0
        %814 = vmatpush1.bf16.msra.mxu0 %v797
        %815 = vmatprep.subr.bf16.mxu0 0
        %816 = vmatpush1.bf16.msra.mxu0 %v798
        %817 = vmatprep.subr.bf16.mxu0 0
        %818 = vmatpush1.bf16.msra.mxu0 %v799
        %819 = vmatprep.subr.bf16.mxu0 0
        %820 = vmatpush1.bf16.msra.mxu0 %v800
        %821 = vmatprep.subr.bf16.mxu0 0
        %822 = vmatpush1.bf16.msra.mxu0 %v801
        %823 = vmatprep.subr.bf16.mxu0 0
        %824 = vmatpush1.bf16.msra.mxu0 %v802
        %825 = vmatprep.subr.bf16.mxu0 0
        %826 = vmatpush1.bf16.msra.mxu0 %v803
        %827 = vmatprep.subr.bf16.mxu0 0
        %828 = vmatpush1.bf16.msra.mxu0 %v804
        %829 = vmatprep.subr.bf16.mxu0 0
        %830 = vmatpush1.bf16.msra.mxu0 0
        %831 = vmatprep.subr.bf16.mxu0 0
        %832 = vmatpush1.bf16.msra.mxu0 0
        %833 = vmatprep.subr.bf16.mxu0 0
        %834 = vmatpush1.bf16.msra.mxu0 0
        %835 = vmatprep.subr.bf16.mxu0 0
        %836 = vmatpush1.bf16.msra.mxu0 0
        %837 = vmatprep.subr.bf16.mxu0 0
        %838 = vmatpush1.bf16.msra.mxu0 0
        %839 = vmatprep.subr.bf16.mxu0 0
        %840 = vmatpush1.bf16.msra.mxu0 0
        %841 = vmatprep.subr.bf16.mxu0 0
        %842 = vmatpush1.bf16.msra.mxu0 0
        %843 = vmatprep.subr.bf16.mxu0 0
        %844 = vmatpush1.bf16.msra.mxu0 0
        %845 = vmatprep.mubr.bf16.mxu0 0
        %846 = vmatmul.mubr.bf16.gmra.mrb[0].mxu0 %v736
        %v847 = vpop.f32.mrb[0].mxu0
        %v848 = vadd.f32 0.0, %v847
        %v849 = vpop.f32.mrb[0].mxu0
        %v850 = vpop.f32.mrb[0].mxu0
        %v851 = vadd.f32 0.0, %v850
        %v852 = vpop.f32.mrb[0].mxu0
        %853 = vmatprep.mubr.bf16.mxu0 0
        %854 = vmatmul.mubr.bf16.gmra.mrb[0].mxu0 %v737
        %v855 = vpop.f32.mrb[0].mxu0
        %v856 = vadd.f32 0.0, %v855
        %v857 = vpop.f32.mrb[0].mxu0
        %v858 = vpop.f32.mrb[0].mxu0
        %v859 = vadd.f32 0.0, %v858
        %v860 = vpop.f32.mrb[0].mxu0
        %861 = vmatprep.mubr.bf16.mxu0 0
        %862 = vmatmul.mubr.bf16.gmra.mrb[0].mxu0 %v738
        %v863 = vpop.f32.mrb[0].mxu0
        %v864 = vadd.f32 0.0, %v863
        %v865 = vpop.f32.mrb[0].mxu0
        %v866 = vpop.f32.mrb[0].mxu0
        %v867 = vadd.f32 0.0, %v866
        %v868 = vpop.f32.mrb[0].mxu0
        %869 = vmatprep.mubr.bf16.mxu0 0
        %870 = vmatmul.mubr.bf16.gmra.mrb[0].mxu0 %v739
        %v871 = vpop.f32.mrb[0].mxu0
        %v872 = vadd.f32 0.0, %v871
        %v873 = vpop.f32.mrb[0].mxu0
        %v874 = vpop.f32.mrb[0].mxu0
        %v875 = vadd.f32 0.0, %v874
        %v876 = vpop.f32.mrb[0].mxu0
        %877 = vmatprep.mubr.bf16.mxu0 0
        %878 = vmatmul.mubr.bf16.gmra.mrb[0].mxu0 %v740
        %v879 = vpop.f32.mrb[0].mxu0
        %v880 = vadd.f32 0.0, %v879
        %v881 = vpop.f32.mrb[0].mxu0
        %v882 = vpop.f32.mrb[0].mxu0
        %v883 = vadd.f32 0.0, %v882
        %v884 = vpop.f32.mrb[0].mxu0
        %885 = vmatprep.mubr.bf16.mxu0 0
        %886 = vmatmul.mubr.bf16.gmra.mrb[0].mxu0 %v741
        %v887 = vpop.f32.mrb[0].mxu0
        %v888 = vadd.f32 0.0, %v887
        %v889 = vpop.f32.mrb[0].mxu0
        %v890 = vpop.f32.mrb[0].mxu0
        %v891 = vadd.f32 0.0, %v890
        %v892 = vpop.f32.mrb[0].mxu0
        %893 = vmatprep.mubr.bf16.mxu0 0
        %894 = vmatmul.mubr.bf16.gmra.mrb[0].mxu0 %v742
        %v895 = vpop.f32.mrb[0].mxu0
        %v896 = vadd.f32 0.0, %v895
        %v897 = vpop.f32.mrb[0].mxu0
        %v898 = vpop.f32.mrb[0].mxu0
        %v899 = vadd.f32 0.0, %v898
        %v900 = vpop.f32.mrb[0].mxu0
        %901 = vmatprep.mubr.bf16.mxu0 0
        %902 = vmatmul.mubr.bf16.gmra.mrb[0].mxu0 %v743
        %v903 = vpop.f32.mrb[0].mxu0
        %v904 = vadd.f32 0.0, %v903
        %v905 = vpop.f32.mrb[0].mxu0
        %v906 = vpop.f32.mrb[0].mxu0
        %v907 = vadd.f32 0.0, %v906
        %v908 = vpop.f32.mrb[0].mxu0
        %909 = vmatprep.mubr.bf16.mxu0 0
        %910 = vmatmul.mubr.bf16.gmra.mrb[0].mxu0 %v744
        %v911 = vpop.f32.mrb[0].mxu0
        %v912 = vadd.f32 0.0, %v911
        %v913 = vpop.f32.mrb[0].mxu0
        %v914 = vpop.f32.mrb[0].mxu0
        %v915 = vadd.f32 0.0, %v914
        %v916 = vpop.f32.mrb[0].mxu0
        %917 = vmatprep.mubr.bf16.mxu0 0
        %918 = vmatmul.mubr.bf16.gmra.mrb[0].mxu0 %v745
        %v919 = vpop.f32.mrb[0].mxu0
        %v920 = vadd.f32 0.0, %v919
        %v921 = vpop.f32.mrb[0].mxu0
        %v922 = vpop.f32.mrb[0].mxu0
        %v923 = vadd.f32 0.0, %v922
        %v924 = vpop.f32.mrb[0].mxu0
        %925 = vmatprep.mubr.bf16.mxu0 0
        %926 = vmatmul.mubr.bf16.gmra.mrb[0].mxu0 %v746
        %v927 = vpop.f32.mrb[0].mxu0
        %v928 = vadd.f32 0.0, %v927
        %v929 = vpop.f32.mrb[0].mxu0
        %v930 = vpop.f32.mrb[0].mxu0
        %v931 = vadd.f32 0.0, %v930
        %v932 = vpop.f32.mrb[0].mxu0
        %933 = vmatprep.mubr.bf16.mxu0 0
        %934 = vmatmul.mubr.bf16.gmra.mrb[0].mxu0 %v747
        %v935 = vpop.f32.mrb[0].mxu0
        %v936 = vadd.f32 0.0, %v935
        %v937 = vpop.f32.mrb[0].mxu0
        %v938 = vpop.f32.mrb[0].mxu0
        %v939 = vadd.f32 0.0, %v938
        %v940 = vpop.f32.mrb[0].mxu0
        %941 = vdwg.mxu0
        %v942 = vadd.f32 %v687, %v848
        %v943 = vadd.f32 %v688, %v851
        %v944 = vadd.f32 %v689, %v856
        %v945 = vadd.f32 %v690, %v859
        %v946 = vadd.f32 %v691, %v864
        %v947 = vadd.f32 %v692, %v867
        %v948 = vadd.f32 %v693, %v872
        %v949 = vadd.f32 %v694, %v875
        %v950 = vadd.f32 %v695, %v880
        %v951 = vadd.f32 %v696, %v883
        %v952 = vadd.f32 %v697, %v888
        %v953 = vadd.f32 %v698, %v891
        %v954 = vadd.f32 %v699, %v896
        %v955 = vadd.f32 %v700, %v899
        %v956 = vadd.f32 %v701, %v904
        %v957 = vadd.f32 %v702, %v907
        %v958 = vadd.f32 %v703, %v912
        %v959 = vadd.f32 %v704, %v915
        %v960 = vadd.f32 %v705, %v920
        %v961 = vadd.f32 %v706, %v923
        %v962 = vadd.f32 %v707, %v928
        %v963 = vadd.f32 %v708, %v931
        %v964 = vadd.f32 %v709, %v936
        %v965 = vadd.f32 %v710, %v939
        %966 = vst [vmem:[#allocation5] sm:$0xff] %v942
        %967 = vst [vmem:[#allocation5 + $0x8] sm:$0xff] %v943
        %968 = vst [vmem:[#allocation5 + $0x10] sm:$0xff] %v944
        %969 = vst [vmem:[#allocation5 + $0x18] sm:$0xff] %v945
        %970 = vst [vmem:[#allocation5 + $0x20] sm:$0xff] %v946
        %971 = vst [vmem:[#allocation5 + $0x28] sm:$0xff] %v947
        %972 = vst [vmem:[#allocation5 + $0x30] sm:$0xff] %v948
        %973 = vst [vmem:[#allocation5 + $0x38] sm:$0xff] %v949
        %974 = vst [vmem:[#allocation5 + $0x40] sm:$0xff] %v950
        %975 = vst [vmem:[#allocation5 + $0x48] sm:$0xff] %v951
        %976 = vst [vmem:[#allocation5 + $0x50] sm:$0xff] %v952
        %977 = vst [vmem:[#allocation5 + $0x58] sm:$0xff] %v953
        %978 = vst [vmem:[#allocation5 + $0x60] sm:$0xff] %v954
        %979 = vst [vmem:[#allocation5 + $0x68] sm:$0xff] %v955
        %980 = vst [vmem:[#allocation5 + $0x70] sm:$0xff] %v956
        %981 = vst [vmem:[#allocation5 + $0x78] sm:$0xff] %v957
        %982 = vst [vmem:[#allocation5 + $0x80] sm:$0xff] %v958
        %983 = vst [vmem:[#allocation5 + $0x88] sm:$0xff] %v959
        %984 = vst [vmem:[#allocation5 + $0x90] sm:$0xff] %v960
        %985 = vst [vmem:[#allocation5 + $0x98] sm:$0xff] %v961
        %986 = vst [vmem:[#allocation5 + $0xa0] sm:$0xff] %v962
        %987 = vst [vmem:[#allocation5 + $0xa8] sm:$0xff] %v963
        %988 = vst [vmem:[#allocation5 + $0xb0] sm:$0xff] %v964
        %989 = vst [vmem:[#allocation5 + $0xb8] sm:$0xff] %v965
        %v990 = vld [vmem:[#allocation5] sm:$0xff]
        %v991 = vld [vmem:[#allocation5 + $0x8] sm:$0xff]
        %v992 = vld [vmem:[#allocation5 + $0x10] sm:$0xff]
        %v993 = vld [vmem:[#allocation5 + $0x18] sm:$0xff]
        %v994 = vld [vmem:[#allocation5 + $0x20] sm:$0xff]
        %v995 = vld [vmem:[#allocation5 + $0x28] sm:$0xff]
        %v996 = vld [vmem:[#allocation5 + $0x30] sm:$0xff]
        %v997 = vld [vmem:[#allocation5 + $0x38] sm:$0xff]
        %v998 = vld [vmem:[#allocation5 + $0x40] sm:$0xff]
        %v999 = vld [vmem:[#allocation5 + $0x48] sm:$0xff]
        %v1000 = vld [vmem:[#allocation5 + $0x50] sm:$0xff]
        %v1001 = vld [vmem:[#allocation5 + $0x58] sm:$0xff]
        %v1002 = vld [vmem:[#allocation5 + $0x60] sm:$0xff]
        %v1003 = vld [vmem:[#allocation5 + $0x68] sm:$0xff]
        %v1004 = vld [vmem:[#allocation5 + $0x70] sm:$0xff]
        %v1005 = vld [vmem:[#allocation5 + $0x78] sm:$0xff]
        %v1006 = vld [vmem:[#allocation5 + $0x80] sm:$0xff]
        %v1007 = vld [vmem:[#allocation5 + $0x88] sm:$0xff]
        %v1008 = vld [vmem:[#allocation5 + $0x90] sm:$0xff]
        %v1009 = vld [vmem:[#allocation5 + $0x98] sm:$0xff]
        %v1010 = vld [vmem:[#allocation5 + $0xa0] sm:$0xff]
        %v1011 = vld [vmem:[#allocation5 + $0xa8] sm:$0xff]
        %v1012 = vld [vmem:[#allocation5 + $0xb0] sm:$0xff]
        %v1013 = vld [vmem:[#allocation5 + $0xb8] sm:$0xff]
        %s1014 = scalar_lea.vmem [#allocation2], 16
        %v1015 = vld [vmem:[%s1014] sm:$0xff]
        %v1016 = vld [vmem:[%s1014 + $0x8] sm:$0xff]
        %v1017 = vld [vmem:[%s1014 + $0x10] sm:$0xff]
        %v1018 = vld [vmem:[%s1014 + $0x18] sm:$0xff]
        %v1019 = vld [vmem:[%s1014 + $0x20] sm:$0xff]
        %v1020 = vld [vmem:[%s1014 + $0x28] sm:$0xff]
        %v1021 = vld [vmem:[%s1014 + $0x30] sm:$0xff]
        %v1022 = vld [vmem:[%s1014 + $0x38] sm:$0xff]
        %v1023 = vld [vmem:[%s1014 + $0x40] sm:$0xff]
        %v1024 = vld [vmem:[%s1014 + $0x48] sm:$0xff]
        %v1025 = vld [vmem:[%s1014 + $0x50] sm:$0xff]
        %v1026 = vld [vmem:[%s1014 + $0x58] sm:$0xff]
        %v1027 = vld [vmem:[%s1014 + $0x60] sm:$0xff]
        %v1028 = vld [vmem:[%s1014 + $0x68] sm:$0xff]
        %v1029 = vld [vmem:[%s1014 + $0x70] sm:$0xff]
        %v1030 = vld [vmem:[%s1014 + $0x78] sm:$0xff]
        %v1031 = vld [vmem:[%s1014 + $0x80] sm:$0xff]
        %v1032 = vld [vmem:[%s1014 + $0x88] sm:$0xff]
        %v1033 = vld [vmem:[%s1014 + $0x90] sm:$0xff]
        %v1034 = vld [vmem:[%s1014 + $0x98] sm:$0xff]
        %v1035 = vld [vmem:[%s1014 + $0xa0] sm:$0xff]
        %v1036 = vld [vmem:[%s1014 + $0xa8] sm:$0xff]
        %v1037 = vld [vmem:[%s1014 + $0xb0] sm:$0xff]
        %v1038 = vld [vmem:[%s1014 + $0xb8] sm:$0xff]
        %v1039 = vpack.c.bf16 %v1016, %v1015
        %v1040 = vpack.c.bf16 %v1018, %v1017
        %v1041 = vpack.c.bf16 %v1020, %v1019
        %v1042 = vpack.c.bf16 %v1022, %v1021
        %v1043 = vpack.c.bf16 %v1024, %v1023
        %v1044 = vpack.c.bf16 %v1026, %v1025
        %v1045 = vpack.c.bf16 %v1028, %v1027
        %v1046 = vpack.c.bf16 %v1030, %v1029
        %v1047 = vpack.c.bf16 %v1032, %v1031
        %v1048 = vpack.c.bf16 %v1034, %v1033
        %v1049 = vpack.c.bf16 %v1036, %v1035
        %v1050 = vpack.c.bf16 %v1038, %v1037
        %s1051 = scalar_lea.vmem [#allocation9], 128
        %v1052 = vld [vmem:[%s1051] sm:$0xf]
        %v1053 = vld [vmem:[%s1051 + $0x4] sm:$0xf]
        %v1054 = vld [vmem:[%s1051 + $0x8] sm:$0xf]
        %v1055 = vld [vmem:[%s1051 + $0xc] sm:$0xf]
        %v1056 = vld [vmem:[%s1051 + $0x10] sm:$0xf]
        %v1057 = vld [vmem:[%s1051 + $0x14] sm:$0xf]
        %v1058 = vld [vmem:[%s1051 + $0x18] sm:$0xf]
        %v1059 = vld [vmem:[%s1051 + $0x1c] sm:$0xf]
        %v1060 = vld [vmem:[%s1051 + $0x20] sm:$0xf]
        %v1061 = vld [vmem:[%s1051 + $0x24] sm:$0xf]
        %v1062 = vld [vmem:[%s1051 + $0x28] sm:$0xf]
        %v1063 = vld [vmem:[%s1051 + $0x2c] sm:$0xf]
        %v1064 = vld [vmem:[%s1051 + $0x30] sm:$0xf]
        %v1065 = vld [vmem:[%s1051 + $0x34] sm:$0xf]
        %v1066 = vld [vmem:[%s1051 + $0x38] sm:$0xf]
        %v1067 = vld [vmem:[%s1051 + $0x3c] sm:$0xf]
        %v1084 = vunpack.c.l.b16 %v1052
        %v1085 = vunpack.c.l.b16 %v1053
        %v1086 = vunpack.c.l.b16 %v1054
        %v1087 = vunpack.c.l.b16 %v1055
        %v1088 = vunpack.c.l.b16 %v1056
        %v1089 = vunpack.c.l.b16 %v1057
        %v1090 = vunpack.c.l.b16 %v1058
        %v1091 = vunpack.c.l.b16 %v1059
        %v1092 = vunpack.c.l.b16 %v1060
        %v1093 = vunpack.c.l.b16 %v1061
        %v1094 = vunpack.c.l.b16 %v1062
        %v1095 = vunpack.c.l.b16 %v1063
        %v1096 = vunpack.c.l.b16 %v1064
        %v1097 = vunpack.c.l.b16 %v1065
        %v1098 = vunpack.c.l.b16 %v1066
        %v1099 = vunpack.c.l.b16 %v1067
        %v1100 = vpack.c.b16 %v1085, %v1084
        %v1101 = vpack.c.b16 %v1087, %v1086
        %v1102 = vpack.c.b16 %v1089, %v1088
        %v1103 = vpack.c.b16 %v1091, %v1090
        %v1104 = vpack.c.b16 %v1093, %v1092
        %v1105 = vpack.c.b16 %v1095, %v1094
        %v1106 = vpack.c.b16 %v1097, %v1096
        %v1107 = vpack.c.b16 %v1099, %v1098
        %1116 = vmatprep.subr.bf16.mxu0 0
        %1117 = vmatpush1.bf16.msra.mxu0 %v1100
        %1118 = vmatprep.subr.bf16.mxu0 0
        %1119 = vmatpush1.bf16.msra.mxu0 %v1101
        %1120 = vmatprep.subr.bf16.mxu0 0
        %1121 = vmatpush1.bf16.msra.mxu0 %v1102
        %1122 = vmatprep.subr.bf16.mxu0 0
        %1123 = vmatpush1.bf16.msra.mxu0 %v1103
        %1124 = vmatprep.subr.bf16.mxu0 0
        %1125 = vmatpush1.bf16.msra.mxu0 %v1104
        %1126 = vmatprep.subr.bf16.mxu0 0
        %1127 = vmatpush1.bf16.msra.mxu0 %v1105
        %1128 = vmatprep.subr.bf16.mxu0 0
        %1129 = vmatpush1.bf16.msra.mxu0 %v1106
        %1130 = vmatprep.subr.bf16.mxu0 0
        %1131 = vmatpush1.bf16.msra.mxu0 %v1107
        %1132 = vmatprep.subr.bf16.mxu0 0
        %1133 = vmatpush1.bf16.msra.mxu0 0
        %1134 = vmatprep.subr.bf16.mxu0 0
        %1135 = vmatpush1.bf16.msra.mxu0 0
        %1136 = vmatprep.subr.bf16.mxu0 0
        %1137 = vmatpush1.bf16.msra.mxu0 0
        %1138 = vmatprep.subr.bf16.mxu0 0
        %1139 = vmatpush1.bf16.msra.mxu0 0
        %1140 = vmatprep.subr.bf16.mxu0 0
        %1141 = vmatpush1.bf16.msra.mxu0 0
        %1142 = vmatprep.subr.bf16.mxu0 0
        %1143 = vmatpush1.bf16.msra.mxu0 0
        %1144 = vmatprep.subr.bf16.mxu0 0
        %1145 = vmatpush1.bf16.msra.mxu0 0
        %1146 = vmatprep.subr.bf16.mxu0 0
        %1147 = vmatpush1.bf16.msra.mxu0 0
        %1148 = vmatprep.mubr.bf16.mxu0 0
        %1149 = vmatmul.mubr.bf16.gmra.mrb[0].mxu0 %v1039
        %v1150 = vpop.f32.mrb[0].mxu0
        %v1151 = vadd.f32 0.0, %v1150
        %v1152 = vpop.f32.mrb[0].mxu0
        %v1153 = vpop.f32.mrb[0].mxu0
        %v1154 = vadd.f32 0.0, %v1153
        %v1155 = vpop.f32.mrb[0].mxu0
        %1156 = vmatprep.mubr.bf16.mxu0 0
        %1157 = vmatmul.mubr.bf16.gmra.mrb[0].mxu0 %v1040
        %v1158 = vpop.f32.mrb[0].mxu0
        %v1159 = vadd.f32 0.0, %v1158
        %v1160 = vpop.f32.mrb[0].mxu0
        %v1161 = vpop.f32.mrb[0].mxu0
        %v1162 = vadd.f32 0.0, %v1161
        %v1163 = vpop.f32.mrb[0].mxu0
        %1164 = vmatprep.mubr.bf16.mxu0 0
        %1165 = vmatmul.mubr.bf16.gmra.mrb[0].mxu0 %v1041
        %v1166 = vpop.f32.mrb[0].mxu0
        %v1167 = vadd.f32 0.0, %v1166
        %v1168 = vpop.f32.mrb[0].mxu0
        %v1169 = vpop.f32.mrb[0].mxu0
        %v1170 = vadd.f32 0.0, %v1169
        %v1171 = vpop.f32.mrb[0].mxu0
        %1172 = vmatprep.mubr.bf16.mxu0 0
        %1173 = vmatmul.mubr.bf16.gmra.mrb[0].mxu0 %v1042
        %v1174 = vpop.f32.mrb[0].mxu0
        %v1175 = vadd.f32 0.0, %v1174
        %v1176 = vpop.f32.mrb[0].mxu0
        %v1177 = vpop.f32.mrb[0].mxu0
        %v1178 = vadd.f32 0.0, %v1177
        %v1179 = vpop.f32.mrb[0].mxu0
        %1180 = vmatprep.mubr.bf16.mxu0 0
        %1181 = vmatmul.mubr.bf16.gmra.mrb[0].mxu0 %v1043
        %v1182 = vpop.f32.mrb[0].mxu0
        %v1183 = vadd.f32 0.0, %v1182
        %v1184 = vpop.f32.mrb[0].mxu0
        %v1185 = vpop.f32.mrb[0].mxu0
        %v1186 = vadd.f32 0.0, %v1185
        %v1187 = vpop.f32.mrb[0].mxu0
        %1188 = vmatprep.mubr.bf16.mxu0 0
        %1189 = vmatmul.mubr.bf16.gmra.mrb[0].mxu0 %v1044
        %v1190 = vpop.f32.mrb[0].mxu0
        %v1191 = vadd.f32 0.0, %v1190
        %v1192 = vpop.f32.mrb[0].mxu0
        %v1193 = vpop.f32.mrb[0].mxu0
        %v1194 = vadd.f32 0.0, %v1193
        %v1195 = vpop.f32.mrb[0].mxu0
        %1196 = vmatprep.mubr.bf16.mxu0 0
        %1197 = vmatmul.mubr.bf16.gmra.mrb[0].mxu0 %v1045
        %v1198 = vpop.f32.mrb[0].mxu0
        %v1199 = vadd.f32 0.0, %v1198
        %v1200 = vpop.f32.mrb[0].mxu0
        %v1201 = vpop.f32.mrb[0].mxu0
        %v1202 = vadd.f32 0.0, %v1201
        %v1203 = vpop.f32.mrb[0].mxu0
        %1204 = vmatprep.mubr.bf16.mxu0 0
        %1205 = vmatmul.mubr.bf16.gmra.mrb[0].mxu0 %v1046
        %v1206 = vpop.f32.mrb[0].mxu0
        %v1207 = vadd.f32 0.0, %v1206
        %v1208 = vpop.f32.mrb[0].mxu0
        %v1209 = vpop.f32.mrb[0].mxu0
        %v1210 = vadd.f32 0.0, %v1209
        %v1211 = vpop.f32.mrb[0].mxu0
        %1212 = vmatprep.mubr.bf16.mxu0 0
        %1213 = vmatmul.mubr.bf16.gmra.mrb[0].mxu0 %v1047
        %v1214 = vpop.f32.mrb[0].mxu0
        %v1215 = vadd.f32 0.0, %v1214
        %v1216 = vpop.f32.mrb[0].mxu0
        %v1217 = vpop.f32.mrb[0].mxu0
        %v1218 = vadd.f32 0.0, %v1217
        %v1219 = vpop.f32.mrb[0].mxu0
        %1220 = vmatprep.mubr.bf16.mxu0 0
        %1221 = vmatmul.mubr.bf16.gmra.mrb[0].mxu0 %v1048
        %v1222 = vpop.f32.mrb[0].mxu0
        %v1223 = vadd.f32 0.0, %v1222
        %v1224 = vpop.f32.mrb[0].mxu0
        %v1225 = vpop.f32.mrb[0].mxu0
        %v1226 = vadd.f32 0.0, %v1225
        %v1227 = vpop.f32.mrb[0].mxu0
        %1228 = vmatprep.mubr.bf16.mxu0 0
        %1229 = vmatmul.mubr.bf16.gmra.mrb[0].mxu0 %v1049
        %v1230 = vpop.f32.mrb[0].mxu0
        %v1231 = vadd.f32 0.0, %v1230
        %v1232 = vpop.f32.mrb[0].mxu0
        %v1233 = vpop.f32.mrb[0].mxu0
        %v1234 = vadd.f32 0.0, %v1233
        %v1235 = vpop.f32.mrb[0].mxu0
        %1236 = vmatprep.mubr.bf16.mxu0 0
        %1237 = vmatmul.mubr.bf16.gmra.mrb[0].mxu0 %v1050
        %v1238 = vpop.f32.mrb[0].mxu0
        %v1239 = vadd.f32 0.0, %v1238
        %v1240 = vpop.f32.mrb[0].mxu0
        %v1241 = vpop.f32.mrb[0].mxu0
        %v1242 = vadd.f32 0.0, %v1241
        %v1243 = vpop.f32.mrb[0].mxu0
        %1244 = vdwg.mxu0
        %v1245 = vadd.f32 %v990, %v1151
        %v1246 = vadd.f32 %v991, %v1154
        %v1247 = vadd.f32 %v992, %v1159
        %v1248 = vadd.f32 %v993, %v1162
        %v1249 = vadd.f32 %v994, %v1167
        %v1250 = vadd.f32 %v995, %v1170
        %v1251 = vadd.f32 %v996, %v1175
        %v1252 = vadd.f32 %v997, %v1178
        %v1253 = vadd.f32 %v998, %v1183
        %v1254 = vadd.f32 %v999, %v1186
        %v1255 = vadd.f32 %v1000, %v1191
        %v1256 = vadd.f32 %v1001, %v1194
        %v1257 = vadd.f32 %v1002, %v1199
        %v1258 = vadd.f32 %v1003, %v1202
        %v1259 = vadd.f32 %v1004, %v1207
        %v1260 = vadd.f32 %v1005, %v1210
        %v1261 = vadd.f32 %v1006, %v1215
        %v1262 = vadd.f32 %v1007, %v1218
        %v1263 = vadd.f32 %v1008, %v1223
        %v1264 = vadd.f32 %v1009, %v1226
        %v1265 = vadd.f32 %v1010, %v1231
        %v1266 = vadd.f32 %v1011, %v1234
        %v1267 = vadd.f32 %v1012, %v1239
        %v1268 = vadd.f32 %v1013, %v1242
        %1269 = vst [vmem:[#allocation5] sm:$0xff] %v1245
        %1270 = vst [vmem:[#allocation5 + $0x8] sm:$0xff] %v1246
        %1271 = vst [vmem:[#allocation5 + $0x10] sm:$0xff] %v1247
        %1272 = vst [vmem:[#allocation5 + $0x18] sm:$0xff] %v1248
        %1273 = vst [vmem:[#allocation5 + $0x20] sm:$0xff] %v1249
        %1274 = vst [vmem:[#allocation5 + $0x28] sm:$0xff] %v1250
        %1275 = vst [vmem:[#allocation5 + $0x30] sm:$0xff] %v1251
        %1276 = vst [vmem:[#allocation5 + $0x38] sm:$0xff] %v1252
        %1277 = vst [vmem:[#allocation5 + $0x40] sm:$0xff] %v1253
        %1278 = vst [vmem:[#allocation5 + $0x48] sm:$0xff] %v1254
        %1279 = vst [vmem:[#allocation5 + $0x50] sm:$0xff] %v1255
        %1280 = vst [vmem:[#allocation5 + $0x58] sm:$0xff] %v1256
        %1281 = vst [vmem:[#allocation5 + $0x60] sm:$0xff] %v1257
        %1282 = vst [vmem:[#allocation5 + $0x68] sm:$0xff] %v1258
        %1283 = vst [vmem:[#allocation5 + $0x70] sm:$0xff] %v1259
        %1284 = vst [vmem:[#allocation5 + $0x78] sm:$0xff] %v1260
        %1285 = vst [vmem:[#allocation5 + $0x80] sm:$0xff] %v1261
        %1286 = vst [vmem:[#allocation5 + $0x88] sm:$0xff] %v1262
        %1287 = vst [vmem:[#allocation5 + $0x90] sm:$0xff] %v1263
        %1288 = vst [vmem:[#allocation5 + $0x98] sm:$0xff] %v1264
        %1289 = vst [vmem:[#allocation5 + $0xa0] sm:$0xff] %v1265
        %1290 = vst [vmem:[#allocation5 + $0xa8] sm:$0xff] %v1266
        %1291 = vst [vmem:[#allocation5 + $0xb0] sm:$0xff] %v1267
        %1292 = vst [vmem:[#allocation5 + $0xb8] sm:$0xff] %v1268
        %v1293 = vld [vmem:[#allocation5] sm:$0xff]
        %v1294 = vld [vmem:[#allocation5 + $0x8] sm:$0xff]
        %v1295 = vld [vmem:[#allocation5 + $0x10] sm:$0xff]
        %v1296 = vld [vmem:[#allocation5 + $0x18] sm:$0xff]
        %v1297 = vld [vmem:[#allocation5 + $0x20] sm:$0xff]
        %v1298 = vld [vmem:[#allocation5 + $0x28] sm:$0xff]
        %v1299 = vld [vmem:[#allocation5 + $0x30] sm:$0xff]
        %v1300 = vld [vmem:[#allocation5 + $0x38] sm:$0xff]
        %v1301 = vld [vmem:[#allocation5 + $0x40] sm:$0xff]
        %v1302 = vld [vmem:[#allocation5 + $0x48] sm:$0xff]
        %v1303 = vld [vmem:[#allocation5 + $0x50] sm:$0xff]
        %v1304 = vld [vmem:[#allocation5 + $0x58] sm:$0xff]
        %v1305 = vld [vmem:[#allocation5 + $0x60] sm:$0xff]
        %v1306 = vld [vmem:[#allocation5 + $0x68] sm:$0xff]
        %v1307 = vld [vmem:[#allocation5 + $0x70] sm:$0xff]
        %v1308 = vld [vmem:[#allocation5 + $0x78] sm:$0xff]
        %v1309 = vld [vmem:[#allocation5 + $0x80] sm:$0xff]
        %v1310 = vld [vmem:[#allocation5 + $0x88] sm:$0xff]
        %v1311 = vld [vmem:[#allocation5 + $0x90] sm:$0xff]
        %v1312 = vld [vmem:[#allocation5 + $0x98] sm:$0xff]
        %v1313 = vld [vmem:[#allocation5 + $0xa0] sm:$0xff]
        %v1314 = vld [vmem:[#allocation5 + $0xa8] sm:$0xff]
        %v1315 = vld [vmem:[#allocation5 + $0xb0] sm:$0xff]
        %v1316 = vld [vmem:[#allocation5 + $0xb8] sm:$0xff]
        %s1317 = scalar_lea.vmem [#allocation2], 24
        %v1318 = vld [vmem:[%s1317] sm:$0xff]
        %v1319 = vld [vmem:[%s1317 + $0x8] sm:$0xff]
        %v1320 = vld [vmem:[%s1317 + $0x10] sm:$0xff]
        %v1321 = vld [vmem:[%s1317 + $0x18] sm:$0xff]
        %v1322 = vld [vmem:[%s1317 + $0x20] sm:$0xff]
        %v1323 = vld [vmem:[%s1317 + $0x28] sm:$0xff]
        %v1324 = vld [vmem:[%s1317 + $0x30] sm:$0xff]
        %v1325 = vld [vmem:[%s1317 + $0x38] sm:$0xff]
        %v1326 = vld [vmem:[%s1317 + $0x40] sm:$0xff]
        %v1327 = vld [vmem:[%s1317 + $0x48] sm:$0xff]
        %v1328 = vld [vmem:[%s1317 + $0x50] sm:$0xff]
        %v1329 = vld [vmem:[%s1317 + $0x58] sm:$0xff]
        %v1330 = vld [vmem:[%s1317 + $0x60] sm:$0xff]
        %v1331 = vld [vmem:[%s1317 + $0x68] sm:$0xff]
        %v1332 = vld [vmem:[%s1317 + $0x70] sm:$0xff]
        %v1333 = vld [vmem:[%s1317 + $0x78] sm:$0xff]
        %v1334 = vld [vmem:[%s1317 + $0x80] sm:$0xff]
        %v1335 = vld [vmem:[%s1317 + $0x88] sm:$0xff]
        %v1336 = vld [vmem:[%s1317 + $0x90] sm:$0xff]
        %v1337 = vld [vmem:[%s1317 + $0x98] sm:$0xff]
        %v1338 = vld [vmem:[%s1317 + $0xa0] sm:$0xff]
        %v1339 = vld [vmem:[%s1317 + $0xa8] sm:$0xff]
        %v1340 = vld [vmem:[%s1317 + $0xb0] sm:$0xff]
        %v1341 = vld [vmem:[%s1317 + $0xb8] sm:$0xff]
        %v1342 = vpack.c.bf16 %v1319, %v1318
        %v1343 = vpack.c.bf16 %v1321, %v1320
        %v1344 = vpack.c.bf16 %v1323, %v1322
        %v1345 = vpack.c.bf16 %v1325, %v1324
        %v1346 = vpack.c.bf16 %v1327, %v1326
        %v1347 = vpack.c.bf16 %v1329, %v1328
        %v1348 = vpack.c.bf16 %v1331, %v1330
        %v1349 = vpack.c.bf16 %v1333, %v1332
        %v1350 = vpack.c.bf16 %v1335, %v1334
        %v1351 = vpack.c.bf16 %v1337, %v1336
        %v1352 = vpack.c.bf16 %v1339, %v1338
        %v1353 = vpack.c.bf16 %v1341, %v1340
        %s1354 = scalar_lea.vmem [#allocation9], 192
        %v1355 = vld [vmem:[%s1354] sm:$0xf]
        %v1356 = vld [vmem:[%s1354 + $0x4] sm:$0xf]
        %v1357 = vld [vmem:[%s1354 + $0x8] sm:$0xf]
        %v1358 = vld [vmem:[%s1354 + $0xc] sm:$0xf]
        %v1359 = vld [vmem:[%s1354 + $0x10] sm:$0xf]
        %v1360 = vld [vmem:[%s1354 + $0x14] sm:$0xf]
        %v1361 = vld [vmem:[%s1354 + $0x18] sm:$0xf]
        %v1362 = vld [vmem:[%s1354 + $0x1c] sm:$0xf]
        %v1363 = vld [vmem:[%s1354 + $0x20] sm:$0xf]
        %v1364 = vld [vmem:[%s1354 + $0x24] sm:$0xf]
        %v1365 = vld [vmem:[%s1354 + $0x28] sm:$0xf]
        %v1366 = vld [vmem:[%s1354 + $0x2c] sm:$0xf]
        %v1367 = vld [vmem:[%s1354 + $0x30] sm:$0xf]
        %v1368 = vld [vmem:[%s1354 + $0x34] sm:$0xf]
        %v1369 = vld [vmem:[%s1354 + $0x38] sm:$0xf]
        %v1370 = vld [vmem:[%s1354 + $0x3c] sm:$0xf]
        %v1387 = vunpack.c.l.b16 %v1355
        %v1388 = vunpack.c.l.b16 %v1356
        %v1389 = vunpack.c.l.b16 %v1357
        %v1390 = vunpack.c.l.b16 %v1358
        %v1391 = vunpack.c.l.b16 %v1359
        %v1392 = vunpack.c.l.b16 %v1360
        %v1393 = vunpack.c.l.b16 %v1361
        %v1394 = vunpack.c.l.b16 %v1362
        %v1395 = vunpack.c.l.b16 %v1363
        %v1396 = vunpack.c.l.b16 %v1364
        %v1397 = vunpack.c.l.b16 %v1365
        %v1398 = vunpack.c.l.b16 %v1366
        %v1399 = vunpack.c.l.b16 %v1367
        %v1400 = vunpack.c.l.b16 %v1368
        %v1401 = vunpack.c.l.b16 %v1369
        %v1402 = vunpack.c.l.b16 %v1370
        %v1403 = vpack.c.b16 %v1388, %v1387
        %v1404 = vpack.c.b16 %v1390, %v1389
        %v1405 = vpack.c.b16 %v1392, %v1391
        %v1406 = vpack.c.b16 %v1394, %v1393
        %v1407 = vpack.c.b16 %v1396, %v1395
        %v1408 = vpack.c.b16 %v1398, %v1397
        %v1409 = vpack.c.b16 %v1400, %v1399
        %v1410 = vpack.c.b16 %v1402, %v1401
        %1419 = vmatprep.subr.bf16.mxu0 0
        %1420 = vmatpush1.bf16.msra.mxu0 %v1403
        %1421 = vmatprep.subr.bf16.mxu0 0
        %1422 = vmatpush1.bf16.msra.mxu0 %v1404
        %1423 = vmatprep.subr.bf16.mxu0 0
        %1424 = vmatpush1.bf16.msra.mxu0 %v1405
        %1425 = vmatprep.subr.bf16.mxu0 0
        %1426 = vmatpush1.bf16.msra.mxu0 %v1406
        %1427 = vmatprep.subr.bf16.mxu0 0
        %1428 = vmatpush1.bf16.msra.mxu0 %v1407
        %1429 = vmatprep.subr.bf16.mxu0 0
        %1430 = vmatpush1.bf16.msra.mxu0 %v1408
        %1431 = vmatprep.subr.bf16.mxu0 0
        %1432 = vmatpush1.bf16.msra.mxu0 %v1409
        %1433 = vmatprep.subr.bf16.mxu0 0
        %1434 = vmatpush1.bf16.msra.mxu0 %v1410
        %1435 = vmatprep.subr.bf16.mxu0 0
        %1436 = vmatpush1.bf16.msra.mxu0 0
        %1437 = vmatprep.subr.bf16.mxu0 0
        %1438 = vmatpush1.bf16.msra.mxu0 0
        %1439 = vmatprep.subr.bf16.mxu0 0
        %1440 = vmatpush1.bf16.msra.mxu0 0
        %1441 = vmatprep.subr.bf16.mxu0 0
        %1442 = vmatpush1.bf16.msra.mxu0 0
        %1443 = vmatprep.subr.bf16.mxu0 0
        %1444 = vmatpush1.bf16.msra.mxu0 0
        %1445 = vmatprep.subr.bf16.mxu0 0
        %1446 = vmatpush1.bf16.msra.mxu0 0
        %1447 = vmatprep.subr.bf16.mxu0 0
        %1448 = vmatpush1.bf16.msra.mxu0 0
        %1449 = vmatprep.subr.bf16.mxu0 0
        %1450 = vmatpush1.bf16.msra.mxu0 0
        %1451 = vmatprep.mubr.bf16.mxu0 0
        %1452 = vmatmul.mubr.bf16.gmra.mrb[0].mxu0 %v1342
        %v1453 = vpop.f32.mrb[0].mxu0
        %v1454 = vadd.f32 0.0, %v1453
        %v1455 = vpop.f32.mrb[0].mxu0
        %v1456 = vpop.f32.mrb[0].mxu0
        %v1457 = vadd.f32 0.0, %v1456
        %v1458 = vpop.f32.mrb[0].mxu0
        %1459 = vmatprep.mubr.bf16.mxu0 0
        %1460 = vmatmul.mubr.bf16.gmra.mrb[0].mxu0 %v1343
        %v1461 = vpop.f32.mrb[0].mxu0
        %v1462 = vadd.f32 0.0, %v1461
        %v1463 = vpop.f32.mrb[0].mxu0
        %v1464 = vpop.f32.mrb[0].mxu0
        %v1465 = vadd.f32 0.0, %v1464
        %v1466 = vpop.f32.mrb[0].mxu0
        %1467 = vmatprep.mubr.bf16.mxu0 0
        %1468 = vmatmul.mubr.bf16.gmra.mrb[0].mxu0 %v1344
        %v1469 = vpop.f32.mrb[0].mxu0
        %v1470 = vadd.f32 0.0, %v1469
        %v1471 = vpop.f32.mrb[0].mxu0
        %v1472 = vpop.f32.mrb[0].mxu0
        %v1473 = vadd.f32 0.0, %v1472
        %v1474 = vpop.f32.mrb[0].mxu0
        %1475 = vmatprep.mubr.bf16.mxu0 0
        %1476 = vmatmul.mubr.bf16.gmra.mrb[0].mxu0 %v1345
        %v1477 = vpop.f32.mrb[0].mxu0
        %v1478 = vadd.f32 0.0, %v1477
        %v1479 = vpop.f32.mrb[0].mxu0
        %v1480 = vpop.f32.mrb[0].mxu0
        %v1481 = vadd.f32 0.0, %v1480
        %v1482 = vpop.f32.mrb[0].mxu0
        %1483 = vmatprep.mubr.bf16.mxu0 0
        %1484 = vmatmul.mubr.bf16.gmra.mrb[0].mxu0 %v1346
        %v1485 = vpop.f32.mrb[0].mxu0
        %v1486 = vadd.f32 0.0, %v1485
        %v1487 = vpop.f32.mrb[0].mxu0
        %v1488 = vpop.f32.mrb[0].mxu0
        %v1489 = vadd.f32 0.0, %v1488
        %v1490 = vpop.f32.mrb[0].mxu0
        %1491 = vmatprep.mubr.bf16.mxu0 0
        %1492 = vmatmul.mubr.bf16.gmra.mrb[0].mxu0 %v1347
        %v1493 = vpop.f32.mrb[0].mxu0
        %v1494 = vadd.f32 0.0, %v1493
        %v1495 = vpop.f32.mrb[0].mxu0
        %v1496 = vpop.f32.mrb[0].mxu0
        %v1497 = vadd.f32 0.0, %v1496
        %v1498 = vpop.f32.mrb[0].mxu0
        %1499 = vmatprep.mubr.bf16.mxu0 0
        %1500 = vmatmul.mubr.bf16.gmra.mrb[0].mxu0 %v1348
        %v1501 = vpop.f32.mrb[0].mxu0
        %v1502 = vadd.f32 0.0, %v1501
        %v1503 = vpop.f32.mrb[0].mxu0
        %v1504 = vpop.f32.mrb[0].mxu0
        %v1505 = vadd.f32 0.0, %v1504
        %v1506 = vpop.f32.mrb[0].mxu0
        %1507 = vmatprep.mubr.bf16.mxu0 0
        %1508 = vmatmul.mubr.bf16.gmra.mrb[0].mxu0 %v1349
        %v1509 = vpop.f32.mrb[0].mxu0
        %v1510 = vadd.f32 0.0, %v1509
        %v1511 = vpop.f32.mrb[0].mxu0
        %v1512 = vpop.f32.mrb[0].mxu0
        %v1513 = vadd.f32 0.0, %v1512
        %v1514 = vpop.f32.mrb[0].mxu0
        %1515 = vmatprep.mubr.bf16.mxu0 0
        %1516 = vmatmul.mubr.bf16.gmra.mrb[0].mxu0 %v1350
        %v1517 = vpop.f32.mrb[0].mxu0
        %v1518 = vadd.f32 0.0, %v1517
        %v1519 = vpop.f32.mrb[0].mxu0
        %v1520 = vpop.f32.mrb[0].mxu0
        %v1521 = vadd.f32 0.0, %v1520
        %v1522 = vpop.f32.mrb[0].mxu0
        %1523 = vmatprep.mubr.bf16.mxu0 0
        %1524 = vmatmul.mubr.bf16.gmra.mrb[0].mxu0 %v1351
        %v1525 = vpop.f32.mrb[0].mxu0
        %v1526 = vadd.f32 0.0, %v1525
        %v1527 = vpop.f32.mrb[0].mxu0
        %v1528 = vpop.f32.mrb[0].mxu0
        %v1529 = vadd.f32 0.0, %v1528
        %v1530 = vpop.f32.mrb[0].mxu0
        %1531 = vmatprep.mubr.bf16.mxu0 0
        %1532 = vmatmul.mubr.bf16.gmra.mrb[0].mxu0 %v1352
        %v1533 = vpop.f32.mrb[0].mxu0
        %v1534 = vadd.f32 0.0, %v1533
        %v1535 = vpop.f32.mrb[0].mxu0
        %v1536 = vpop.f32.mrb[0].mxu0
        %v1537 = vadd.f32 0.0, %v1536
        %v1538 = vpop.f32.mrb[0].mxu0
        %1539 = vmatprep.mubr.bf16.mxu0 0
        %1540 = vmatmul.mubr.bf16.gmra.mrb[0].mxu0 %v1353
        %v1541 = vpop.f32.mrb[0].mxu0
        %v1542 = vadd.f32 0.0, %v1541
        %v1543 = vpop.f32.mrb[0].mxu0
        %v1544 = vpop.f32.mrb[0].mxu0
        %v1545 = vadd.f32 0.0, %v1544
        %v1546 = vpop.f32.mrb[0].mxu0
        %1547 = vdwg.mxu0
        %v1548 = vadd.f32 %v1293, %v1454
        %v1549 = vadd.f32 %v1294, %v1457
        %v1550 = vadd.f32 %v1295, %v1462
        %v1551 = vadd.f32 %v1296, %v1465
        %v1552 = vadd.f32 %v1297, %v1470
        %v1553 = vadd.f32 %v1298, %v1473
        %v1554 = vadd.f32 %v1299, %v1478
        %v1555 = vadd.f32 %v1300, %v1481
        %v1556 = vadd.f32 %v1301, %v1486
        %v1557 = vadd.f32 %v1302, %v1489
        %v1558 = vadd.f32 %v1303, %v1494
        %v1559 = vadd.f32 %v1304, %v1497
        %v1560 = vadd.f32 %v1305, %v1502
        %v1561 = vadd.f32 %v1306, %v1505
        %v1562 = vadd.f32 %v1307, %v1510
        %v1563 = vadd.f32 %v1308, %v1513
        %v1564 = vadd.f32 %v1309, %v1518
        %v1565 = vadd.f32 %v1310, %v1521
        %v1566 = vadd.f32 %v1311, %v1526
        %v1567 = vadd.f32 %v1312, %v1529
        %v1568 = vadd.f32 %v1313, %v1534
        %v1569 = vadd.f32 %v1314, %v1537
        %v1570 = vadd.f32 %v1315, %v1542
        %v1571 = vadd.f32 %v1316, %v1545
        %1572 = vst [vmem:[#allocation5] sm:$0xff] %v1548
        %1573 = vst [vmem:[#allocation5 + $0x8] sm:$0xff] %v1549
        %1574 = vst [vmem:[#allocation5 + $0x10] sm:$0xff] %v1550
        %1575 = vst [vmem:[#allocation5 + $0x18] sm:$0xff] %v1551
        %1576 = vst [vmem:[#allocation5 + $0x20] sm:$0xff] %v1552
        %1577 = vst [vmem:[#allocation5 + $0x28] sm:$0xff] %v1553
        %1578 = vst [vmem:[#allocation5 + $0x30] sm:$0xff] %v1554
        %1579 = vst [vmem:[#allocation5 + $0x38] sm:$0xff] %v1555
        %1580 = vst [vmem:[#allocation5 + $0x40] sm:$0xff] %v1556
        %1581 = vst [vmem:[#allocation5 + $0x48] sm:$0xff] %v1557
        %1582 = vst [vmem:[#allocation5 + $0x50] sm:$0xff] %v1558
        %1583 = vst [vmem:[#allocation5 + $0x58] sm:$0xff] %v1559
        %1584 = vst [vmem:[#allocation5 + $0x60] sm:$0xff] %v1560
        %1585 = vst [vmem:[#allocation5 + $0x68] sm:$0xff] %v1561
        %1586 = vst [vmem:[#allocation5 + $0x70] sm:$0xff] %v1562
        %1587 = vst [vmem:[#allocation5 + $0x78] sm:$0xff] %v1563
        %1588 = vst [vmem:[#allocation5 + $0x80] sm:$0xff] %v1564
        %1589 = vst [vmem:[#allocation5 + $0x88] sm:$0xff] %v1565
        %1590 = vst [vmem:[#allocation5 + $0x90] sm:$0xff] %v1566
        %1591 = vst [vmem:[#allocation5 + $0x98] sm:$0xff] %v1567
        %1592 = vst [vmem:[#allocation5 + $0xa0] sm:$0xff] %v1568
        %1593 = vst [vmem:[#allocation5 + $0xa8] sm:$0xff] %v1569
        %1594 = vst [vmem:[#allocation5 + $0xb0] sm:$0xff] %v1570
        %1595 = vst [vmem:[#allocation5 + $0xb8] sm:$0xff] %v1571
        %v1596 = vld [vmem:[#allocation5] sm:$0xff]
        %v1597 = vld [vmem:[#allocation5 + $0x8] sm:$0xff]
        %v1598 = vld [vmem:[#allocation5 + $0x10] sm:$0xff]
        %v1599 = vld [vmem:[#allocation5 + $0x18] sm:$0xff]
        %v1600 = vld [vmem:[#allocation5 + $0x20] sm:$0xff]
        %v1601 = vld [vmem:[#allocation5 + $0x28] sm:$0xff]
        %v1602 = vld [vmem:[#allocation5 + $0x30] sm:$0xff]
        %v1603 = vld [vmem:[#allocation5 + $0x38] sm:$0xff]
        %v1604 = vld [vmem:[#allocation5 + $0x40] sm:$0xff]
        %v1605 = vld [vmem:[#allocation5 + $0x48] sm:$0xff]
        %v1606 = vld [vmem:[#allocation5 + $0x50] sm:$0xff]
        %v1607 = vld [vmem:[#allocation5 + $0x58] sm:$0xff]
        %v1608 = vld [vmem:[#allocation5 + $0x60] sm:$0xff]
        %v1609 = vld [vmem:[#allocation5 + $0x68] sm:$0xff]
        %v1610 = vld [vmem:[#allocation5 + $0x70] sm:$0xff]
        %v1611 = vld [vmem:[#allocation5 + $0x78] sm:$0xff]
        %v1612 = vld [vmem:[#allocation5 + $0x80] sm:$0xff]
        %v1613 = vld [vmem:[#allocation5 + $0x88] sm:$0xff]
        %v1614 = vld [vmem:[#allocation5 + $0x90] sm:$0xff]
        %v1615 = vld [vmem:[#allocation5 + $0x98] sm:$0xff]
        %v1616 = vld [vmem:[#allocation5 + $0xa0] sm:$0xff]
        %v1617 = vld [vmem:[#allocation5 + $0xa8] sm:$0xff]
        %v1618 = vld [vmem:[#allocation5 + $0xb0] sm:$0xff]
        %v1619 = vld [vmem:[#allocation5 + $0xb8] sm:$0xff]
        %s1620 = scalar_lea.vmem [#allocation2], 32
        %v1621 = vld [vmem:[%s1620] sm:$0xff]
        %v1622 = vld [vmem:[%s1620 + $0x8] sm:$0xff]
        %v1623 = vld [vmem:[%s1620 + $0x10] sm:$0xff]
        %v1624 = vld [vmem:[%s1620 + $0x18] sm:$0xff]
        %v1625 = vld [vmem:[%s1620 + $0x20] sm:$0xff]
        %v1626 = vld [vmem:[%s1620 + $0x28] sm:$0xff]
        %v1627 = vld [vmem:[%s1620 + $0x30] sm:$0xff]
        %v1628 = vld [vmem:[%s1620 + $0x38] sm:$0xff]
        %v1629 = vld [vmem:[%s1620 + $0x40] sm:$0xff]
        %v1630 = vld [vmem:[%s1620 + $0x48] sm:$0xff]
        %v1631 = vld [vmem:[%s1620 + $0x50] sm:$0xff]
        %v1632 = vld [vmem:[%s1620 + $0x58] sm:$0xff]
        %v1633 = vld [vmem:[%s1620 + $0x60] sm:$0xff]
        %v1634 = vld [vmem:[%s1620 + $0x68] sm:$0xff]
        %v1635 = vld [vmem:[%s1620 + $0x70] sm:$0xff]
        %v1636 = vld [vmem:[%s1620 + $0x78] sm:$0xff]
        %v1637 = vld [vmem:[%s1620 + $0x80] sm:$0xff]
        %v1638 = vld [vmem:[%s1620 + $0x88] sm:$0xff]
        %v1639 = vld [vmem:[%s1620 + $0x90] sm:$0xff]
        %v1640 = vld [vmem:[%s1620 + $0x98] sm:$0xff]
        %v1641 = vld [vmem:[%s1620 + $0xa0] sm:$0xff]
        %v1642 = vld [vmem:[%s1620 + $0xa8] sm:$0xff]
        %v1643 = vld [vmem:[%s1620 + $0xb0] sm:$0xff]
        %v1644 = vld [vmem:[%s1620 + $0xb8] sm:$0xff]
        %v1645 = vpack.c.bf16 %v1622, %v1621
        %v1646 = vpack.c.bf16 %v1624, %v1623
        %v1647 = vpack.c.bf16 %v1626, %v1625
        %v1648 = vpack.c.bf16 %v1628, %v1627
        %v1649 = vpack.c.bf16 %v1630, %v1629
        %v1650 = vpack.c.bf16 %v1632, %v1631
        %v1651 = vpack.c.bf16 %v1634, %v1633
        %v1652 = vpack.c.bf16 %v1636, %v1635
        %v1653 = vpack.c.bf16 %v1638, %v1637
        %v1654 = vpack.c.bf16 %v1640, %v1639
        %v1655 = vpack.c.bf16 %v1642, %v1641
        %v1656 = vpack.c.bf16 %v1644, %v1643
        %s1657 = scalar_lea.vmem [#allocation9], 256
        %v1658 = vld [vmem:[%s1657] sm:$0xf]
        %v1659 = vld [vmem:[%s1657 + $0x4] sm:$0xf]
        %v1660 = vld [vmem:[%s1657 + $0x8] sm:$0xf]
        %v1661 = vld [vmem:[%s1657 + $0xc] sm:$0xf]
        %v1662 = vld [vmem:[%s1657 + $0x10] sm:$0xf]
        %v1663 = vld [vmem:[%s1657 + $0x14] sm:$0xf]
        %v1664 = vld [vmem:[%s1657 + $0x18] sm:$0xf]
        %v1665 = vld [vmem:[%s1657 + $0x1c] sm:$0xf]
        %v1666 = vld [vmem:[%s1657 + $0x20] sm:$0xf]
        %v1667 = vld [vmem:[%s1657 + $0x24] sm:$0xf]
        %v1668 = vld [vmem:[%s1657 + $0x28] sm:$0xf]
        %v1669 = vld [vmem:[%s1657 + $0x2c] sm:$0xf]
        %v1670 = vld [vmem:[%s1657 + $0x30] sm:$0xf]
        %v1671 = vld [vmem:[%s1657 + $0x34] sm:$0xf]
        %v1672 = vld [vmem:[%s1657 + $0x38] sm:$0xf]
        %v1673 = vld [vmem:[%s1657 + $0x3c] sm:$0xf]
        %v1690 = vunpack.c.l.b16 %v1658
        %v1691 = vunpack.c.l.b16 %v1659
        %v1692 = vunpack.c.l.b16 %v1660
        %v1693 = vunpack.c.l.b16 %v1661
        %v1694 = vunpack.c.l.b16 %v1662
        %v1695 = vunpack.c.l.b16 %v1663
        %v1696 = vunpack.c.l.b16 %v1664
        %v1697 = vunpack.c.l.b16 %v1665
        %v1698 = vunpack.c.l.b16 %v1666
        %v1699 = vunpack.c.l.b16 %v1667
        %v1700 = vunpack.c.l.b16 %v1668
        %v1701 = vunpack.c.l.b16 %v1669
        %v1702 = vunpack.c.l.b16 %v1670
        %v1703 = vunpack.c.l.b16 %v1671
        %v1704 = vunpack.c.l.b16 %v1672
        %v1705 = vunpack.c.l.b16 %v1673
        %v1706 = vpack.c.b16 %v1691, %v1690
        %v1707 = vpack.c.b16 %v1693, %v1692
        %v1708 = vpack.c.b16 %v1695, %v1694
        %v1709 = vpack.c.b16 %v1697, %v1696
        %v1710 = vpack.c.b16 %v1699, %v1698
        %v1711 = vpack.c.b16 %v1701, %v1700
        %v1712 = vpack.c.b16 %v1703, %v1702
        %v1713 = vpack.c.b16 %v1705, %v1704
        %1722 = vmatprep.subr.bf16.mxu0 0
        %1723 = vmatpush1.bf16.msra.mxu0 %v1706
        %1724 = vmatprep.subr.bf16.mxu0 0
        %1725 = vmatpush1.bf16.msra.mxu0 %v1707
        %1726 = vmatprep.subr.bf16.mxu0 0
        %1727 = vmatpush1.bf16.msra.mxu0 %v1708
        %1728 = vmatprep.subr.bf16.mxu0 0
        %1729 = vmatpush1.bf16.msra.mxu0 %v1709
        %1730 = vmatprep.subr.bf16.mxu0 0
        %1731 = vmatpush1.bf16.msra.mxu0 %v1710
        %1732 = vmatprep.subr.bf16.mxu0 0
        %1733 = vmatpush1.bf16.msra.mxu0 %v1711
        %1734 = vmatprep.subr.bf16.mxu0 0
        %1735 = vmatpush1.bf16.msra.mxu0 %v1712
        %1736 = vmatprep.subr.bf16.mxu0 0
        %1737 = vmatpush1.bf16.msra.mxu0 %v1713
        %1738 = vmatprep.subr.bf16.mxu0 0
        %1739 = vmatpush1.bf16.msra.mxu0 0
        %1740 = vmatprep.subr.bf16.mxu0 0
        %1741 = vmatpush1.bf16.msra.mxu0 0
        %1742 = vmatprep.subr.bf16.mxu0 0
        %1743 = vmatpush1.bf16.msra.mxu0 0
        %1744 = vmatprep.subr.bf16.mxu0 0
        %1745 = vmatpush1.bf16.msra.mxu0 0
        %1746 = vmatprep.subr.bf16.mxu0 0
        %1747 = vmatpush1.bf16.msra.mxu0 0
        %1748 = vmatprep.subr.bf16.mxu0 0
        %1749 = vmatpush1.bf16.msra.mxu0 0
        %1750 = vmatprep.subr.bf16.mxu0 0
        %1751 = vmatpush1.bf16.msra.mxu0 0
        %1752 = vmatprep.subr.bf16.mxu0 0
        %1753 = vmatpush1.bf16.msra.mxu0 0
        %1754 = vmatprep.mubr.bf16.mxu0 0
        %1755 = vmatmul.mubr.bf16.gmra.mrb[0].mxu0 %v1645
        %v1756 = vpop.f32.mrb[0].mxu0
        %v1757 = vadd.f32 0.0, %v1756
        %v1758 = vpop.f32.mrb[0].mxu0
        %v1759 = vpop.f32.mrb[0].mxu0
        %v1760 = vadd.f32 0.0, %v1759
        %v1761 = vpop.f32.mrb[0].mxu0
        %1762 = vmatprep.mubr.bf16.mxu0 0
        %1763 = vmatmul.mubr.bf16.gmra.mrb[0].mxu0 %v1646
        %v1764 = vpop.f32.mrb[0].mxu0
        %v1765 = vadd.f32 0.0, %v1764
        %v1766 = vpop.f32.mrb[0].mxu0
        %v1767 = vpop.f32.mrb[0].mxu0
        %v1768 = vadd.f32 0.0, %v1767
        %v1769 = vpop.f32.mrb[0].mxu0
        %1770 = vmatprep.mubr.bf16.mxu0 0
        %1771 = vmatmul.mubr.bf16.gmra.mrb[0].mxu0 %v1647
        %v1772 = vpop.f32.mrb[0].mxu0
        %v1773 = vadd.f32 0.0, %v1772
        %v1774 = vpop.f32.mrb[0].mxu0
        %v1775 = vpop.f32.mrb[0].mxu0
        %v1776 = vadd.f32 0.0, %v1775
        %v1777 = vpop.f32.mrb[0].mxu0
        %1778 = vmatprep.mubr.bf16.mxu0 0
        %1779 = vmatmul.mubr.bf16.gmra.mrb[0].mxu0 %v1648
        %v1780 = vpop.f32.mrb[0].mxu0
        %v1781 = vadd.f32 0.0, %v1780
        %v1782 = vpop.f32.mrb[0].mxu0
        %v1783 = vpop.f32.mrb[0].mxu0
        %v1784 = vadd.f32 0.0, %v1783
        %v1785 = vpop.f32.mrb[0].mxu0
        %1786 = vmatprep.mubr.bf16.mxu0 0
        %1787 = vmatmul.mubr.bf16.gmra.mrb[0].mxu0 %v1649
        %v1788 = vpop.f32.mrb[0].mxu0
        %v1789 = vadd.f32 0.0, %v1788
        %v1790 = vpop.f32.mrb[0].mxu0
        %v1791 = vpop.f32.mrb[0].mxu0
        %v1792 = vadd.f32 0.0, %v1791
        %v1793 = vpop.f32.mrb[0].mxu0
        %1794 = vmatprep.mubr.bf16.mxu0 0
        %1795 = vmatmul.mubr.bf16.gmra.mrb[0].mxu0 %v1650
        %v1796 = vpop.f32.mrb[0].mxu0
        %v1797 = vadd.f32 0.0, %v1796
        %v1798 = vpop.f32.mrb[0].mxu0
        %v1799 = vpop.f32.mrb[0].mxu0
        %v1800 = vadd.f32 0.0, %v1799
        %v1801 = vpop.f32.mrb[0].mxu0
        %1802 = vmatprep.mubr.bf16.mxu0 0
        %1803 = vmatmul.mubr.bf16.gmra.mrb[0].mxu0 %v1651
        %v1804 = vpop.f32.mrb[0].mxu0
        %v1805 = vadd.f32 0.0, %v1804
        %v1806 = vpop.f32.mrb[0].mxu0
        %v1807 = vpop.f32.mrb[0].mxu0
        %v1808 = vadd.f32 0.0, %v1807
        %v1809 = vpop.f32.mrb[0].mxu0
        %1810 = vmatprep.mubr.bf16.mxu0 0
        %1811 = vmatmul.mubr.bf16.gmra.mrb[0].mxu0 %v1652
        %v1812 = vpop.f32.mrb[0].mxu0
        %v1813 = vadd.f32 0.0, %v1812
        %v1814 = vpop.f32.mrb[0].mxu0
        %v1815 = vpop.f32.mrb[0].mxu0
        %v1816 = vadd.f32 0.0, %v1815
        %v1817 = vpop.f32.mrb[0].mxu0
        %1818 = vmatprep.mubr.bf16.mxu0 0
        %1819 = vmatmul.mubr.bf16.gmra.mrb[0].mxu0 %v1653
        %v1820 = vpop.f32.mrb[0].mxu0
        %v1821 = vadd.f32 0.0, %v1820
        %v1822 = vpop.f32.mrb[0].mxu0
        %v1823 = vpop.f32.mrb[0].mxu0
        %v1824 = vadd.f32 0.0, %v1823
        %v1825 = vpop.f32.mrb[0].mxu0
        %1826 = vmatprep.mubr.bf16.mxu0 0
        %1827 = vmatmul.mubr.bf16.gmra.mrb[0].mxu0 %v1654
        %v1828 = vpop.f32.mrb[0].mxu0
        %v1829 = vadd.f32 0.0, %v1828
        %v1830 = vpop.f32.mrb[0].mxu0
        %v1831 = vpop.f32.mrb[0].mxu0
        %v1832 = vadd.f32 0.0, %v1831
        %v1833 = vpop.f32.mrb[0].mxu0
        %1834 = vmatprep.mubr.bf16.mxu0 0
        %1835 = vmatmul.mubr.bf16.gmra.mrb[0].mxu0 %v1655
        %v1836 = vpop.f32.mrb[0].mxu0
        %v1837 = vadd.f32 0.0, %v1836
        %v1838 = vpop.f32.mrb[0].mxu0
        %v1839 = vpop.f32.mrb[0].mxu0
        %v1840 = vadd.f32 0.0, %v1839
        %v1841 = vpop.f32.mrb[0].mxu0
        %1842 = vmatprep.mubr.bf16.mxu0 0
        %1843 = vmatmul.mubr.bf16.gmra.mrb[0].mxu0 %v1656
        %v1844 = vpop.f32.mrb[0].mxu0
        %v1845 = vadd.f32 0.0, %v1844
        %v1846 = vpop.f32.mrb[0].mxu0
        %v1847 = vpop.f32.mrb[0].mxu0
        %v1848 = vadd.f32 0.0, %v1847
        %v1849 = vpop.f32.mrb[0].mxu0
        %1850 = vdwg.mxu0
        %v1851 = vadd.f32 %v1596, %v1757
        %v1852 = vadd.f32 %v1597, %v1760
        %v1853 = vadd.f32 %v1598, %v1765
        %v1854 = vadd.f32 %v1599, %v1768
        %v1855 = vadd.f32 %v1600, %v1773
        %v1856 = vadd.f32 %v1601, %v1776
        %v1857 = vadd.f32 %v1602, %v1781
        %v1858 = vadd.f32 %v1603, %v1784
        %v1859 = vadd.f32 %v1604, %v1789
        %v1860 = vadd.f32 %v1605, %v1792
        %v1861 = vadd.f32 %v1606, %v1797
        %v1862 = vadd.f32 %v1607, %v1800
        %v1863 = vadd.f32 %v1608, %v1805
        %v1864 = vadd.f32 %v1609, %v1808
        %v1865 = vadd.f32 %v1610, %v1813
        %v1866 = vadd.f32 %v1611, %v1816
        %v1867 = vadd.f32 %v1612, %v1821
        %v1868 = vadd.f32 %v1613, %v1824
        %v1869 = vadd.f32 %v1614, %v1829
        %v1870 = vadd.f32 %v1615, %v1832
        %v1871 = vadd.f32 %v1616, %v1837
        %v1872 = vadd.f32 %v1617, %v1840
        %v1873 = vadd.f32 %v1618, %v1845
        %v1874 = vadd.f32 %v1619, %v1848
        %1875 = vst [vmem:[#allocation5] sm:$0xff] %v1851
        %1876 = vst [vmem:[#allocation5 + $0x8] sm:$0xff] %v1852
        %1877 = vst [vmem:[#allocation5 + $0x10] sm:$0xff] %v1853
        %1878 = vst [vmem:[#allocation5 + $0x18] sm:$0xff] %v1854
        %1879 = vst [vmem:[#allocation5 + $0x20] sm:$0xff] %v1855
        %1880 = vst [vmem:[#allocation5 + $0x28] sm:$0xff] %v1856
        %1881 = vst [vmem:[#allocation5 + $0x30] sm:$0xff] %v1857
        %1882 = vst [vmem:[#allocation5 + $0x38] sm:$0xff] %v1858
        %1883 = vst [vmem:[#allocation5 + $0x40] sm:$0xff] %v1859
        %1884 = vst [vmem:[#allocation5 + $0x48] sm:$0xff] %v1860
        %1885 = vst [vmem:[#allocation5 + $0x50] sm:$0xff] %v1861
        %1886 = vst [vmem:[#allocation5 + $0x58] sm:$0xff] %v1862
        %1887 = vst [vmem:[#allocation5 + $0x60] sm:$0xff] %v1863
        %1888 = vst [vmem:[#allocation5 + $0x68] sm:$0xff] %v1864
        %1889 = vst [vmem:[#allocation5 + $0x70] sm:$0xff] %v1865
        %1890 = vst [vmem:[#allocation5 + $0x78] sm:$0xff] %v1866
        %1891 = vst [vmem:[#allocation5 + $0x80] sm:$0xff] %v1867
        %1892 = vst [vmem:[#allocation5 + $0x88] sm:$0xff] %v1868
        %1893 = vst [vmem:[#allocation5 + $0x90] sm:$0xff] %v1869
        %1894 = vst [vmem:[#allocation5 + $0x98] sm:$0xff] %v1870
        %1895 = vst [vmem:[#allocation5 + $0xa0] sm:$0xff] %v1871
        %1896 = vst [vmem:[#allocation5 + $0xa8] sm:$0xff] %v1872
        %1897 = vst [vmem:[#allocation5 + $0xb0] sm:$0xff] %v1873
        %1898 = vst [vmem:[#allocation5 + $0xb8] sm:$0xff] %v1874
        %v1899 = vld [vmem:[#allocation5] sm:$0xff]
        %v1900 = vld [vmem:[#allocation5 + $0x8] sm:$0xff]
        %v1901 = vld [vmem:[#allocation5 + $0x10] sm:$0xff]
        %v1902 = vld [vmem:[#allocation5 + $0x18] sm:$0xff]
        %v1903 = vld [vmem:[#allocation5 + $0x20] sm:$0xff]
        %v1904 = vld [vmem:[#allocation5 + $0x28] sm:$0xff]
        %v1905 = vld [vmem:[#allocation5 + $0x30] sm:$0xff]
        %v1906 = vld [vmem:[#allocation5 + $0x38] sm:$0xff]
        %v1907 = vld [vmem:[#allocation5 + $0x40] sm:$0xff]
        %v1908 = vld [vmem:[#allocation5 + $0x48] sm:$0xff]
        %v1909 = vld [vmem:[#allocation5 + $0x50] sm:$0xff]
        %v1910 = vld [vmem:[#allocation5 + $0x58] sm:$0xff]
        %v1911 = vld [vmem:[#allocation5 + $0x60] sm:$0xff]
        %v1912 = vld [vmem:[#allocation5 + $0x68] sm:$0xff]
        %v1913 = vld [vmem:[#allocation5 + $0x70] sm:$0xff]
        %v1914 = vld [vmem:[#allocation5 + $0x78] sm:$0xff]
        %v1915 = vld [vmem:[#allocation5 + $0x80] sm:$0xff]
        %v1916 = vld [vmem:[#allocation5 + $0x88] sm:$0xff]
        %v1917 = vld [vmem:[#allocation5 + $0x90] sm:$0xff]
        %v1918 = vld [vmem:[#allocation5 + $0x98] sm:$0xff]
        %v1919 = vld [vmem:[#allocation5 + $0xa0] sm:$0xff]
        %v1920 = vld [vmem:[#allocation5 + $0xa8] sm:$0xff]
        %v1921 = vld [vmem:[#allocation5 + $0xb0] sm:$0xff]
        %v1922 = vld [vmem:[#allocation5 + $0xb8] sm:$0xff]
        %s1923 = scalar_lea.vmem [#allocation2], 40
        %v1924 = vld [vmem:[%s1923] sm:$0xff]
        %v1925 = vld [vmem:[%s1923 + $0x8] sm:$0xff]
        %v1926 = vld [vmem:[%s1923 + $0x10] sm:$0xff]
        %v1927 = vld [vmem:[%s1923 + $0x18] sm:$0xff]
        %v1928 = vld [vmem:[%s1923 + $0x20] sm:$0xff]
        %v1929 = vld [vmem:[%s1923 + $0x28] sm:$0xff]
        %v1930 = vld [vmem:[%s1923 + $0x30] sm:$0xff]
        %v1931 = vld [vmem:[%s1923 + $0x38] sm:$0xff]
        %v1932 = vld [vmem:[%s1923 + $0x40] sm:$0xff]
        %v1933 = vld [vmem:[%s1923 + $0x48] sm:$0xff]
        %v1934 = vld [vmem:[%s1923 + $0x50] sm:$0xff]
        %v1935 = vld [vmem:[%s1923 + $0x58] sm:$0xff]
        %v1936 = vld [vmem:[%s1923 + $0x60] sm:$0xff]
        %v1937 = vld [vmem:[%s1923 + $0x68] sm:$0xff]
        %v1938 = vld [vmem:[%s1923 + $0x70] sm:$0xff]
        %v1939 = vld [vmem:[%s1923 + $0x78] sm:$0xff]
        %v1940 = vld [vmem:[%s1923 + $0x80] sm:$0xff]
        %v1941 = vld [vmem:[%s1923 + $0x88] sm:$0xff]
        %v1942 = vld [vmem:[%s1923 + $0x90] sm:$0xff]
        %v1943 = vld [vmem:[%s1923 + $0x98] sm:$0xff]
        %v1944 = vld [vmem:[%s1923 + $0xa0] sm:$0xff]
        %v1945 = vld [vmem:[%s1923 + $0xa8] sm:$0xff]
        %v1946 = vld [vmem:[%s1923 + $0xb0] sm:$0xff]
        %v1947 = vld [vmem:[%s1923 + $0xb8] sm:$0xff]
        %v1948 = vpack.c.bf16 %v1925, %v1924
        %v1949 = vpack.c.bf16 %v1927, %v1926
        %v1950 = vpack.c.bf16 %v1929, %v1928
        %v1951 = vpack.c.bf16 %v1931, %v1930
        %v1952 = vpack.c.bf16 %v1933, %v1932
        %v1953 = vpack.c.bf16 %v1935, %v1934
        %v1954 = vpack.c.bf16 %v1937, %v1936
        %v1955 = vpack.c.bf16 %v1939, %v1938
        %v1956 = vpack.c.bf16 %v1941, %v1940
        %v1957 = vpack.c.bf16 %v1943, %v1942
        %v1958 = vpack.c.bf16 %v1945, %v1944
        %v1959 = vpack.c.bf16 %v1947, %v1946
        %s1960 = scalar_lea.vmem [#allocation9], 320
        %v1961 = vld [vmem:[%s1960] sm:$0xf]
        %v1962 = vld [vmem:[%s1960 + $0x4] sm:$0xf]
        %v1963 = vld [vmem:[%s1960 + $0x8] sm:$0xf]
        %v1964 = vld [vmem:[%s1960 + $0xc] sm:$0xf]
        %v1965 = vld [vmem:[%s1960 + $0x10] sm:$0xf]
        %v1966 = vld [vmem:[%s1960 + $0x14] sm:$0xf]
        %v1967 = vld [vmem:[%s1960 + $0x18] sm:$0xf]
        %v1968 = vld [vmem:[%s1960 + $0x1c] sm:$0xf]
        %v1969 = vld [vmem:[%s1960 + $0x20] sm:$0xf]
        %v1970 = vld [vmem:[%s1960 + $0x24] sm:$0xf]
        %v1971 = vld [vmem:[%s1960 + $0x28] sm:$0xf]
        %v1972 = vld [vmem:[%s1960 + $0x2c] sm:$0xf]
        %v1973 = vld [vmem:[%s1960 + $0x30] sm:$0xf]
        %v1974 = vld [vmem:[%s1960 + $0x34] sm:$0xf]
        %v1975 = vld [vmem:[%s1960 + $0x38] sm:$0xf]
        %v1976 = vld [vmem:[%s1960 + $0x3c] sm:$0xf]
        %v1993 = vunpack.c.l.b16 %v1961
        %v1994 = vunpack.c.l.b16 %v1962
        %v1995 = vunpack.c.l.b16 %v1963
        %v1996 = vunpack.c.l.b16 %v1964
        %v1997 = vunpack.c.l.b16 %v1965
        %v1998 = vunpack.c.l.b16 %v1966
        %v1999 = vunpack.c.l.b16 %v1967
        %v2000 = vunpack.c.l.b16 %v1968
        %v2001 = vunpack.c.l.b16 %v1969
        %v2002 = vunpack.c.l.b16 %v1970
        %v2003 = vunpack.c.l.b16 %v1971
        %v2004 = vunpack.c.l.b16 %v1972
        %v2005 = vunpack.c.l.b16 %v1973
        %v2006 = vunpack.c.l.b16 %v1974
        %v2007 = vunpack.c.l.b16 %v1975
        %v2008 = vunpack.c.l.b16 %v1976
        %v2009 = vpack.c.b16 %v1994, %v1993
        %v2010 = vpack.c.b16 %v1996, %v1995
        %v2011 = vpack.c.b16 %v1998, %v1997
        %v2012 = vpack.c.b16 %v2000, %v1999
        %v2013 = vpack.c.b16 %v2002, %v2001
        %v2014 = vpack.c.b16 %v2004, %v2003
        %v2015 = vpack.c.b16 %v2006, %v2005
        %v2016 = vpack.c.b16 %v2008, %v2007
        %2025 = vmatprep.subr.bf16.mxu0 0
        %2026 = vmatpush1.bf16.msra.mxu0 %v2009
        %2027 = vmatprep.subr.bf16.mxu0 0
        %2028 = vmatpush1.bf16.msra.mxu0 %v2010
        %2029 = vmatprep.subr.bf16.mxu0 0
        %2030 = vmatpush1.bf16.msra.mxu0 %v2011
        %2031 = vmatprep.subr.bf16.mxu0 0
        %2032 = vmatpush1.bf16.msra.mxu0 %v2012
        %2033 = vmatprep.subr.bf16.mxu0 0
        %2034 = vmatpush1.bf16.msra.mxu0 %v2013
        %2035 = vmatprep.subr.bf16.mxu0 0
        %2036 = vmatpush1.bf16.msra.mxu0 %v2014
        %2037 = vmatprep.subr.bf16.mxu0 0
        %2038 = vmatpush1.bf16.msra.mxu0 %v2015
        %2039 = vmatprep.subr.bf16.mxu0 0
        %2040 = vmatpush1.bf16.msra.mxu0 %v2016
        %2041 = vmatprep.subr.bf16.mxu0 0
        %2042 = vmatpush1.bf16.msra.mxu0 0
        %2043 = vmatprep.subr.bf16.mxu0 0
        %2044 = vmatpush1.bf16.msra.mxu0 0
        %2045 = vmatprep.subr.bf16.mxu0 0
        %2046 = vmatpush1.bf16.msra.mxu0 0
        %2047 = vmatprep.subr.bf16.mxu0 0
        %2048 = vmatpush1.bf16.msra.mxu0 0
        %2049 = vmatprep.subr.bf16.mxu0 0
        %2050 = vmatpush1.bf16.msra.mxu0 0
        %2051 = vmatprep.subr.bf16.mxu0 0
        %2052 = vmatpush1.bf16.msra.mxu0 0
        %2053 = vmatprep.subr.bf16.mxu0 0
        %2054 = vmatpush1.bf16.msra.mxu0 0
        %2055 = vmatprep.subr.bf16.mxu0 0
        %2056 = vmatpush1.bf16.msra.mxu0 0
        %2057 = vmatprep.mubr.bf16.mxu0 0
        %2058 = vmatmul.mubr.bf16.gmra.mrb[0].mxu0 %v1948
        %v2059 = vpop.f32.mrb[0].mxu0
        %v2060 = vadd.f32 0.0, %v2059
        %v2061 = vpop.f32.mrb[0].mxu0
        %v2062 = vpop.f32.mrb[0].mxu0
        %v2063 = vadd.f32 0.0, %v2062
        %v2064 = vpop.f32.mrb[0].mxu0
        %2065 = vmatprep.mubr.bf16.mxu0 0
        %2066 = vmatmul.mubr.bf16.gmra.mrb[0].mxu0 %v1949
        %v2067 = vpop.f32.mrb[0].mxu0
        %v2068 = vadd.f32 0.0, %v2067
        %v2069 = vpop.f32.mrb[0].mxu0
        %v2070 = vpop.f32.mrb[0].mxu0
        %v2071 = vadd.f32 0.0, %v2070
        %v2072 = vpop.f32.mrb[0].mxu0
        %2073 = vmatprep.mubr.bf16.mxu0 0
        %2074 = vmatmul.mubr.bf16.gmra.mrb[0].mxu0 %v1950
        %v2075 = vpop.f32.mrb[0].mxu0
        %v2076 = vadd.f32 0.0, %v2075
        %v2077 = vpop.f32.mrb[0].mxu0
        %v2078 = vpop.f32.mrb[0].mxu0
        %v2079 = vadd.f32 0.0, %v2078
        %v2080 = vpop.f32.mrb[0].mxu0
        %2081 = vmatprep.mubr.bf16.mxu0 0
        %2082 = vmatmul.mubr.bf16.gmra.mrb[0].mxu0 %v1951
        %v2083 = vpop.f32.mrb[0].mxu0
        %v2084 = vadd.f32 0.0, %v2083
        %v2085 = vpop.f32.mrb[0].mxu0
        %v2086 = vpop.f32.mrb[0].mxu0
        %v2087 = vadd.f32 0.0, %v2086
        %v2088 = vpop.f32.mrb[0].mxu0
        %2089 = vmatprep.mubr.bf16.mxu0 0
        %2090 = vmatmul.mubr.bf16.gmra.mrb[0].mxu0 %v1952
        %v2091 = vpop.f32.mrb[0].mxu0
        %v2092 = vadd.f32 0.0, %v2091
        %v2093 = vpop.f32.mrb[0].mxu0
        %v2094 = vpop.f32.mrb[0].mxu0
        %v2095 = vadd.f32 0.0, %v2094
        %v2096 = vpop.f32.mrb[0].mxu0
        %2097 = vmatprep.mubr.bf16.mxu0 0
        %2098 = vmatmul.mubr.bf16.gmra.mrb[0].mxu0 %v1953
        %v2099 = vpop.f32.mrb[0].mxu0
        %v2100 = vadd.f32 0.0, %v2099
        %v2101 = vpop.f32.mrb[0].mxu0
        %v2102 = vpop.f32.mrb[0].mxu0
        %v2103 = vadd.f32 0.0, %v2102
        %v2104 = vpop.f32.mrb[0].mxu0
        %2105 = vmatprep.mubr.bf16.mxu0 0
        %2106 = vmatmul.mubr.bf16.gmra.mrb[0].mxu0 %v1954
        %v2107 = vpop.f32.mrb[0].mxu0
        %v2108 = vadd.f32 0.0, %v2107
        %v2109 = vpop.f32.mrb[0].mxu0
        %v2110 = vpop.f32.mrb[0].mxu0
        %v2111 = vadd.f32 0.0, %v2110
        %v2112 = vpop.f32.mrb[0].mxu0
        %2113 = vmatprep.mubr.bf16.mxu0 0
        %2114 = vmatmul.mubr.bf16.gmra.mrb[0].mxu0 %v1955
        %v2115 = vpop.f32.mrb[0].mxu0
        %v2116 = vadd.f32 0.0, %v2115
        %v2117 = vpop.f32.mrb[0].mxu0
        %v2118 = vpop.f32.mrb[0].mxu0
        %v2119 = vadd.f32 0.0, %v2118
        %v2120 = vpop.f32.mrb[0].mxu0
        %2121 = vmatprep.mubr.bf16.mxu0 0
        %2122 = vmatmul.mubr.bf16.gmra.mrb[0].mxu0 %v1956
        %v2123 = vpop.f32.mrb[0].mxu0
        %v2124 = vadd.f32 0.0, %v2123
        %v2125 = vpop.f32.mrb[0].mxu0
        %v2126 = vpop.f32.mrb[0].mxu0
        %v2127 = vadd.f32 0.0, %v2126
        %v2128 = vpop.f32.mrb[0].mxu0
        %2129 = vmatprep.mubr.bf16.mxu0 0
        %2130 = vmatmul.mubr.bf16.gmra.mrb[0].mxu0 %v1957
        %v2131 = vpop.f32.mrb[0].mxu0
        %v2132 = vadd.f32 0.0, %v2131
        %v2133 = vpop.f32.mrb[0].mxu0
        %v2134 = vpop.f32.mrb[0].mxu0
        %v2135 = vadd.f32 0.0, %v2134
        %v2136 = vpop.f32.mrb[0].mxu0
        %2137 = vmatprep.mubr.bf16.mxu0 0
        %2138 = vmatmul.mubr.bf16.gmra.mrb[0].mxu0 %v1958
        %v2139 = vpop.f32.mrb[0].mxu0
        %v2140 = vadd.f32 0.0, %v2139
        %v2141 = vpop.f32.mrb[0].mxu0
        %v2142 = vpop.f32.mrb[0].mxu0
        %v2143 = vadd.f32 0.0, %v2142
        %v2144 = vpop.f32.mrb[0].mxu0
        %2145 = vmatprep.mubr.bf16.mxu0 0
        %2146 = vmatmul.mubr.bf16.gmra.mrb[0].mxu0 %v1959
        %v2147 = vpop.f32.mrb[0].mxu0
        %v2148 = vadd.f32 0.0, %v2147
        %v2149 = vpop.f32.mrb[0].mxu0
        %v2150 = vpop.f32.mrb[0].mxu0
        %v2151 = vadd.f32 0.0, %v2150
        %v2152 = vpop.f32.mrb[0].mxu0
        %2153 = vdwg.mxu0
        %v2154 = vadd.f32 %v1899, %v2060
        %v2155 = vadd.f32 %v1900, %v2063
        %v2156 = vadd.f32 %v1901, %v2068
        %v2157 = vadd.f32 %v1902, %v2071
        %v2158 = vadd.f32 %v1903, %v2076
        %v2159 = vadd.f32 %v1904, %v2079
        %v2160 = vadd.f32 %v1905, %v2084
        %v2161 = vadd.f32 %v1906, %v2087
        %v2162 = vadd.f32 %v1907, %v2092
        %v2163 = vadd.f32 %v1908, %v2095
        %v2164 = vadd.f32 %v1909, %v2100
        %v2165 = vadd.f32 %v1910, %v2103
        %v2166 = vadd.f32 %v1911, %v2108
        %v2167 = vadd.f32 %v1912, %v2111
        %v2168 = vadd.f32 %v1913, %v2116
        %v2169 = vadd.f32 %v1914, %v2119
        %v2170 = vadd.f32 %v1915, %v2124
        %v2171 = vadd.f32 %v1916, %v2127
        %v2172 = vadd.f32 %v1917, %v2132
        %v2173 = vadd.f32 %v1918, %v2135
        %v2174 = vadd.f32 %v1919, %v2140
        %v2175 = vadd.f32 %v1920, %v2143
        %v2176 = vadd.f32 %v1921, %v2148
        %v2177 = vadd.f32 %v1922, %v2151
        %2178 = vst [vmem:[#allocation5] sm:$0xff] %v2154
        %2179 = vst [vmem:[#allocation5 + $0x8] sm:$0xff] %v2155
        %2180 = vst [vmem:[#allocation5 + $0x10] sm:$0xff] %v2156
        %2181 = vst [vmem:[#allocation5 + $0x18] sm:$0xff] %v2157
        %2182 = vst [vmem:[#allocation5 + $0x20] sm:$0xff] %v2158
        %2183 = vst [vmem:[#allocation5 + $0x28] sm:$0xff] %v2159
        %2184 = vst [vmem:[#allocation5 + $0x30] sm:$0xff] %v2160
        %2185 = vst [vmem:[#allocation5 + $0x38] sm:$0xff] %v2161
        %2186 = vst [vmem:[#allocation5 + $0x40] sm:$0xff] %v2162
        %2187 = vst [vmem:[#allocation5 + $0x48] sm:$0xff] %v2163
        %2188 = vst [vmem:[#allocation5 + $0x50] sm:$0xff] %v2164
        %2189 = vst [vmem:[#allocation5 + $0x58] sm:$0xff] %v2165
        %2190 = vst [vmem:[#allocation5 + $0x60] sm:$0xff] %v2166
        %2191 = vst [vmem:[#allocation5 + $0x68] sm:$0xff] %v2167
        %2192 = vst [vmem:[#allocation5 + $0x70] sm:$0xff] %v2168
        %2193 = vst [vmem:[#allocation5 + $0x78] sm:$0xff] %v2169
        %2194 = vst [vmem:[#allocation5 + $0x80] sm:$0xff] %v2170
        %2195 = vst [vmem:[#allocation5 + $0x88] sm:$0xff] %v2171
        %2196 = vst [vmem:[#allocation5 + $0x90] sm:$0xff] %v2172
        %2197 = vst [vmem:[#allocation5 + $0x98] sm:$0xff] %v2173
        %2198 = vst [vmem:[#allocation5 + $0xa0] sm:$0xff] %v2174
        %2199 = vst [vmem:[#allocation5 + $0xa8] sm:$0xff] %v2175
        %2200 = vst [vmem:[#allocation5 + $0xb0] sm:$0xff] %v2176
        %2201 = vst [vmem:[#allocation5 + $0xb8] sm:$0xff] %v2177
        %v2202 = vld [vmem:[#allocation5] sm:$0xff]
        %v2203 = vld [vmem:[#allocation5 + $0x8] sm:$0xff]
        %v2204 = vld [vmem:[#allocation5 + $0x10] sm:$0xff]
        %v2205 = vld [vmem:[#allocation5 + $0x18] sm:$0xff]
        %v2206 = vld [vmem:[#allocation5 + $0x20] sm:$0xff]
        %v2207 = vld [vmem:[#allocation5 + $0x28] sm:$0xff]
        %v2208 = vld [vmem:[#allocation5 + $0x30] sm:$0xff]
        %v2209 = vld [vmem:[#allocation5 + $0x38] sm:$0xff]
        %v2210 = vld [vmem:[#allocation5 + $0x40] sm:$0xff]
        %v2211 = vld [vmem:[#allocation5 + $0x48] sm:$0xff]
        %v2212 = vld [vmem:[#allocation5 + $0x50] sm:$0xff]
        %v2213 = vld [vmem:[#allocation5 + $0x58] sm:$0xff]
        %v2214 = vld [vmem:[#allocation5 + $0x60] sm:$0xff]
        %v2215 = vld [vmem:[#allocation5 + $0x68] sm:$0xff]
        %v2216 = vld [vmem:[#allocation5 + $0x70] sm:$0xff]
        %v2217 = vld [vmem:[#allocation5 + $0x78] sm:$0xff]
        %v2218 = vld [vmem:[#allocation5 + $0x80] sm:$0xff]
        %v2219 = vld [vmem:[#allocation5 + $0x88] sm:$0xff]
        %v2220 = vld [vmem:[#allocation5 + $0x90] sm:$0xff]
        %v2221 = vld [vmem:[#allocation5 + $0x98] sm:$0xff]
        %v2222 = vld [vmem:[#allocation5 + $0xa0] sm:$0xff]
        %v2223 = vld [vmem:[#allocation5 + $0xa8] sm:$0xff]
        %v2224 = vld [vmem:[#allocation5 + $0xb0] sm:$0xff]
        %v2225 = vld [vmem:[#allocation5 + $0xb8] sm:$0xff]
        %s2226 = scalar_lea.vmem [#allocation2], 48
        %v2227 = vld [vmem:[%s2226] sm:$0xff]
        %v2228 = vld [vmem:[%s2226 + $0x8] sm:$0xff]
        %v2229 = vld [vmem:[%s2226 + $0x10] sm:$0xff]
        %v2230 = vld [vmem:[%s2226 + $0x18] sm:$0xff]
        %v2231 = vld [vmem:[%s2226 + $0x20] sm:$0xff]
        %v2232 = vld [vmem:[%s2226 + $0x28] sm:$0xff]
        %v2233 = vld [vmem:[%s2226 + $0x30] sm:$0xff]
        %v2234 = vld [vmem:[%s2226 + $0x38] sm:$0xff]
        %v2235 = vld [vmem:[%s2226 + $0x40] sm:$0xff]
        %v2236 = vld [vmem:[%s2226 + $0x48] sm:$0xff]
        %v2237 = vld [vmem:[%s2226 + $0x50] sm:$0xff]
        %v2238 = vld [vmem:[%s2226 + $0x58] sm:$0xff]
        %v2239 = vld [vmem:[%s2226 + $0x60] sm:$0xff]
        %v2240 = vld [vmem:[%s2226 + $0x68] sm:$0xff]
        %v2241 = vld [vmem:[%s2226 + $0x70] sm:$0xff]
        %v2242 = vld [vmem:[%s2226 + $0x78] sm:$0xff]
        %v2243 = vld [vmem:[%s2226 + $0x80] sm:$0xff]
        %v2244 = vld [vmem:[%s2226 + $0x88] sm:$0xff]
        %v2245 = vld [vmem:[%s2226 + $0x90] sm:$0xff]
        %v2246 = vld [vmem:[%s2226 + $0x98] sm:$0xff]
        %v2247 = vld [vmem:[%s2226 + $0xa0] sm:$0xff]
        %v2248 = vld [vmem:[%s2226 + $0xa8] sm:$0xff]
        %v2249 = vld [vmem:[%s2226 + $0xb0] sm:$0xff]
        %v2250 = vld [vmem:[%s2226 + $0xb8] sm:$0xff]
        %v2251 = vpack.c.bf16 %v2228, %v2227
        %v2252 = vpack.c.bf16 %v2230, %v2229
        %v2253 = vpack.c.bf16 %v2232, %v2231
        %v2254 = vpack.c.bf16 %v2234, %v2233
        %v2255 = vpack.c.bf16 %v2236, %v2235
        %v2256 = vpack.c.bf16 %v2238, %v2237
        %v2257 = vpack.c.bf16 %v2240, %v2239
        %v2258 = vpack.c.bf16 %v2242, %v2241
        %v2259 = vpack.c.bf16 %v2244, %v2243
        %v2260 = vpack.c.bf16 %v2246, %v2245
        %v2261 = vpack.c.bf16 %v2248, %v2247
        %v2262 = vpack.c.bf16 %v2250, %v2249
        %s2263 = scalar_lea.vmem [#allocation9], 384
        %v2264 = vld [vmem:[%s2263] sm:$0xf]
        %v2265 = vld [vmem:[%s2263 + $0x4] sm:$0xf]
        %v2266 = vld [vmem:[%s2263 + $0x8] sm:$0xf]
        %v2267 = vld [vmem:[%s2263 + $0xc] sm:$0xf]
        %v2268 = vld [vmem:[%s2263 + $0x10] sm:$0xf]
        %v2269 = vld [vmem:[%s2263 + $0x14] sm:$0xf]
        %v2270 = vld [vmem:[%s2263 + $0x18] sm:$0xf]
        %v2271 = vld [vmem:[%s2263 + $0x1c] sm:$0xf]
        %v2272 = vld [vmem:[%s2263 + $0x20] sm:$0xf]
        %v2273 = vld [vmem:[%s2263 + $0x24] sm:$0xf]
        %v2274 = vld [vmem:[%s2263 + $0x28] sm:$0xf]
        %v2275 = vld [vmem:[%s2263 + $0x2c] sm:$0xf]
        %v2276 = vld [vmem:[%s2263 + $0x30] sm:$0xf]
        %v2277 = vld [vmem:[%s2263 + $0x34] sm:$0xf]
        %v2278 = vld [vmem:[%s2263 + $0x38] sm:$0xf]
        %v2279 = vld [vmem:[%s2263 + $0x3c] sm:$0xf]
        %v2296 = vunpack.c.l.b16 %v2264
        %v2297 = vunpack.c.l.b16 %v2265
        %v2298 = vunpack.c.l.b16 %v2266
        %v2299 = vunpack.c.l.b16 %v2267
        %v2300 = vunpack.c.l.b16 %v2268
        %v2301 = vunpack.c.l.b16 %v2269
        %v2302 = vunpack.c.l.b16 %v2270
        %v2303 = vunpack.c.l.b16 %v2271
        %v2304 = vunpack.c.l.b16 %v2272
        %v2305 = vunpack.c.l.b16 %v2273
        %v2306 = vunpack.c.l.b16 %v2274
        %v2307 = vunpack.c.l.b16 %v2275
        %v2308 = vunpack.c.l.b16 %v2276
        %v2309 = vunpack.c.l.b16 %v2277
        %v2310 = vunpack.c.l.b16 %v2278
        %v2311 = vunpack.c.l.b16 %v2279
        %v2312 = vpack.c.b16 %v2297, %v2296
        %v2313 = vpack.c.b16 %v2299, %v2298
        %v2314 = vpack.c.b16 %v2301, %v2300
        %v2315 = vpack.c.b16 %v2303, %v2302
        %v2316 = vpack.c.b16 %v2305, %v2304
        %v2317 = vpack.c.b16 %v2307, %v2306
        %v2318 = vpack.c.b16 %v2309, %v2308
        %v2319 = vpack.c.b16 %v2311, %v2310
        %2328 = vmatprep.subr.bf16.mxu0 0
        %2329 = vmatpush1.bf16.msra.mxu0 %v2312
        %2330 = vmatprep.subr.bf16.mxu0 0
        %2331 = vmatpush1.bf16.msra.mxu0 %v2313
        %2332 = vmatprep.subr.bf16.mxu0 0
        %2333 = vmatpush1.bf16.msra.mxu0 %v2314
        %2334 = vmatprep.subr.bf16.mxu0 0
        %2335 = vmatpush1.bf16.msra.mxu0 %v2315
        %2336 = vmatprep.subr.bf16.mxu0 0
        %2337 = vmatpush1.bf16.msra.mxu0 %v2316
        %2338 = vmatprep.subr.bf16.mxu0 0
        %2339 = vmatpush1.bf16.msra.mxu0 %v2317
        %2340 = vmatprep.subr.bf16.mxu0 0
        %2341 = vmatpush1.bf16.msra.mxu0 %v2318
        %2342 = vmatprep.subr.bf16.mxu0 0
        %2343 = vmatpush1.bf16.msra.mxu0 %v2319
        %2344 = vmatprep.subr.bf16.mxu0 0
        %2345 = vmatpush1.bf16.msra.mxu0 0
        %2346 = vmatprep.subr.bf16.mxu0 0
        %2347 = vmatpush1.bf16.msra.mxu0 0
        %2348 = vmatprep.subr.bf16.mxu0 0
        %2349 = vmatpush1.bf16.msra.mxu0 0
        %2350 = vmatprep.subr.bf16.mxu0 0
        %2351 = vmatpush1.bf16.msra.mxu0 0
        %2352 = vmatprep.subr.bf16.mxu0 0
        %2353 = vmatpush1.bf16.msra.mxu0 0
        %2354 = vmatprep.subr.bf16.mxu0 0
        %2355 = vmatpush1.bf16.msra.mxu0 0
        %2356 = vmatprep.subr.bf16.mxu0 0
        %2357 = vmatpush1.bf16.msra.mxu0 0
        %2358 = vmatprep.subr.bf16.mxu0 0
        %2359 = vmatpush1.bf16.msra.mxu0 0
        %2360 = vmatprep.mubr.bf16.mxu0 0
        %2361 = vmatmul.mubr.bf16.gmra.mrb[0].mxu0 %v2251
        %v2362 = vpop.f32.mrb[0].mxu0
        %v2363 = vadd.f32 0.0, %v2362
        %v2364 = vpop.f32.mrb[0].mxu0
        %v2365 = vpop.f32.mrb[0].mxu0
        %v2366 = vadd.f32 0.0, %v2365
        %v2367 = vpop.f32.mrb[0].mxu0
        %2368 = vmatprep.mubr.bf16.mxu0 0
        %2369 = vmatmul.mubr.bf16.gmra.mrb[0].mxu0 %v2252
        %v2370 = vpop.f32.mrb[0].mxu0
        %v2371 = vadd.f32 0.0, %v2370
        %v2372 = vpop.f32.mrb[0].mxu0
        %v2373 = vpop.f32.mrb[0].mxu0
        %v2374 = vadd.f32 0.0, %v2373
        %v2375 = vpop.f32.mrb[0].mxu0
        %2376 = vmatprep.mubr.bf16.mxu0 0
        %2377 = vmatmul.mubr.bf16.gmra.mrb[0].mxu0 %v2253
        %v2378 = vpop.f32.mrb[0].mxu0
        %v2379 = vadd.f32 0.0, %v2378
        %v2380 = vpop.f32.mrb[0].mxu0
        %v2381 = vpop.f32.mrb[0].mxu0
        %v2382 = vadd.f32 0.0, %v2381
        %v2383 = vpop.f32.mrb[0].mxu0
        %2384 = vmatprep.mubr.bf16.mxu0 0
        %2385 = vmatmul.mubr.bf16.gmra.mrb[0].mxu0 %v2254
        %v2386 = vpop.f32.mrb[0].mxu0
        %v2387 = vadd.f32 0.0, %v2386
        %v2388 = vpop.f32.mrb[0].mxu0
        %v2389 = vpop.f32.mrb[0].mxu0
        %v2390 = vadd.f32 0.0, %v2389
        %v2391 = vpop.f32.mrb[0].mxu0
        %2392 = vmatprep.mubr.bf16.mxu0 0
        %2393 = vmatmul.mubr.bf16.gmra.mrb[0].mxu0 %v2255
        %v2394 = vpop.f32.mrb[0].mxu0
        %v2395 = vadd.f32 0.0, %v2394
        %v2396 = vpop.f32.mrb[0].mxu0
        %v2397 = vpop.f32.mrb[0].mxu0
        %v2398 = vadd.f32 0.0, %v2397
        %v2399 = vpop.f32.mrb[0].mxu0
        %2400 = vmatprep.mubr.bf16.mxu0 0
        %2401 = vmatmul.mubr.bf16.gmra.mrb[0].mxu0 %v2256
        %v2402 = vpop.f32.mrb[0].mxu0
        %v2403 = vadd.f32 0.0, %v2402
        %v2404 = vpop.f32.mrb[0].mxu0
        %v2405 = vpop.f32.mrb[0].mxu0
        %v2406 = vadd.f32 0.0, %v2405
        %v2407 = vpop.f32.mrb[0].mxu0
        %2408 = vmatprep.mubr.bf16.mxu0 0
        %2409 = vmatmul.mubr.bf16.gmra.mrb[0].mxu0 %v2257
        %v2410 = vpop.f32.mrb[0].mxu0
        %v2411 = vadd.f32 0.0, %v2410
        %v2412 = vpop.f32.mrb[0].mxu0
        %v2413 = vpop.f32.mrb[0].mxu0
        %v2414 = vadd.f32 0.0, %v2413
        %v2415 = vpop.f32.mrb[0].mxu0
        %2416 = vmatprep.mubr.bf16.mxu0 0
        %2417 = vmatmul.mubr.bf16.gmra.mrb[0].mxu0 %v2258
        %v2418 = vpop.f32.mrb[0].mxu0
        %v2419 = vadd.f32 0.0, %v2418
        %v2420 = vpop.f32.mrb[0].mxu0
        %v2421 = vpop.f32.mrb[0].mxu0
        %v2422 = vadd.f32 0.0, %v2421
        %v2423 = vpop.f32.mrb[0].mxu0
        %2424 = vmatprep.mubr.bf16.mxu0 0
        %2425 = vmatmul.mubr.bf16.gmra.mrb[0].mxu0 %v2259
        %v2426 = vpop.f32.mrb[0].mxu0
        %v2427 = vadd.f32 0.0, %v2426
        %v2428 = vpop.f32.mrb[0].mxu0
        %v2429 = vpop.f32.mrb[0].mxu0
        %v2430 = vadd.f32 0.0, %v2429
        %v2431 = vpop.f32.mrb[0].mxu0
        %2432 = vmatprep.mubr.bf16.mxu0 0
        %2433 = vmatmul.mubr.bf16.gmra.mrb[0].mxu0 %v2260
        %v2434 = vpop.f32.mrb[0].mxu0
        %v2435 = vadd.f32 0.0, %v2434
        %v2436 = vpop.f32.mrb[0].mxu0
        %v2437 = vpop.f32.mrb[0].mxu0
        %v2438 = vadd.f32 0.0, %v2437
        %v2439 = vpop.f32.mrb[0].mxu0
        %2440 = vmatprep.mubr.bf16.mxu0 0
        %2441 = vmatmul.mubr.bf16.gmra.mrb[0].mxu0 %v2261
        %v2442 = vpop.f32.mrb[0].mxu0
        %v2443 = vadd.f32 0.0, %v2442
        %v2444 = vpop.f32.mrb[0].mxu0
        %v2445 = vpop.f32.mrb[0].mxu0
        %v2446 = vadd.f32 0.0, %v2445
        %v2447 = vpop.f32.mrb[0].mxu0
        %2448 = vmatprep.mubr.bf16.mxu0 0
        %2449 = vmatmul.mubr.bf16.gmra.mrb[0].mxu0 %v2262
        %v2450 = vpop.f32.mrb[0].mxu0
        %v2451 = vadd.f32 0.0, %v2450
        %v2452 = vpop.f32.mrb[0].mxu0
        %v2453 = vpop.f32.mrb[0].mxu0
        %v2454 = vadd.f32 0.0, %v2453
        %v2455 = vpop.f32.mrb[0].mxu0
        %2456 = vdwg.mxu0
        %v2457 = vadd.f32 %v2202, %v2363
        %v2458 = vadd.f32 %v2203, %v2366
        %v2459 = vadd.f32 %v2204, %v2371
        %v2460 = vadd.f32 %v2205, %v2374
        %v2461 = vadd.f32 %v2206, %v2379
        %v2462 = vadd.f32 %v2207, %v2382
        %v2463 = vadd.f32 %v2208, %v2387
        %v2464 = vadd.f32 %v2209, %v2390
        %v2465 = vadd.f32 %v2210, %v2395
        %v2466 = vadd.f32 %v2211, %v2398
        %v2467 = vadd.f32 %v2212, %v2403
        %v2468 = vadd.f32 %v2213, %v2406
        %v2469 = vadd.f32 %v2214, %v2411
        %v2470 = vadd.f32 %v2215, %v2414
        %v2471 = vadd.f32 %v2216, %v2419
        %v2472 = vadd.f32 %v2217, %v2422
        %v2473 = vadd.f32 %v2218, %v2427
        %v2474 = vadd.f32 %v2219, %v2430
        %v2475 = vadd.f32 %v2220, %v2435
        %v2476 = vadd.f32 %v2221, %v2438
        %v2477 = vadd.f32 %v2222, %v2443
        %v2478 = vadd.f32 %v2223, %v2446
        %v2479 = vadd.f32 %v2224, %v2451
        %v2480 = vadd.f32 %v2225, %v2454
        %2481 = vst [vmem:[#allocation5] sm:$0xff] %v2457
        %2482 = vst [vmem:[#allocation5 + $0x8] sm:$0xff] %v2458
        %2483 = vst [vmem:[#allocation5 + $0x10] sm:$0xff] %v2459
        %2484 = vst [vmem:[#allocation5 + $0x18] sm:$0xff] %v2460
        %2485 = vst [vmem:[#allocation5 + $0x20] sm:$0xff] %v2461
        %2486 = vst [vmem:[#allocation5 + $0x28] sm:$0xff] %v2462
        %2487 = vst [vmem:[#allocation5 + $0x30] sm:$0xff] %v2463
        %2488 = vst [vmem:[#allocation5 + $0x38] sm:$0xff] %v2464
        %2489 = vst [vmem:[#allocation5 + $0x40] sm:$0xff] %v2465
        %2490 = vst [vmem:[#allocation5 + $0x48] sm:$0xff] %v2466
        %2491 = vst [vmem:[#allocation5 + $0x50] sm:$0xff] %v2467
        %2492 = vst [vmem:[#allocation5 + $0x58] sm:$0xff] %v2468
        %2493 = vst [vmem:[#allocation5 + $0x60] sm:$0xff] %v2469
        %2494 = vst [vmem:[#allocation5 + $0x68] sm:$0xff] %v2470
        %2495 = vst [vmem:[#allocation5 + $0x70] sm:$0xff] %v2471
        %2496 = vst [vmem:[#allocation5 + $0x78] sm:$0xff] %v2472
        %2497 = vst [vmem:[#allocation5 + $0x80] sm:$0xff] %v2473
        %2498 = vst [vmem:[#allocation5 + $0x88] sm:$0xff] %v2474
        %2499 = vst [vmem:[#allocation5 + $0x90] sm:$0xff] %v2475
        %2500 = vst [vmem:[#allocation5 + $0x98] sm:$0xff] %v2476
        %2501 = vst [vmem:[#allocation5 + $0xa0] sm:$0xff] %v2477
        %2502 = vst [vmem:[#allocation5 + $0xa8] sm:$0xff] %v2478
        %2503 = vst [vmem:[#allocation5 + $0xb0] sm:$0xff] %v2479
        %2504 = vst [vmem:[#allocation5 + $0xb8] sm:$0xff] %v2480
        %v2505 = vld [vmem:[#allocation5] sm:$0xff]
        %v2506 = vld [vmem:[#allocation5 + $0x8] sm:$0xff]
        %v2507 = vld [vmem:[#allocation5 + $0x10] sm:$0xff]
        %v2508 = vld [vmem:[#allocation5 + $0x18] sm:$0xff]
        %v2509 = vld [vmem:[#allocation5 + $0x20] sm:$0xff]
        %v2510 = vld [vmem:[#allocation5 + $0x28] sm:$0xff]
        %v2511 = vld [vmem:[#allocation5 + $0x30] sm:$0xff]
        %v2512 = vld [vmem:[#allocation5 + $0x38] sm:$0xff]
        %v2513 = vld [vmem:[#allocation5 + $0x40] sm:$0xff]
        %v2514 = vld [vmem:[#allocation5 + $0x48] sm:$0xff]
        %v2515 = vld [vmem:[#allocation5 + $0x50] sm:$0xff]
        %v2516 = vld [vmem:[#allocation5 + $0x58] sm:$0xff]
        %v2517 = vld [vmem:[#allocation5 + $0x60] sm:$0xff]
        %v2518 = vld [vmem:[#allocation5 + $0x68] sm:$0xff]
        %v2519 = vld [vmem:[#allocation5 + $0x70] sm:$0xff]
        %v2520 = vld [vmem:[#allocation5 + $0x78] sm:$0xff]
        %v2521 = vld [vmem:[#allocation5 + $0x80] sm:$0xff]
        %v2522 = vld [vmem:[#allocation5 + $0x88] sm:$0xff]
        %v2523 = vld [vmem:[#allocation5 + $0x90] sm:$0xff]
        %v2524 = vld [vmem:[#allocation5 + $0x98] sm:$0xff]
        %v2525 = vld [vmem:[#allocation5 + $0xa0] sm:$0xff]
        %v2526 = vld [vmem:[#allocation5 + $0xa8] sm:$0xff]
        %v2527 = vld [vmem:[#allocation5 + $0xb0] sm:$0xff]
        %v2528 = vld [vmem:[#allocation5 + $0xb8] sm:$0xff]
        %v2529 = vld [vmem:[%s409] sm:$0xff]
        %v2530 = vld [vmem:[%s409 + $0x8] sm:$0xff]
        %v2531 = vld [vmem:[%s409 + $0x10] sm:$0xff]
        %v2532 = vld [vmem:[%s409 + $0x18] sm:$0xff]
        %v2533 = vld [vmem:[%s409 + $0x20] sm:$0xff]
        %v2534 = vld [vmem:[%s409 + $0x28] sm:$0xff]
        %v2535 = vld [vmem:[%s409 + $0x30] sm:$0xff]
        %v2536 = vld [vmem:[%s409 + $0x38] sm:$0xff]
        %v2537 = vld [vmem:[%s409 + $0x40] sm:$0xff]
        %v2538 = vld [vmem:[%s409 + $0x48] sm:$0xff]
        %v2539 = vld [vmem:[%s409 + $0x50] sm:$0xff]
        %v2540 = vld [vmem:[%s409 + $0x58] sm:$0xff]
        %v2541 = vld [vmem:[%s409 + $0x60] sm:$0xff]
        %v2542 = vld [vmem:[%s409 + $0x68] sm:$0xff]
        %v2543 = vld [vmem:[%s409 + $0x70] sm:$0xff]
        %v2544 = vld [vmem:[%s409 + $0x78] sm:$0xff]
        %v2545 = vld [vmem:[%s409 + $0x80] sm:$0xff]
        %v2546 = vld [vmem:[%s409 + $0x88] sm:$0xff]
        %v2547 = vld [vmem:[%s409 + $0x90] sm:$0xff]
        %v2548 = vld [vmem:[%s409 + $0x98] sm:$0xff]
        %v2549 = vld [vmem:[%s409 + $0xa0] sm:$0xff]
        %v2550 = vld [vmem:[%s409 + $0xa8] sm:$0xff]
        %v2551 = vld [vmem:[%s409 + $0xb0] sm:$0xff]
        %v2552 = vld [vmem:[%s409 + $0xb8] sm:$0xff]
        %v2553 = vpack.c.bf16 %v2530, %v2529
        %v2554 = vpack.c.bf16 %v2532, %v2531
        %v2555 = vpack.c.bf16 %v2534, %v2533
        %v2556 = vpack.c.bf16 %v2536, %v2535
        %v2557 = vpack.c.bf16 %v2538, %v2537
        %v2558 = vpack.c.bf16 %v2540, %v2539
        %v2559 = vpack.c.bf16 %v2542, %v2541
        %v2560 = vpack.c.bf16 %v2544, %v2543
        %v2561 = vpack.c.bf16 %v2546, %v2545
        %v2562 = vpack.c.bf16 %v2548, %v2547
        %v2563 = vpack.c.bf16 %v2550, %v2549
        %v2564 = vpack.c.bf16 %v2552, %v2551
        %s2565 = scalar_lea.vmem [#allocation9], 448
        %v2566 = vld [vmem:[%s2565] sm:$0xf]
        %v2567 = vld [vmem:[%s2565 + $0x4] sm:$0xf]
        %v2568 = vld [vmem:[%s2565 + $0x8] sm:$0xf]
        %v2569 = vld [vmem:[%s2565 + $0xc] sm:$0xf]
        %v2570 = vld [vmem:[%s2565 + $0x10] sm:$0xf]
        %v2571 = vld [vmem:[%s2565 + $0x14] sm:$0xf]
        %v2572 = vld [vmem:[%s2565 + $0x18] sm:$0xf]
        %v2573 = vld [vmem:[%s2565 + $0x1c] sm:$0xf]
        %v2574 = vld [vmem:[%s2565 + $0x20] sm:$0xf]
        %v2575 = vld [vmem:[%s2565 + $0x24] sm:$0xf]
        %v2576 = vld [vmem:[%s2565 + $0x28] sm:$0xf]
        %v2577 = vld [vmem:[%s2565 + $0x2c] sm:$0xf]
        %v2578 = vld [vmem:[%s2565 + $0x30] sm:$0xf]
        %v2579 = vld [vmem:[%s2565 + $0x34] sm:$0xf]
        %v2580 = vld [vmem:[%s2565 + $0x38] sm:$0xf]
        %v2581 = vld [vmem:[%s2565 + $0x3c] sm:$0xf]
        %v2598 = vunpack.c.l.b16 %v2566
        %v2599 = vunpack.c.l.b16 %v2567
        %v2600 = vunpack.c.l.b16 %v2568
        %v2601 = vunpack.c.l.b16 %v2569
        %v2602 = vunpack.c.l.b16 %v2570
        %v2603 = vunpack.c.l.b16 %v2571
        %v2604 = vunpack.c.l.b16 %v2572
        %v2605 = vunpack.c.l.b16 %v2573
        %v2606 = vunpack.c.l.b16 %v2574
        %v2607 = vunpack.c.l.b16 %v2575
        %v2608 = vunpack.c.l.b16 %v2576
        %v2609 = vunpack.c.l.b16 %v2577
        %v2610 = vunpack.c.l.b16 %v2578
        %v2611 = vunpack.c.l.b16 %v2579
        %v2612 = vunpack.c.l.b16 %v2580
        %v2613 = vunpack.c.l.b16 %v2581
        %v2614 = vpack.c.b16 %v2599, %v2598
        %v2615 = vpack.c.b16 %v2601, %v2600
        %v2616 = vpack.c.b16 %v2603, %v2602
        %v2617 = vpack.c.b16 %v2605, %v2604
        %v2618 = vpack.c.b16 %v2607, %v2606
        %v2619 = vpack.c.b16 %v2609, %v2608
        %v2620 = vpack.c.b16 %v2611, %v2610
        %v2621 = vpack.c.b16 %v2613, %v2612
        %2630 = vmatprep.subr.bf16.mxu0 0
        %2631 = vmatpush1.bf16.msra.mxu0 %v2614
        %2632 = vmatprep.subr.bf16.mxu0 0
        %2633 = vmatpush1.bf16.msra.mxu0 %v2615
        %2634 = vmatprep.subr.bf16.mxu0 0
        %2635 = vmatpush1.bf16.msra.mxu0 %v2616
        %2636 = vmatprep.subr.bf16.mxu0 0
        %2637 = vmatpush1.bf16.msra.mxu0 %v2617
        %2638 = vmatprep.subr.bf16.mxu0 0
        %2639 = vmatpush1.bf16.msra.mxu0 %v2618
        %2640 = vmatprep.subr.bf16.mxu0 0
        %2641 = vmatpush1.bf16.msra.mxu0 %v2619
        %2642 = vmatprep.subr.bf16.mxu0 0
        %2643 = vmatpush1.bf16.msra.mxu0 %v2620
        %2644 = vmatprep.subr.bf16.mxu0 0
        %2645 = vmatpush1.bf16.msra.mxu0 %v2621
        %2646 = vmatprep.subr.bf16.mxu0 0
        %2647 = vmatpush1.bf16.msra.mxu0 0
        %2648 = vmatprep.subr.bf16.mxu0 0
        %2649 = vmatpush1.bf16.msra.mxu0 0
        %2650 = vmatprep.subr.bf16.mxu0 0
        %2651 = vmatpush1.bf16.msra.mxu0 0
        %2652 = vmatprep.subr.bf16.mxu0 0
        %2653 = vmatpush1.bf16.msra.mxu0 0
        %2654 = vmatprep.subr.bf16.mxu0 0
        %2655 = vmatpush1.bf16.msra.mxu0 0
        %2656 = vmatprep.subr.bf16.mxu0 0
        %2657 = vmatpush1.bf16.msra.mxu0 0
        %2658 = vmatprep.subr.bf16.mxu0 0
        %2659 = vmatpush1.bf16.msra.mxu0 0
        %2660 = vmatprep.subr.bf16.mxu0 0
        %2661 = vmatpush1.bf16.msra.mxu0 0
        %2662 = vmatprep.mubr.bf16.mxu0 0
        %2663 = vmatmul.mubr.bf16.gmra.mrb[0].mxu0 %v2553
        %v2664 = vpop.f32.mrb[0].mxu0
        %v2665 = vadd.f32 0.0, %v2664
        %v2666 = vpop.f32.mrb[0].mxu0
        %v2667 = vpop.f32.mrb[0].mxu0
        %v2668 = vadd.f32 0.0, %v2667
        %v2669 = vpop.f32.mrb[0].mxu0
        %2670 = vmatprep.mubr.bf16.mxu0 0
        %2671 = vmatmul.mubr.bf16.gmra.mrb[0].mxu0 %v2554
        %v2672 = vpop.f32.mrb[0].mxu0
        %v2673 = vadd.f32 0.0, %v2672
        %v2674 = vpop.f32.mrb[0].mxu0
        %v2675 = vpop.f32.mrb[0].mxu0
        %v2676 = vadd.f32 0.0, %v2675
        %v2677 = vpop.f32.mrb[0].mxu0
        %2678 = vmatprep.mubr.bf16.mxu0 0
        %2679 = vmatmul.mubr.bf16.gmra.mrb[0].mxu0 %v2555
        %v2680 = vpop.f32.mrb[0].mxu0
        %v2681 = vadd.f32 0.0, %v2680
        %v2682 = vpop.f32.mrb[0].mxu0
        %v2683 = vpop.f32.mrb[0].mxu0
        %v2684 = vadd.f32 0.0, %v2683
        %v2685 = vpop.f32.mrb[0].mxu0
        %2686 = vmatprep.mubr.bf16.mxu0 0
        %2687 = vmatmul.mubr.bf16.gmra.mrb[0].mxu0 %v2556
        %v2688 = vpop.f32.mrb[0].mxu0
        %v2689 = vadd.f32 0.0, %v2688
        %v2690 = vpop.f32.mrb[0].mxu0
        %v2691 = vpop.f32.mrb[0].mxu0
        %v2692 = vadd.f32 0.0, %v2691
        %v2693 = vpop.f32.mrb[0].mxu0
        %2694 = vmatprep.mubr.bf16.mxu0 0
        %2695 = vmatmul.mubr.bf16.gmra.mrb[0].mxu0 %v2557
        %v2696 = vpop.f32.mrb[0].mxu0
        %v2697 = vadd.f32 0.0, %v2696
        %v2698 = vpop.f32.mrb[0].mxu0
        %v2699 = vpop.f32.mrb[0].mxu0
        %v2700 = vadd.f32 0.0, %v2699
        %v2701 = vpop.f32.mrb[0].mxu0
        %2702 = vmatprep.mubr.bf16.mxu0 0
        %2703 = vmatmul.mubr.bf16.gmra.mrb[0].mxu0 %v2558
        %v2704 = vpop.f32.mrb[0].mxu0
        %v2705 = vadd.f32 0.0, %v2704
        %v2706 = vpop.f32.mrb[0].mxu0
        %v2707 = vpop.f32.mrb[0].mxu0
        %v2708 = vadd.f32 0.0, %v2707
        %v2709 = vpop.f32.mrb[0].mxu0
        %2710 = vmatprep.mubr.bf16.mxu0 0
        %2711 = vmatmul.mubr.bf16.gmra.mrb[0].mxu0 %v2559
        %v2712 = vpop.f32.mrb[0].mxu0
        %v2713 = vadd.f32 0.0, %v2712
        %v2714 = vpop.f32.mrb[0].mxu0
        %v2715 = vpop.f32.mrb[0].mxu0
        %v2716 = vadd.f32 0.0, %v2715
        %v2717 = vpop.f32.mrb[0].mxu0
        %2718 = vmatprep.mubr.bf16.mxu0 0
        %2719 = vmatmul.mubr.bf16.gmra.mrb[0].mxu0 %v2560
        %v2720 = vpop.f32.mrb[0].mxu0
        %v2721 = vadd.f32 0.0, %v2720
        %v2722 = vpop.f32.mrb[0].mxu0
        %v2723 = vpop.f32.mrb[0].mxu0
        %v2724 = vadd.f32 0.0, %v2723
        %v2725 = vpop.f32.mrb[0].mxu0
        %2726 = vmatprep.mubr.bf16.mxu0 0
        %2727 = vmatmul.mubr.bf16.gmra.mrb[0].mxu0 %v2561
        %v2728 = vpop.f32.mrb[0].mxu0
        %v2729 = vadd.f32 0.0, %v2728
        %v2730 = vpop.f32.mrb[0].mxu0
        %v2731 = vpop.f32.mrb[0].mxu0
        %v2732 = vadd.f32 0.0, %v2731
        %v2733 = vpop.f32.mrb[0].mxu0
        %2734 = vmatprep.mubr.bf16.mxu0 0
        %2735 = vmatmul.mubr.bf16.gmra.mrb[0].mxu0 %v2562
        %v2736 = vpop.f32.mrb[0].mxu0
        %v2737 = vadd.f32 0.0, %v2736
        %v2738 = vpop.f32.mrb[0].mxu0
        %v2739 = vpop.f32.mrb[0].mxu0
        %v2740 = vadd.f32 0.0, %v2739
        %v2741 = vpop.f32.mrb[0].mxu0
        %2742 = vmatprep.mubr.bf16.mxu0 0
        %2743 = vmatmul.mubr.bf16.gmra.mrb[0].mxu0 %v2563
        %v2744 = vpop.f32.mrb[0].mxu0
        %v2745 = vadd.f32 0.0, %v2744
        %v2746 = vpop.f32.mrb[0].mxu0
        %v2747 = vpop.f32.mrb[0].mxu0
        %v2748 = vadd.f32 0.0, %v2747
        %v2749 = vpop.f32.mrb[0].mxu0
        %2750 = vmatprep.mubr.bf16.mxu0 0
        %2751 = vmatmul.mubr.bf16.gmra.mrb[0].mxu0 %v2564
        %v2752 = vpop.f32.mrb[0].mxu0
        %v2753 = vadd.f32 0.0, %v2752
        %v2754 = vpop.f32.mrb[0].mxu0
        %v2755 = vpop.f32.mrb[0].mxu0
        %v2756 = vadd.f32 0.0, %v2755
        %v2757 = vpop.f32.mrb[0].mxu0
        %2758 = vdwg.mxu0
        %v2759 = vadd.f32 %v2505, %v2665
        %v2760 = vadd.f32 %v2506, %v2668
        %v2761 = vadd.f32 %v2507, %v2673
        %v2762 = vadd.f32 %v2508, %v2676
        %v2763 = vadd.f32 %v2509, %v2681
        %v2764 = vadd.f32 %v2510, %v2684
        %v2765 = vadd.f32 %v2511, %v2689
        %v2766 = vadd.f32 %v2512, %v2692
        %v2767 = vadd.f32 %v2513, %v2697
        %v2768 = vadd.f32 %v2514, %v2700
        %v2769 = vadd.f32 %v2515, %v2705
        %v2770 = vadd.f32 %v2516, %v2708
        %v2771 = vadd.f32 %v2517, %v2713
        %v2772 = vadd.f32 %v2518, %v2716
        %v2773 = vadd.f32 %v2519, %v2721
        %v2774 = vadd.f32 %v2520, %v2724
        %v2775 = vadd.f32 %v2521, %v2729
        %v2776 = vadd.f32 %v2522, %v2732
        %v2777 = vadd.f32 %v2523, %v2737
        %v2778 = vadd.f32 %v2524, %v2740
        %v2779 = vadd.f32 %v2525, %v2745
        %v2780 = vadd.f32 %v2526, %v2748
        %v2781 = vadd.f32 %v2527, %v2753
        %v2782 = vadd.f32 %v2528, %v2756
        %2783 = vst [vmem:[#allocation5] sm:$0xff] %v2759
        %2784 = vst [vmem:[#allocation5 + $0x8] sm:$0xff] %v2760
        %2785 = vst [vmem:[#allocation5 + $0x10] sm:$0xff] %v2761
        %2786 = vst [vmem:[#allocation5 + $0x18] sm:$0xff] %v2762
        %2787 = vst [vmem:[#allocation5 + $0x20] sm:$0xff] %v2763
        %2788 = vst [vmem:[#allocation5 + $0x28] sm:$0xff] %v2764
        %2789 = vst [vmem:[#allocation5 + $0x30] sm:$0xff] %v2765
        %2790 = vst [vmem:[#allocation5 + $0x38] sm:$0xff] %v2766
        %2791 = vst [vmem:[#allocation5 + $0x40] sm:$0xff] %v2767
        %2792 = vst [vmem:[#allocation5 + $0x48] sm:$0xff] %v2768
        %2793 = vst [vmem:[#allocation5 + $0x50] sm:$0xff] %v2769
        %2794 = vst [vmem:[#allocation5 + $0x58] sm:$0xff] %v2770
        %2795 = vst [vmem:[#allocation5 + $0x60] sm:$0xff] %v2771
        %2796 = vst [vmem:[#allocation5 + $0x68] sm:$0xff] %v2772
        %2797 = vst [vmem:[#allocation5 + $0x70] sm:$0xff] %v2773
        %2798 = vst [vmem:[#allocation5 + $0x78] sm:$0xff] %v2774
        %2799 = vst [vmem:[#allocation5 + $0x80] sm:$0xff] %v2775
        %2800 = vst [vmem:[#allocation5 + $0x88] sm:$0xff] %v2776
        %2801 = vst [vmem:[#allocation5 + $0x90] sm:$0xff] %v2777
        %2802 = vst [vmem:[#allocation5 + $0x98] sm:$0xff] %v2778
        %2803 = vst [vmem:[#allocation5 + $0xa0] sm:$0xff] %v2779
        %2804 = vst [vmem:[#allocation5 + $0xa8] sm:$0xff] %v2780
        %2805 = vst [vmem:[#allocation5 + $0xb0] sm:$0xff] %v2781
        %2806 = vst [vmem:[#allocation5 + $0xb8] sm:$0xff] %v2782
        %v2807 = vld [vmem:[#allocation5] sm:$0xff]
        %v2808 = vld [vmem:[#allocation5 + $0x8] sm:$0xff]
        %v2809 = vld [vmem:[#allocation5 + $0x10] sm:$0xff]
        %v2810 = vld [vmem:[#allocation5 + $0x18] sm:$0xff]
        %v2811 = vld [vmem:[#allocation5 + $0x20] sm:$0xff]
        %v2812 = vld [vmem:[#allocation5 + $0x28] sm:$0xff]
        %v2813 = vld [vmem:[#allocation5 + $0x30] sm:$0xff]
        %v2814 = vld [vmem:[#allocation5 + $0x38] sm:$0xff]
        %v2815 = vld [vmem:[#allocation5 + $0x40] sm:$0xff]
        %v2816 = vld [vmem:[#allocation5 + $0x48] sm:$0xff]
        %v2817 = vld [vmem:[#allocation5 + $0x50] sm:$0xff]
        %v2818 = vld [vmem:[#allocation5 + $0x58] sm:$0xff]
        %v2819 = vld [vmem:[#allocation5 + $0x60] sm:$0xff]
        %v2820 = vld [vmem:[#allocation5 + $0x68] sm:$0xff]
        %v2821 = vld [vmem:[#allocation5 + $0x70] sm:$0xff]
        %v2822 = vld [vmem:[#allocation5 + $0x78] sm:$0xff]
        %v2823 = vld [vmem:[#allocation5 + $0x80] sm:$0xff]
        %v2824 = vld [vmem:[#allocation5 + $0x88] sm:$0xff]
        %v2825 = vld [vmem:[#allocation5 + $0x90] sm:$0xff]
        %v2826 = vld [vmem:[#allocation5 + $0x98] sm:$0xff]
        %v2827 = vld [vmem:[#allocation5 + $0xa0] sm:$0xff]
        %v2828 = vld [vmem:[#allocation5 + $0xa8] sm:$0xff]
        %v2829 = vld [vmem:[#allocation5 + $0xb0] sm:$0xff]
        %v2830 = vld [vmem:[#allocation5 + $0xb8] sm:$0xff]
        %v2831 = vld [vmem:[#allocation11] sm:$0x1]
        %v2833 = vlaneseq
        %v2834 = vshrl.u32 %v2833, 7
        %v2835 = vsub.s32 0, %v2834
        %v2836 = vrot.slane %v2831, %v2835
        %v2838 = vadd.f32 %v2807, %v2836
        %v2839 = vadd.f32 %v2808, %v2836
        %v2840 = vadd.f32 %v2809, %v2836
        %v2841 = vadd.f32 %v2810, %v2836
        %v2842 = vadd.f32 %v2811, %v2836
        %v2843 = vadd.f32 %v2812, %v2836
        %v2844 = vadd.f32 %v2813, %v2836
        %v2845 = vadd.f32 %v2814, %v2836
        %v2846 = vadd.f32 %v2815, %v2836
        %v2847 = vadd.f32 %v2816, %v2836
        %v2848 = vadd.f32 %v2817, %v2836
        %v2849 = vadd.f32 %v2818, %v2836
        %v2850 = vadd.f32 %v2819, %v2836
        %v2851 = vadd.f32 %v2820, %v2836
        %v2852 = vadd.f32 %v2821, %v2836
        %v2853 = vadd.f32 %v2822, %v2836
        %v2854 = vadd.f32 %v2823, %v2836
        %v2855 = vadd.f32 %v2824, %v2836
        %v2856 = vadd.f32 %v2825, %v2836
        %v2857 = vadd.f32 %v2826, %v2836
        %v2858 = vadd.f32 %v2827, %v2836
        %v2859 = vadd.f32 %v2828, %v2836
        %v2860 = vadd.f32 %v2829, %v2836
        %v2861 = vadd.f32 %v2830, %v2836
        %v2862 = vadd.f32 %v2838, %v2839
        %v2863 = vadd.f32 %v2842, %v2843
        %v2864 = vadd.f32 %v2846, %v2847
        %v2865 = vadd.f32 %v2850, %v2851
        %v2866 = vadd.f32 %v2854, %v2855
        %v2867 = vadd.f32 %v2858, %v2859
        %v2868 = vadd.f32 %v2862, %v2840
        %v2869 = vadd.f32 %v2863, %v2844
        %v2870 = vadd.f32 %v2864, %v2848
        %v2871 = vadd.f32 %v2865, %v2852
        %v2872 = vadd.f32 %v2866, %v2856
        %v2873 = vadd.f32 %v2867, %v2860
        %v2874 = vadd.f32 %v2868, %v2841
        %v2875 = vadd.f32 %v2869, %v2845
        %v2876 = vadd.f32 %v2870, %v2849
        %v2877 = vadd.f32 %v2871, %v2853
        %v2878 = vadd.f32 %v2872, %v2857
        %v2879 = vadd.f32 %v2873, %v2861
        %v2880 = vmul.f32 %v2874, 0.25
        %v2881 = vmul.f32 %v2875, 0.25
        %v2882 = vmul.f32 %v2876, 0.25
        %v2883 = vmul.f32 %v2877, 0.25
        %v2884 = vmul.f32 %v2878, 0.25
        %v2885 = vmul.f32 %v2879, 0.25
        %v2886 = vmax.f32 %v2880, 0.0
        %v2887 = vmax.f32 %v2881, 0.0
        %v2888 = vmax.f32 %v2882, 0.0
        %v2889 = vmax.f32 %v2883, 0.0
        %v2890 = vmax.f32 %v2884, 0.0
        %v2891 = vmax.f32 %v2885, 0.0
        %2892 = vst [vmem:[#allocation3] sm:$0xff] 0.0
        %2893 = vst [vmem:[#allocation3 + $0x8] sm:$0xff] 0.0
        %2894 = vst [vmem:[#allocation3 + $0x10] sm:$0xff] 0.0
        %2895 = vst [vmem:[#allocation3 + $0x18] sm:$0xff] 0.0
        %2896 = vst [vmem:[#allocation3 + $0x20] sm:$0xff] 0.0
        %2897 = vst [vmem:[#allocation3 + $0x28] sm:$0xff] 0.0
        %2898 = vst [vmem:[#allocation3 + $0x30] sm:$0xff] 0.0
        %s2899 = scalar_lea.vmem [#allocation3], 56
        %2900 = vst [vmem:[%s2899] sm:$0xff] %v2886
        %2901 = vst [vmem:[%s2899 + $0x8] sm:$0xff] %v2887
        %2902 = vst [vmem:[%s2899 + $0x10] sm:$0xff] %v2888
        %2903 = vst [vmem:[%s2899 + $0x18] sm:$0xff] %v2889
        %2904 = vst [vmem:[%s2899 + $0x20] sm:$0xff] %v2890
        %2905 = vst [vmem:[%s2899 + $0x28] sm:$0xff] %v2891
        %v2906 = vld [vmem:[#allocation3] sm:$0xff]
        %v2907 = vld [vmem:[#allocation3 + $0x8] sm:$0xff]
        %v2908 = vld [vmem:[#allocation3 + $0x10] sm:$0xff]
        %v2909 = vld [vmem:[#allocation3 + $0x18] sm:$0xff]
        %v2910 = vld [vmem:[#allocation3 + $0x20] sm:$0xff]
        %v2911 = vld [vmem:[#allocation3 + $0x28] sm:$0xff]
        %v2912 = vpack.c.bf16 %v2907, %v2906
        %v2913 = vpack.c.bf16 %v2909, %v2908
        %v2914 = vpack.c.bf16 %v2911, %v2910
        %v2915 = vld [vmem:[#allocation12] sm:$0xf]
        %v2916 = vld [vmem:[#allocation12 + $0x4] sm:$0xf]
        %v2917 = vld [vmem:[#allocation12 + $0x8] sm:$0xf]
        %v2918 = vld [vmem:[#allocation12 + $0xc] sm:$0xf]
        %v2919 = vld [vmem:[#allocation12 + $0x10] sm:$0xf]
        %v2920 = vld [vmem:[#allocation12 + $0x14] sm:$0xf]
        %v2921 = vld [vmem:[#allocation12 + $0x18] sm:$0xf]
        %v2922 = vld [vmem:[#allocation12 + $0x1c] sm:$0xf]
        %v2923 = vld [vmem:[#allocation12 + $0x20] sm:$0xf]
        %v2924 = vld [vmem:[#allocation12 + $0x24] sm:$0xf]
        %v2925 = vld [vmem:[#allocation12 + $0x28] sm:$0xf]
        %v2926 = vld [vmem:[#allocation12 + $0x2c] sm:$0xf]
        %v2927 = vld [vmem:[#allocation12 + $0x30] sm:$0xf]
        %v2928 = vld [vmem:[#allocation12 + $0x34] sm:$0xf]
        %v2929 = vld [vmem:[#allocation12 + $0x38] sm:$0xf]
        %v2930 = vld [vmem:[#allocation12 + $0x3c] sm:$0xf]
        %v2947 = vunpack.c.l.b16 %v2915
        %v2948 = vunpack.c.l.b16 %v2916
        %v2949 = vunpack.c.l.b16 %v2917
        %v2950 = vunpack.c.l.b16 %v2918
        %v2951 = vunpack.c.l.b16 %v2919
        %v2952 = vunpack.c.l.b16 %v2920
        %v2953 = vunpack.c.l.b16 %v2921
        %v2954 = vunpack.c.l.b16 %v2922
        %v2955 = vunpack.c.l.b16 %v2923
        %v2956 = vunpack.c.l.b16 %v2924
        %v2957 = vunpack.c.l.b16 %v2925
        %v2958 = vunpack.c.l.b16 %v2926
        %v2959 = vunpack.c.l.b16 %v2927
        %v2960 = vunpack.c.l.b16 %v2928
        %v2961 = vunpack.c.l.b16 %v2929
        %v2962 = vunpack.c.l.b16 %v2930
        %v2963 = vpack.c.b16 %v2948, %v2947
        %v2964 = vpack.c.b16 %v2950, %v2949
        %v2965 = vpack.c.b16 %v2952, %v2951
        %v2966 = vpack.c.b16 %v2954, %v2953
        %v2967 = vpack.c.b16 %v2956, %v2955
        %v2968 = vpack.c.b16 %v2958, %v2957
        %v2969 = vpack.c.b16 %v2960, %v2959
        %v2970 = vpack.c.b16 %v2962, %v2961
        %2979 = vmatprep.subr.bf16.mxu0 0
        %2980 = vmatpush1.bf16.msra.mxu0 %v2963
        %2981 = vmatprep.subr.bf16.mxu0 0
        %2982 = vmatpush1.bf16.msra.mxu0 %v2964
        %2983 = vmatprep.subr.bf16.mxu0 0
        %2984 = vmatpush1.bf16.msra.mxu0 %v2965
        %2985 = vmatprep.subr.bf16.mxu0 0
        %2986 = vmatpush1.bf16.msra.mxu0 %v2966
        %2987 = vmatprep.subr.bf16.mxu0 0
        %2988 = vmatpush1.bf16.msra.mxu0 %v2967
        %2989 = vmatprep.subr.bf16.mxu0 0
        %2990 = vmatpush1.bf16.msra.mxu0 %v2968
        %2991 = vmatprep.subr.bf16.mxu0 0
        %2992 = vmatpush1.bf16.msra.mxu0 %v2969
        %2993 = vmatprep.subr.bf16.mxu0 0
        %2994 = vmatpush1.bf16.msra.mxu0 %v2970
        %2995 = vmatprep.subr.bf16.mxu0 0
        %2996 = vmatpush1.bf16.msra.mxu0 0
        %2997 = vmatprep.subr.bf16.mxu0 0
        %2998 = vmatpush1.bf16.msra.mxu0 0
        %2999 = vmatprep.subr.bf16.mxu0 0
        %3000 = vmatpush1.bf16.msra.mxu0 0
        %3001 = vmatprep.subr.bf16.mxu0 0
        %3002 = vmatpush1.bf16.msra.mxu0 0
        %3003 = vmatprep.subr.bf16.mxu0 0
        %3004 = vmatpush1.bf16.msra.mxu0 0
        %3005 = vmatprep.subr.bf16.mxu0 0
        %3006 = vmatpush1.bf16.msra.mxu0 0
        %3007 = vmatprep.subr.bf16.mxu0 0
        %3008 = vmatpush1.bf16.msra.mxu0 0
        %3009 = vmatprep.subr.bf16.mxu0 0
        %3010 = vmatpush1.bf16.msra.mxu0 0
        %3011 = vmatprep.mubr.bf16.mxu0 0
        %3012 = vmatmul.mubr.bf16.gmra.mrb[0].mxu0 %v2912
        %v3013 = vpop.f32.mrb[0].mxu0
        %v3014 = vadd.f32 0.0, %v3013
        %v3015 = vpop.f32.mrb[0].mxu0
        %v3016 = vpop.f32.mrb[0].mxu0
        %v3017 = vadd.f32 0.0, %v3016
        %v3018 = vpop.f32.mrb[0].mxu0
        %3019 = vmatprep.mubr.bf16.mxu0 0
        %3020 = vmatmul.mubr.bf16.gmra.mrb[0].mxu0 %v2913
        %v3021 = vpop.f32.mrb[0].mxu0
        %v3022 = vadd.f32 0.0, %v3021
        %v3023 = vpop.f32.mrb[0].mxu0
        %v3024 = vpop.f32.mrb[0].mxu0
        %v3025 = vadd.f32 0.0, %v3024
        %v3026 = vpop.f32.mrb[0].mxu0
        %3027 = vmatprep.mubr.bf16.mxu0 0
        %3028 = vmatmul.mubr.bf16.gmra.mrb[0].mxu0 %v2914
        %v3029 = vpop.f32.mrb[0].mxu0
        %v3030 = vadd.f32 0.0, %v3029
        %v3031 = vpop.f32.mrb[0].mxu0
        %v3032 = vpop.f32.mrb[0].mxu0
        %v3033 = vadd.f32 0.0, %v3032
        %v3034 = vpop.f32.mrb[0].mxu0
        %3035 = vdwg.mxu0
        %3036 = vst [vmem:[#allocation5] sm:$0xff] %v3014
        %3037 = vst [vmem:[#allocation5 + $0x8] sm:$0xff] %v3017
        %3038 = vst [vmem:[#allocation5 + $0x10] sm:$0xff] %v3022
        %3039 = vst [vmem:[#allocation5 + $0x18] sm:$0xff] %v3025
        %3040 = vst [vmem:[#allocation5 + $0x20] sm:$0xff] %v3030
        %3041 = vst [vmem:[#allocation5 + $0x28] sm:$0xff] %v3033
        %v3042 = vld [vmem:[#allocation5] sm:$0xff]
        %v3043 = vld [vmem:[#allocation5 + $0x8] sm:$0xff]
        %v3044 = vld [vmem:[#allocation5 + $0x10] sm:$0xff]
        %v3045 = vld [vmem:[#allocation5 + $0x18] sm:$0xff]
        %v3046 = vld [vmem:[#allocation5 + $0x20] sm:$0xff]
        %v3047 = vld [vmem:[#allocation5 + $0x28] sm:$0xff]
        %s3048 = scalar_lea.vmem [#allocation3], 8
        %v3049 = vld [vmem:[%s3048] sm:$0xff]
        %v3050 = vld [vmem:[%s3048 + $0x8] sm:$0xff]
        %v3051 = vld [vmem:[%s3048 + $0x10] sm:$0xff]
        %v3052 = vld [vmem:[%s3048 + $0x18] sm:$0xff]
        %v3053 = vld [vmem:[%s3048 + $0x20] sm:$0xff]
        %v3054 = vld [vmem:[%s3048 + $0x28] sm:$0xff]
        %v3055 = vpack.c.bf16 %v3050, %v3049
        %v3056 = vpack.c.bf16 %v3052, %v3051
        %v3057 = vpack.c.bf16 %v3054, %v3053
        %s3058 = scalar_lea.vmem [#allocation12], 64
        %v3059 = vld [vmem:[%s3058] sm:$0xf]
        %v3060 = vld [vmem:[%s3058 + $0x4] sm:$0xf]
        %v3061 = vld [vmem:[%s3058 + $0x8] sm:$0xf]
        %v3062 = vld [vmem:[%s3058 + $0xc] sm:$0xf]
        %v3063 = vld [vmem:[%s3058 + $0x10] sm:$0xf]
        %v3064 = vld [vmem:[%s3058 + $0x14] sm:$0xf]
        %v3065 = vld [vmem:[%s3058 + $0x18] sm:$0xf]
        %v3066 = vld [vmem:[%s3058 + $0x1c] sm:$0xf]
        %v3067 = vld [vmem:[%s3058 + $0x20] sm:$0xf]
        %v3068 = vld [vmem:[%s3058 + $0x24] sm:$0xf]
        %v3069 = vld [vmem:[%s3058 + $0x28] sm:$0xf]
        %v3070 = vld [vmem:[%s3058 + $0x2c] sm:$0xf]
        %v3071 = vld [vmem:[%s3058 + $0x30] sm:$0xf]
        %v3072 = vld [vmem:[%s3058 + $0x34] sm:$0xf]
        %v3073 = vld [vmem:[%s3058 + $0x38] sm:$0xf]
        %v3074 = vld [vmem:[%s3058 + $0x3c] sm:$0xf]
        %v3091 = vunpack.c.l.b16 %v3059
        %v3092 = vunpack.c.l.b16 %v3060
        %v3093 = vunpack.c.l.b16 %v3061
        %v3094 = vunpack.c.l.b16 %v3062
        %v3095 = vunpack.c.l.b16 %v3063
        %v3096 = vunpack.c.l.b16 %v3064
        %v3097 = vunpack.c.l.b16 %v3065
        %v3098 = vunpack.c.l.b16 %v3066
        %v3099 = vunpack.c.l.b16 %v3067
        %v3100 = vunpack.c.l.b16 %v3068
        %v3101 = vunpack.c.l.b16 %v3069
        %v3102 = vunpack.c.l.b16 %v3070
        %v3103 = vunpack.c.l.b16 %v3071
        %v3104 = vunpack.c.l.b16 %v3072
        %v3105 = vunpack.c.l.b16 %v3073
        %v3106 = vunpack.c.l.b16 %v3074
        %v3107 = vpack.c.b16 %v3092, %v3091
        %v3108 = vpack.c.b16 %v3094, %v3093
        %v3109 = vpack.c.b16 %v3096, %v3095
        %v3110 = vpack.c.b16 %v3098, %v3097
        %v3111 = vpack.c.b16 %v3100, %v3099
        %v3112 = vpack.c.b16 %v3102, %v3101
        %v3113 = vpack.c.b16 %v3104, %v3103
        %v3114 = vpack.c.b16 %v3106, %v3105
        %3123 = vmatprep.subr.bf16.mxu0 0
        %3124 = vmatpush1.bf16.msra.mxu0 %v3107
        %3125 = vmatprep.subr.bf16.mxu0 0
        %3126 = vmatpush1.bf16.msra.mxu0 %v3108
        %3127 = vmatprep.subr.bf16.mxu0 0
        %3128 = vmatpush1.bf16.msra.mxu0 %v3109
        %3129 = vmatprep.subr.bf16.mxu0 0
        %3130 = vmatpush1.bf16.msra.mxu0 %v3110
        %3131 = vmatprep.subr.bf16.mxu0 0
        %3132 = vmatpush1.bf16.msra.mxu0 %v3111
        %3133 = vmatprep.subr.bf16.mxu0 0
        %3134 = vmatpush1.bf16.msra.mxu0 %v3112
        %3135 = vmatprep.subr.bf16.mxu0 0
        %3136 = vmatpush1.bf16.msra.mxu0 %v3113
        %3137 = vmatprep.subr.bf16.mxu0 0
        %3138 = vmatpush1.bf16.msra.mxu0 %v3114
        %3139 = vmatprep.subr.bf16.mxu0 0
        %3140 = vmatpush1.bf16.msra.mxu0 0
        %3141 = vmatprep.subr.bf16.mxu0 0
        %3142 = vmatpush1.bf16.msra.mxu0 0
        %3143 = vmatprep.subr.bf16.mxu0 0
        %3144 = vmatpush1.bf16.msra.mxu0 0
        %3145 = vmatprep.subr.bf16.mxu0 0
        %3146 = vmatpush1.bf16.msra.mxu0 0
        %3147 = vmatprep.subr.bf16.mxu0 0
        %3148 = vmatpush1.bf16.msra.mxu0 0
        %3149 = vmatprep.subr.bf16.mxu0 0
        %3150 = vmatpush1.bf16.msra.mxu0 0
        %3151 = vmatprep.subr.bf16.mxu0 0
        %3152 = vmatpush1.bf16.msra.mxu0 0
        %3153 = vmatprep.subr.bf16.mxu0 0
        %3154 = vmatpush1.bf16.msra.mxu0 0
        %3155 = vmatprep.mubr.bf16.mxu0 0
        %3156 = vmatmul.mubr.bf16.gmra.mrb[0].mxu0 %v3055
        %v3157 = vpop.f32.mrb[0].mxu0
        %v3158 = vadd.f32 0.0, %v3157
        %v3159 = vpop.f32.mrb[0].mxu0
        %v3160 = vpop.f32.mrb[0].mxu0
        %v3161 = vadd.f32 0.0, %v3160
        %v3162 = vpop.f32.mrb[0].mxu0
        %3163 = vmatprep.mubr.bf16.mxu0 0
        %3164 = vmatmul.mubr.bf16.gmra.mrb[0].mxu0 %v3056
        %v3165 = vpop.f32.mrb[0].mxu0
        %v3166 = vadd.f32 0.0, %v3165
        %v3167 = vpop.f32.mrb[0].mxu0
        %v3168 = vpop.f32.mrb[0].mxu0
        %v3169 = vadd.f32 0.0, %v3168
        %v3170 = vpop.f32.mrb[0].mxu0
        %3171 = vmatprep.mubr.bf16.mxu0 0
        %3172 = vmatmul.mubr.bf16.gmra.mrb[0].mxu0 %v3057
        %v3173 = vpop.f32.mrb[0].mxu0
        %v3174 = vadd.f32 0.0, %v3173
        %v3175 = vpop.f32.mrb[0].mxu0
        %v3176 = vpop.f32.mrb[0].mxu0
        %v3177 = vadd.f32 0.0, %v3176
        %v3178 = vpop.f32.mrb[0].mxu0
        %3179 = vdwg.mxu0
        %v3180 = vadd.f32 %v3042, %v3158
        %v3181 = vadd.f32 %v3043, %v3161
        %v3182 = vadd.f32 %v3044, %v3166
        %v3183 = vadd.f32 %v3045, %v3169
        %v3184 = vadd.f32 %v3046, %v3174
        %v3185 = vadd.f32 %v3047, %v3177
        %3186 = vst [vmem:[#allocation5] sm:$0xff] %v3180
        %3187 = vst [vmem:[#allocation5 + $0x8] sm:$0xff] %v3181
        %3188 = vst [vmem:[#allocation5 + $0x10] sm:$0xff] %v3182
        %3189 = vst [vmem:[#allocation5 + $0x18] sm:$0xff] %v3183
        %3190 = vst [vmem:[#allocation5 + $0x20] sm:$0xff] %v3184
        %3191 = vst [vmem:[#allocation5 + $0x28] sm:$0xff] %v3185
        %v3192 = vld [vmem:[#allocation5] sm:$0xff]
        %v3193 = vld [vmem:[#allocation5 + $0x8] sm:$0xff]
        %v3194 = vld [vmem:[#allocation5 + $0x10] sm:$0xff]
        %v3195 = vld [vmem:[#allocation5 + $0x18] sm:$0xff]
        %v3196 = vld [vmem:[#allocation5 + $0x20] sm:$0xff]
        %v3197 = vld [vmem:[#allocation5 + $0x28] sm:$0xff]
        %s3198 = scalar_lea.vmem [#allocation3], 16
        %v3199 = vld [vmem:[%s3198] sm:$0xff]
        %v3200 = vld [vmem:[%s3198 + $0x8] sm:$0xff]
        %v3201 = vld [vmem:[%s3198 + $0x10] sm:$0xff]
        %v3202 = vld [vmem:[%s3198 + $0x18] sm:$0xff]
        %v3203 = vld [vmem:[%s3198 + $0x20] sm:$0xff]
        %v3204 = vld [vmem:[%s3198 + $0x28] sm:$0xff]
        %v3205 = vpack.c.bf16 %v3200, %v3199
        %v3206 = vpack.c.bf16 %v3202, %v3201
        %v3207 = vpack.c.bf16 %v3204, %v3203
        %s3208 = scalar_lea.vmem [#allocation12], 128
        %v3209 = vld [vmem:[%s3208] sm:$0xf]
        %v3210 = vld [vmem:[%s3208 + $0x4] sm:$0xf]
        %v3211 = vld [vmem:[%s3208 + $0x8] sm:$0xf]
        %v3212 = vld [vmem:[%s3208 + $0xc] sm:$0xf]
        %v3213 = vld [vmem:[%s3208 + $0x10] sm:$0xf]
        %v3214 = vld [vmem:[%s3208 + $0x14] sm:$0xf]
        %v3215 = vld [vmem:[%s3208 + $0x18] sm:$0xf]
        %v3216 = vld [vmem:[%s3208 + $0x1c] sm:$0xf]
        %v3217 = vld [vmem:[%s3208 + $0x20] sm:$0xf]
        %v3218 = vld [vmem:[%s3208 + $0x24] sm:$0xf]
        %v3219 = vld [vmem:[%s3208 + $0x28] sm:$0xf]
        %v3220 = vld [vmem:[%s3208 + $0x2c] sm:$0xf]
        %v3221 = vld [vmem:[%s3208 + $0x30] sm:$0xf]
        %v3222 = vld [vmem:[%s3208 + $0x34] sm:$0xf]
        %v3223 = vld [vmem:[%s3208 + $0x38] sm:$0xf]
        %v3224 = vld [vmem:[%s3208 + $0x3c] sm:$0xf]
        %v3241 = vunpack.c.l.b16 %v3209
        %v3242 = vunpack.c.l.b16 %v3210
        %v3243 = vunpack.c.l.b16 %v3211
        %v3244 = vunpack.c.l.b16 %v3212
        %v3245 = vunpack.c.l.b16 %v3213
        %v3246 = vunpack.c.l.b16 %v3214
        %v3247 = vunpack.c.l.b16 %v3215
        %v3248 = vunpack.c.l.b16 %v3216
        %v3249 = vunpack.c.l.b16 %v3217
        %v3250 = vunpack.c.l.b16 %v3218
        %v3251 = vunpack.c.l.b16 %v3219
        %v3252 = vunpack.c.l.b16 %v3220
        %v3253 = vunpack.c.l.b16 %v3221
        %v3254 = vunpack.c.l.b16 %v3222
        %v3255 = vunpack.c.l.b16 %v3223
        %v3256 = vunpack.c.l.b16 %v3224
        %v3257 = vpack.c.b16 %v3242, %v3241
        %v3258 = vpack.c.b16 %v3244, %v3243
        %v3259 = vpack.c.b16 %v3246, %v3245
        %v3260 = vpack.c.b16 %v3248, %v3247
        %v3261 = vpack.c.b16 %v3250, %v3249
        %v3262 = vpack.c.b16 %v3252, %v3251
        %v3263 = vpack.c.b16 %v3254, %v3253
        %v3264 = vpack.c.b16 %v3256, %v3255
        %3273 = vmatprep.subr.bf16.mxu0 0
        %3274 = vmatpush1.bf16.msra.mxu0 %v3257
        %3275 = vmatprep.subr.bf16.mxu0 0
        %3276 = vmatpush1.bf16.msra.mxu0 %v3258
        %3277 = vmatprep.subr.bf16.mxu0 0
        %3278 = vmatpush1.bf16.msra.mxu0 %v3259
        %3279 = vmatprep.subr.bf16.mxu0 0
        %3280 = vmatpush1.bf16.msra.mxu0 %v3260
        %3281 = vmatprep.subr.bf16.mxu0 0
        %3282 = vmatpush1.bf16.msra.mxu0 %v3261
        %3283 = vmatprep.subr.bf16.mxu0 0
        %3284 = vmatpush1.bf16.msra.mxu0 %v3262
        %3285 = vmatprep.subr.bf16.mxu0 0
        %3286 = vmatpush1.bf16.msra.mxu0 %v3263
        %3287 = vmatprep.subr.bf16.mxu0 0
        %3288 = vmatpush1.bf16.msra.mxu0 %v3264
        %3289 = vmatprep.subr.bf16.mxu0 0
        %3290 = vmatpush1.bf16.msra.mxu0 0
        %3291 = vmatprep.subr.bf16.mxu0 0
        %3292 = vmatpush1.bf16.msra.mxu0 0
        %3293 = vmatprep.subr.bf16.mxu0 0
        %3294 = vmatpush1.bf16.msra.mxu0 0
        %3295 = vmatprep.subr.bf16.mxu0 0
        %3296 = vmatpush1.bf16.msra.mxu0 0
        %3297 = vmatprep.subr.bf16.mxu0 0
        %3298 = vmatpush1.bf16.msra.mxu0 0
        %3299 = vmatprep.subr.bf16.mxu0 0
        %3300 = vmatpush1.bf16.msra.mxu0 0
        %3301 = vmatprep.subr.bf16.mxu0 0
        %3302 = vmatpush1.bf16.msra.mxu0 0
        %3303 = vmatprep.subr.bf16.mxu0 0
        %3304 = vmatpush1.bf16.msra.mxu0 0
        %3305 = vmatprep.mubr.bf16.mxu0 0
        %3306 = vmatmul.mubr.bf16.gmra.mrb[0].mxu0 %v3205
        %v3307 = vpop.f32.mrb[0].mxu0
        %v3308 = vadd.f32 0.0, %v3307
        %v3309 = vpop.f32.mrb[0].mxu0
        %v3310 = vpop.f32.mrb[0].mxu0
        %v3311 = vadd.f32 0.0, %v3310
        %v3312 = vpop.f32.mrb[0].mxu0
        %3313 = vmatprep.mubr.bf16.mxu0 0
        %3314 = vmatmul.mubr.bf16.gmra.mrb[0].mxu0 %v3206
        %v3315 = vpop.f32.mrb[0].mxu0
        %v3316 = vadd.f32 0.0, %v3315
        %v3317 = vpop.f32.mrb[0].mxu0
        %v3318 = vpop.f32.mrb[0].mxu0
        %v3319 = vadd.f32 0.0, %v3318
        %v3320 = vpop.f32.mrb[0].mxu0
        %3321 = vmatprep.mubr.bf16.mxu0 0
        %3322 = vmatmul.mubr.bf16.gmra.mrb[0].mxu0 %v3207
        %v3323 = vpop.f32.mrb[0].mxu0
        %v3324 = vadd.f32 0.0, %v3323
        %v3325 = vpop.f32.mrb[0].mxu0
        %v3326 = vpop.f32.mrb[0].mxu0
        %v3327 = vadd.f32 0.0, %v3326
        %v3328 = vpop.f32.mrb[0].mxu0
        %3329 = vdwg.mxu0
        %v3330 = vadd.f32 %v3192, %v3308
        %v3331 = vadd.f32 %v3193, %v3311
        %v3332 = vadd.f32 %v3194, %v3316
        %v3333 = vadd.f32 %v3195, %v3319
        %v3334 = vadd.f32 %v3196, %v3324
        %v3335 = vadd.f32 %v3197, %v3327
        %3336 = vst [vmem:[#allocation5] sm:$0xff] %v3330
        %3337 = vst [vmem:[#allocation5 + $0x8] sm:$0xff] %v3331
        %3338 = vst [vmem:[#allocation5 + $0x10] sm:$0xff] %v3332
        %3339 = vst [vmem:[#allocation5 + $0x18] sm:$0xff] %v3333
        %3340 = vst [vmem:[#allocation5 + $0x20] sm:$0xff] %v3334
        %3341 = vst [vmem:[#allocation5 + $0x28] sm:$0xff] %v3335
        %v3342 = vld [vmem:[#allocation5] sm:$0xff]
        %v3343 = vld [vmem:[#allocation5 + $0x8] sm:$0xff]
        %v3344 = vld [vmem:[#allocation5 + $0x10] sm:$0xff]
        %v3345 = vld [vmem:[#allocation5 + $0x18] sm:$0xff]
        %v3346 = vld [vmem:[#allocation5 + $0x20] sm:$0xff]
        %v3347 = vld [vmem:[#allocation5 + $0x28] sm:$0xff]
        %s3348 = scalar_lea.vmem [#allocation3], 24
        %v3349 = vld [vmem:[%s3348] sm:$0xff]
        %v3350 = vld [vmem:[%s3348 + $0x8] sm:$0xff]
        %v3351 = vld [vmem:[%s3348 + $0x10] sm:$0xff]
        %v3352 = vld [vmem:[%s3348 + $0x18] sm:$0xff]
        %v3353 = vld [vmem:[%s3348 + $0x20] sm:$0xff]
        %v3354 = vld [vmem:[%s3348 + $0x28] sm:$0xff]
        %v3355 = vpack.c.bf16 %v3350, %v3349
        %v3356 = vpack.c.bf16 %v3352, %v3351
        %v3357 = vpack.c.bf16 %v3354, %v3353
        %s3358 = scalar_lea.vmem [#allocation12], 192
        %v3359 = vld [vmem:[%s3358] sm:$0xf]
        %v3360 = vld [vmem:[%s3358 + $0x4] sm:$0xf]
        %v3361 = vld [vmem:[%s3358 + $0x8] sm:$0xf]
        %v3362 = vld [vmem:[%s3358 + $0xc] sm:$0xf]
        %v3363 = vld [vmem:[%s3358 + $0x10] sm:$0xf]
        %v3364 = vld [vmem:[%s3358 + $0x14] sm:$0xf]
        %v3365 = vld [vmem:[%s3358 + $0x18] sm:$0xf]
        %v3366 = vld [vmem:[%s3358 + $0x1c] sm:$0xf]
        %v3367 = vld [vmem:[%s3358 + $0x20] sm:$0xf]
        %v3368 = vld [vmem:[%s3358 + $0x24] sm:$0xf]
        %v3369 = vld [vmem:[%s3358 + $0x28] sm:$0xf]
        %v3370 = vld [vmem:[%s3358 + $0x2c] sm:$0xf]
        %v3371 = vld [vmem:[%s3358 + $0x30] sm:$0xf]
        %v3372 = vld [vmem:[%s3358 + $0x34] sm:$0xf]
        %v3373 = vld [vmem:[%s3358 + $0x38] sm:$0xf]
        %v3374 = vld [vmem:[%s3358 + $0x3c] sm:$0xf]
        %v3391 = vunpack.c.l.b16 %v3359
        %v3392 = vunpack.c.l.b16 %v3360
        %v3393 = vunpack.c.l.b16 %v3361
        %v3394 = vunpack.c.l.b16 %v3362
        %v3395 = vunpack.c.l.b16 %v3363
        %v3396 = vunpack.c.l.b16 %v3364
        %v3397 = vunpack.c.l.b16 %v3365
        %v3398 = vunpack.c.l.b16 %v3366
        %v3399 = vunpack.c.l.b16 %v3367
        %v3400 = vunpack.c.l.b16 %v3368
        %v3401 = vunpack.c.l.b16 %v3369
        %v3402 = vunpack.c.l.b16 %v3370
        %v3403 = vunpack.c.l.b16 %v3371
        %v3404 = vunpack.c.l.b16 %v3372
        %v3405 = vunpack.c.l.b16 %v3373
        %v3406 = vunpack.c.l.b16 %v3374
        %v3407 = vpack.c.b16 %v3392, %v3391
        %v3408 = vpack.c.b16 %v3394, %v3393
        %v3409 = vpack.c.b16 %v3396, %v3395
        %v3410 = vpack.c.b16 %v3398, %v3397
        %v3411 = vpack.c.b16 %v3400, %v3399
        %v3412 = vpack.c.b16 %v3402, %v3401
        %v3413 = vpack.c.b16 %v3404, %v3403
        %v3414 = vpack.c.b16 %v3406, %v3405
        %3423 = vmatprep.subr.bf16.mxu0 0
        %3424 = vmatpush1.bf16.msra.mxu0 %v3407
        %3425 = vmatprep.subr.bf16.mxu0 0
        %3426 = vmatpush1.bf16.msra.mxu0 %v3408
        %3427 = vmatprep.subr.bf16.mxu0 0
        %3428 = vmatpush1.bf16.msra.mxu0 %v3409
        %3429 = vmatprep.subr.bf16.mxu0 0
        %3430 = vmatpush1.bf16.msra.mxu0 %v3410
        %3431 = vmatprep.subr.bf16.mxu0 0
        %3432 = vmatpush1.bf16.msra.mxu0 %v3411
        %3433 = vmatprep.subr.bf16.mxu0 0
        %3434 = vmatpush1.bf16.msra.mxu0 %v3412
        %3435 = vmatprep.subr.bf16.mxu0 0
        %3436 = vmatpush1.bf16.msra.mxu0 %v3413
        %3437 = vmatprep.subr.bf16.mxu0 0
        %3438 = vmatpush1.bf16.msra.mxu0 %v3414
        %3439 = vmatprep.subr.bf16.mxu0 0
        %3440 = vmatpush1.bf16.msra.mxu0 0
        %3441 = vmatprep.subr.bf16.mxu0 0
        %3442 = vmatpush1.bf16.msra.mxu0 0
        %3443 = vmatprep.subr.bf16.mxu0 0
        %3444 = vmatpush1.bf16.msra.mxu0 0
        %3445 = vmatprep.subr.bf16.mxu0 0
        %3446 = vmatpush1.bf16.msra.mxu0 0
        %3447 = vmatprep.subr.bf16.mxu0 0
        %3448 = vmatpush1.bf16.msra.mxu0 0
        %3449 = vmatprep.subr.bf16.mxu0 0
        %3450 = vmatpush1.bf16.msra.mxu0 0
        %3451 = vmatprep.subr.bf16.mxu0 0
        %3452 = vmatpush1.bf16.msra.mxu0 0
        %3453 = vmatprep.subr.bf16.mxu0 0
        %3454 = vmatpush1.bf16.msra.mxu0 0
        %3455 = vmatprep.mubr.bf16.mxu0 0
        %3456 = vmatmul.mubr.bf16.gmra.mrb[0].mxu0 %v3355
        %v3457 = vpop.f32.mrb[0].mxu0
        %v3458 = vadd.f32 0.0, %v3457
        %v3459 = vpop.f32.mrb[0].mxu0
        %v3460 = vpop.f32.mrb[0].mxu0
        %v3461 = vadd.f32 0.0, %v3460
        %v3462 = vpop.f32.mrb[0].mxu0
        %3463 = vmatprep.mubr.bf16.mxu0 0
        %3464 = vmatmul.mubr.bf16.gmra.mrb[0].mxu0 %v3356
        %v3465 = vpop.f32.mrb[0].mxu0
        %v3466 = vadd.f32 0.0, %v3465
        %v3467 = vpop.f32.mrb[0].mxu0
        %v3468 = vpop.f32.mrb[0].mxu0
        %v3469 = vadd.f32 0.0, %v3468
        %v3470 = vpop.f32.mrb[0].mxu0
        %3471 = vmatprep.mubr.bf16.mxu0 0
        %3472 = vmatmul.mubr.bf16.gmra.mrb[0].mxu0 %v3357
        %v3473 = vpop.f32.mrb[0].mxu0
        %v3474 = vadd.f32 0.0, %v3473
        %v3475 = vpop.f32.mrb[0].mxu0
        %v3476 = vpop.f32.mrb[0].mxu0
        %v3477 = vadd.f32 0.0, %v3476
        %v3478 = vpop.f32.mrb[0].mxu0
        %3479 = vdwg.mxu0
        %v3480 = vadd.f32 %v3342, %v3458
        %v3481 = vadd.f32 %v3343, %v3461
        %v3482 = vadd.f32 %v3344, %v3466
        %v3483 = vadd.f32 %v3345, %v3469
        %v3484 = vadd.f32 %v3346, %v3474
        %v3485 = vadd.f32 %v3347, %v3477
        %3486 = vst [vmem:[#allocation5] sm:$0xff] %v3480
        %3487 = vst [vmem:[#allocation5 + $0x8] sm:$0xff] %v3481
        %3488 = vst [vmem:[#allocation5 + $0x10] sm:$0xff] %v3482
        %3489 = vst [vmem:[#allocation5 + $0x18] sm:$0xff] %v3483
        %3490 = vst [vmem:[#allocation5 + $0x20] sm:$0xff] %v3484
        %3491 = vst [vmem:[#allocation5 + $0x28] sm:$0xff] %v3485
        %v3492 = vld [vmem:[#allocation5] sm:$0xff]
        %v3493 = vld [vmem:[#allocation5 + $0x8] sm:$0xff]
        %v3494 = vld [vmem:[#allocation5 + $0x10] sm:$0xff]
        %v3495 = vld [vmem:[#allocation5 + $0x18] sm:$0xff]
        %v3496 = vld [vmem:[#allocation5 + $0x20] sm:$0xff]
        %v3497 = vld [vmem:[#allocation5 + $0x28] sm:$0xff]
        %s3498 = scalar_lea.vmem [#allocation3], 32
        %v3499 = vld [vmem:[%s3498] sm:$0xff]
        %v3500 = vld [vmem:[%s3498 + $0x8] sm:$0xff]
        %v3501 = vld [vmem:[%s3498 + $0x10] sm:$0xff]
        %v3502 = vld [vmem:[%s3498 + $0x18] sm:$0xff]
        %v3503 = vld [vmem:[%s3498 + $0x20] sm:$0xff]
        %v3504 = vld [vmem:[%s3498 + $0x28] sm:$0xff]
        %v3505 = vpack.c.bf16 %v3500, %v3499
        %v3506 = vpack.c.bf16 %v3502, %v3501
        %v3507 = vpack.c.bf16 %v3504, %v3503
        %s3508 = scalar_lea.vmem [#allocation12], 256
        %v3509 = vld [vmem:[%s3508] sm:$0xf]
        %v3510 = vld [vmem:[%s3508 + $0x4] sm:$0xf]
        %v3511 = vld [vmem:[%s3508 + $0x8] sm:$0xf]
        %v3512 = vld [vmem:[%s3508 + $0xc] sm:$0xf]
        %v3513 = vld [vmem:[%s3508 + $0x10] sm:$0xf]
        %v3514 = vld [vmem:[%s3508 + $0x14] sm:$0xf]
        %v3515 = vld [vmem:[%s3508 + $0x18] sm:$0xf]
        %v3516 = vld [vmem:[%s3508 + $0x1c] sm:$0xf]
        %v3517 = vld [vmem:[%s3508 + $0x20] sm:$0xf]
        %v3518 = vld [vmem:[%s3508 + $0x24] sm:$0xf]
        %v3519 = vld [vmem:[%s3508 + $0x28] sm:$0xf]
        %v3520 = vld [vmem:[%s3508 + $0x2c] sm:$0xf]
        %v3521 = vld [vmem:[%s3508 + $0x30] sm:$0xf]
        %v3522 = vld [vmem:[%s3508 + $0x34] sm:$0xf]
        %v3523 = vld [vmem:[%s3508 + $0x38] sm:$0xf]
        %v3524 = vld [vmem:[%s3508 + $0x3c] sm:$0xf]
        %v3541 = vunpack.c.l.b16 %v3509
        %v3542 = vunpack.c.l.b16 %v3510
        %v3543 = vunpack.c.l.b16 %v3511
        %v3544 = vunpack.c.l.b16 %v3512
        %v3545 = vunpack.c.l.b16 %v3513
        %v3546 = vunpack.c.l.b16 %v3514
        %v3547 = vunpack.c.l.b16 %v3515
        %v3548 = vunpack.c.l.b16 %v3516
        %v3549 = vunpack.c.l.b16 %v3517
        %v3550 = vunpack.c.l.b16 %v3518
        %v3551 = vunpack.c.l.b16 %v3519
        %v3552 = vunpack.c.l.b16 %v3520
        %v3553 = vunpack.c.l.b16 %v3521
        %v3554 = vunpack.c.l.b16 %v3522
        %v3555 = vunpack.c.l.b16 %v3523
        %v3556 = vunpack.c.l.b16 %v3524
        %v3557 = vpack.c.b16 %v3542, %v3541
        %v3558 = vpack.c.b16 %v3544, %v3543
        %v3559 = vpack.c.b16 %v3546, %v3545
        %v3560 = vpack.c.b16 %v3548, %v3547
        %v3561 = vpack.c.b16 %v3550, %v3549
        %v3562 = vpack.c.b16 %v3552, %v3551
        %v3563 = vpack.c.b16 %v3554, %v3553
        %v3564 = vpack.c.b16 %v3556, %v3555
        %3573 = vmatprep.subr.bf16.mxu0 0
        %3574 = vmatpush1.bf16.msra.mxu0 %v3557
        %3575 = vmatprep.subr.bf16.mxu0 0
        %3576 = vmatpush1.bf16.msra.mxu0 %v3558
        %3577 = vmatprep.subr.bf16.mxu0 0
        %3578 = vmatpush1.bf16.msra.mxu0 %v3559
        %3579 = vmatprep.subr.bf16.mxu0 0
        %3580 = vmatpush1.bf16.msra.mxu0 %v3560
        %3581 = vmatprep.subr.bf16.mxu0 0
        %3582 = vmatpush1.bf16.msra.mxu0 %v3561
        %3583 = vmatprep.subr.bf16.mxu0 0
        %3584 = vmatpush1.bf16.msra.mxu0 %v3562
        %3585 = vmatprep.subr.bf16.mxu0 0
        %3586 = vmatpush1.bf16.msra.mxu0 %v3563
        %3587 = vmatprep.subr.bf16.mxu0 0
        %3588 = vmatpush1.bf16.msra.mxu0 %v3564
        %3589 = vmatprep.subr.bf16.mxu0 0
        %3590 = vmatpush1.bf16.msra.mxu0 0
        %3591 = vmatprep.subr.bf16.mxu0 0
        %3592 = vmatpush1.bf16.msra.mxu0 0
        %3593 = vmatprep.subr.bf16.mxu0 0
        %3594 = vmatpush1.bf16.msra.mxu0 0
        %3595 = vmatprep.subr.bf16.mxu0 0
        %3596 = vmatpush1.bf16.msra.mxu0 0
        %3597 = vmatprep.subr.bf16.mxu0 0
        %3598 = vmatpush1.bf16.msra.mxu0 0
        %3599 = vmatprep.subr.bf16.mxu0 0
        %3600 = vmatpush1.bf16.msra.mxu0 0
        %3601 = vmatprep.subr.bf16.mxu0 0
        %3602 = vmatpush1.bf16.msra.mxu0 0
        %3603 = vmatprep.subr.bf16.mxu0 0
        %3604 = vmatpush1.bf16.msra.mxu0 0
        %3605 = vmatprep.mubr.bf16.mxu0 0
        %3606 = vmatmul.mubr.bf16.gmra.mrb[0].mxu0 %v3505
        %v3607 = vpop.f32.mrb[0].mxu0
        %v3608 = vadd.f32 0.0, %v3607
        %v3609 = vpop.f32.mrb[0].mxu0
        %v3610 = vpop.f32.mrb[0].mxu0
        %v3611 = vadd.f32 0.0, %v3610
        %v3612 = vpop.f32.mrb[0].mxu0
        %3613 = vmatprep.mubr.bf16.mxu0 0
        %3614 = vmatmul.mubr.bf16.gmra.mrb[0].mxu0 %v3506
        %v3615 = vpop.f32.mrb[0].mxu0
        %v3616 = vadd.f32 0.0, %v3615
        %v3617 = vpop.f32.mrb[0].mxu0
        %v3618 = vpop.f32.mrb[0].mxu0
        %v3619 = vadd.f32 0.0, %v3618
        %v3620 = vpop.f32.mrb[0].mxu0
        %3621 = vmatprep.mubr.bf16.mxu0 0
        %3622 = vmatmul.mubr.bf16.gmra.mrb[0].mxu0 %v3507
        %v3623 = vpop.f32.mrb[0].mxu0
        %v3624 = vadd.f32 0.0, %v3623
        %v3625 = vpop.f32.mrb[0].mxu0
        %v3626 = vpop.f32.mrb[0].mxu0
        %v3627 = vadd.f32 0.0, %v3626
        %v3628 = vpop.f32.mrb[0].mxu0
        %3629 = vdwg.mxu0
        %v3630 = vadd.f32 %v3492, %v3608
        %v3631 = vadd.f32 %v3493, %v3611
        %v3632 = vadd.f32 %v3494, %v3616
        %v3633 = vadd.f32 %v3495, %v3619
        %v3634 = vadd.f32 %v3496, %v3624
        %v3635 = vadd.f32 %v3497, %v3627
        %3636 = vst [vmem:[#allocation5] sm:$0xff] %v3630
        %3637 = vst [vmem:[#allocation5 + $0x8] sm:$0xff] %v3631
        %3638 = vst [vmem:[#allocation5 + $0x10] sm:$0xff] %v3632
        %3639 = vst [vmem:[#allocation5 + $0x18] sm:$0xff] %v3633
        %3640 = vst [vmem:[#allocation5 + $0x20] sm:$0xff] %v3634
        %3641 = vst [vmem:[#allocation5 + $0x28] sm:$0xff] %v3635
        %v3642 = vld [vmem:[#allocation5] sm:$0xff]
        %v3643 = vld [vmem:[#allocation5 + $0x8] sm:$0xff]
        %v3644 = vld [vmem:[#allocation5 + $0x10] sm:$0xff]
        %v3645 = vld [vmem:[#allocation5 + $0x18] sm:$0xff]
        %v3646 = vld [vmem:[#allocation5 + $0x20] sm:$0xff]
        %v3647 = vld [vmem:[#allocation5 + $0x28] sm:$0xff]
        %s3648 = scalar_lea.vmem [#allocation3], 40
        %v3649 = vld [vmem:[%s3648] sm:$0xff]
        %v3650 = vld [vmem:[%s3648 + $0x8] sm:$0xff]
        %v3651 = vld [vmem:[%s3648 + $0x10] sm:$0xff]
        %v3652 = vld [vmem:[%s3648 + $0x18] sm:$0xff]
        %v3653 = vld [vmem:[%s3648 + $0x20] sm:$0xff]
        %v3654 = vld [vmem:[%s3648 + $0x28] sm:$0xff]
        %v3655 = vpack.c.bf16 %v3650, %v3649
        %v3656 = vpack.c.bf16 %v3652, %v3651
        %v3657 = vpack.c.bf16 %v3654, %v3653
        %s3658 = scalar_lea.vmem [#allocation12], 320
        %v3659 = vld [vmem:[%s3658] sm:$0xf]
        %v3660 = vld [vmem:[%s3658 + $0x4] sm:$0xf]
        %v3661 = vld [vmem:[%s3658 + $0x8] sm:$0xf]
        %v3662 = vld [vmem:[%s3658 + $0xc] sm:$0xf]
        %v3663 = vld [vmem:[%s3658 + $0x10] sm:$0xf]
        %v3664 = vld [vmem:[%s3658 + $0x14] sm:$0xf]
        %v3665 = vld [vmem:[%s3658 + $0x18] sm:$0xf]
        %v3666 = vld [vmem:[%s3658 + $0x1c] sm:$0xf]
        %v3667 = vld [vmem:[%s3658 + $0x20] sm:$0xf]
        %v3668 = vld [vmem:[%s3658 + $0x24] sm:$0xf]
        %v3669 = vld [vmem:[%s3658 + $0x28] sm:$0xf]
        %v3670 = vld [vmem:[%s3658 + $0x2c] sm:$0xf]
        %v3671 = vld [vmem:[%s3658 + $0x30] sm:$0xf]
        %v3672 = vld [vmem:[%s3658 + $0x34] sm:$0xf]
        %v3673 = vld [vmem:[%s3658 + $0x38] sm:$0xf]
        %v3674 = vld [vmem:[%s3658 + $0x3c] sm:$0xf]
        %v3691 = vunpack.c.l.b16 %v3659
        %v3692 = vunpack.c.l.b16 %v3660
        %v3693 = vunpack.c.l.b16 %v3661
        %v3694 = vunpack.c.l.b16 %v3662
        %v3695 = vunpack.c.l.b16 %v3663
        %v3696 = vunpack.c.l.b16 %v3664
        %v3697 = vunpack.c.l.b16 %v3665
        %v3698 = vunpack.c.l.b16 %v3666
        %v3699 = vunpack.c.l.b16 %v3667
        %v3700 = vunpack.c.l.b16 %v3668
        %v3701 = vunpack.c.l.b16 %v3669
        %v3702 = vunpack.c.l.b16 %v3670
        %v3703 = vunpack.c.l.b16 %v3671
        %v3704 = vunpack.c.l.b16 %v3672
        %v3705 = vunpack.c.l.b16 %v3673
        %v3706 = vunpack.c.l.b16 %v3674
        %v3707 = vpack.c.b16 %v3692, %v3691
        %v3708 = vpack.c.b16 %v3694, %v3693
        %v3709 = vpack.c.b16 %v3696, %v3695
        %v3710 = vpack.c.b16 %v3698, %v3697
        %v3711 = vpack.c.b16 %v3700, %v3699
        %v3712 = vpack.c.b16 %v3702, %v3701
        %v3713 = vpack.c.b16 %v3704, %v3703
        %v3714 = vpack.c.b16 %v3706, %v3705
        %3723 = vmatprep.subr.bf16.mxu0 0
        %3724 = vmatpush1.bf16.msra.mxu0 %v3707
        %3725 = vmatprep.subr.bf16.mxu0 0
        %3726 = vmatpush1.bf16.msra.mxu0 %v3708
        %3727 = vmatprep.subr.bf16.mxu0 0
        %3728 = vmatpush1.bf16.msra.mxu0 %v3709
        %3729 = vmatprep.subr.bf16.mxu0 0
        %3730 = vmatpush1.bf16.msra.mxu0 %v3710
        %3731 = vmatprep.subr.bf16.mxu0 0
        %3732 = vmatpush1.bf16.msra.mxu0 %v3711
        %3733 = vmatprep.subr.bf16.mxu0 0
        %3734 = vmatpush1.bf16.msra.mxu0 %v3712
        %3735 = vmatprep.subr.bf16.mxu0 0
        %3736 = vmatpush1.bf16.msra.mxu0 %v3713
        %3737 = vmatprep.subr.bf16.mxu0 0
        %3738 = vmatpush1.bf16.msra.mxu0 %v3714
        %3739 = vmatprep.subr.bf16.mxu0 0
        %3740 = vmatpush1.bf16.msra.mxu0 0
        %3741 = vmatprep.subr.bf16.mxu0 0
        %3742 = vmatpush1.bf16.msra.mxu0 0
        %3743 = vmatprep.subr.bf16.mxu0 0
        %3744 = vmatpush1.bf16.msra.mxu0 0
        %3745 = vmatprep.subr.bf16.mxu0 0
        %3746 = vmatpush1.bf16.msra.mxu0 0
        %3747 = vmatprep.subr.bf16.mxu0 0
        %3748 = vmatpush1.bf16.msra.mxu0 0
        %3749 = vmatprep.subr.bf16.mxu0 0
        %3750 = vmatpush1.bf16.msra.mxu0 0
        %3751 = vmatprep.subr.bf16.mxu0 0
        %3752 = vmatpush1.bf16.msra.mxu0 0
        %3753 = vmatprep.subr.bf16.mxu0 0
        %3754 = vmatpush1.bf16.msra.mxu0 0
        %3755 = vmatprep.mubr.bf16.mxu0 0
        %3756 = vmatmul.mubr.bf16.gmra.mrb[0].mxu0 %v3655
        %v3757 = vpop.f32.mrb[0].mxu0
        %v3758 = vadd.f32 0.0, %v3757
        %v3759 = vpop.f32.mrb[0].mxu0
        %v3760 = vpop.f32.mrb[0].mxu0
        %v3761 = vadd.f32 0.0, %v3760
        %v3762 = vpop.f32.mrb[0].mxu0
        %3763 = vmatprep.mubr.bf16.mxu0 0
        %3764 = vmatmul.mubr.bf16.gmra.mrb[0].mxu0 %v3656
        %v3765 = vpop.f32.mrb[0].mxu0
        %v3766 = vadd.f32 0.0, %v3765
        %v3767 = vpop.f32.mrb[0].mxu0
        %v3768 = vpop.f32.mrb[0].mxu0
        %v3769 = vadd.f32 0.0, %v3768
        %v3770 = vpop.f32.mrb[0].mxu0
        %3771 = vmatprep.mubr.bf16.mxu0 0
        %3772 = vmatmul.mubr.bf16.gmra.mrb[0].mxu0 %v3657
        %v3773 = vpop.f32.mrb[0].mxu0
        %v3774 = vadd.f32 0.0, %v3773
        %v3775 = vpop.f32.mrb[0].mxu0
        %v3776 = vpop.f32.mrb[0].mxu0
        %v3777 = vadd.f32 0.0, %v3776
        %v3778 = vpop.f32.mrb[0].mxu0
        %3779 = vdwg.mxu0
        %v3780 = vadd.f32 %v3642, %v3758
        %v3781 = vadd.f32 %v3643, %v3761
        %v3782 = vadd.f32 %v3644, %v3766
        %v3783 = vadd.f32 %v3645, %v3769
        %v3784 = vadd.f32 %v3646, %v3774
        %v3785 = vadd.f32 %v3647, %v3777
        %3786 = vst [vmem:[#allocation5] sm:$0xff] %v3780
        %3787 = vst [vmem:[#allocation5 + $0x8] sm:$0xff] %v3781
        %3788 = vst [vmem:[#allocation5 + $0x10] sm:$0xff] %v3782
        %3789 = vst [vmem:[#allocation5 + $0x18] sm:$0xff] %v3783
        %3790 = vst [vmem:[#allocation5 + $0x20] sm:$0xff] %v3784
        %3791 = vst [vmem:[#allocation5 + $0x28] sm:$0xff] %v3785
        %v3792 = vld [vmem:[#allocation5] sm:$0xff]
        %v3793 = vld [vmem:[#allocation5 + $0x8] sm:$0xff]
        %v3794 = vld [vmem:[#allocation5 + $0x10] sm:$0xff]
        %v3795 = vld [vmem:[#allocation5 + $0x18] sm:$0xff]
        %v3796 = vld [vmem:[#allocation5 + $0x20] sm:$0xff]
        %v3797 = vld [vmem:[#allocation5 + $0x28] sm:$0xff]
        %s3798 = scalar_lea.vmem [#allocation3], 48
        %v3799 = vld [vmem:[%s3798] sm:$0xff]
        %v3800 = vld [vmem:[%s3798 + $0x8] sm:$0xff]
        %v3801 = vld [vmem:[%s3798 + $0x10] sm:$0xff]
        %v3802 = vld [vmem:[%s3798 + $0x18] sm:$0xff]
        %v3803 = vld [vmem:[%s3798 + $0x20] sm:$0xff]
        %v3804 = vld [vmem:[%s3798 + $0x28] sm:$0xff]
        %v3805 = vpack.c.bf16 %v3800, %v3799
        %v3806 = vpack.c.bf16 %v3802, %v3801
        %v3807 = vpack.c.bf16 %v3804, %v3803
        %s3808 = scalar_lea.vmem [#allocation12], 384
        %v3809 = vld [vmem:[%s3808] sm:$0xf]
        %v3810 = vld [vmem:[%s3808 + $0x4] sm:$0xf]
        %v3811 = vld [vmem:[%s3808 + $0x8] sm:$0xf]
        %v3812 = vld [vmem:[%s3808 + $0xc] sm:$0xf]
        %v3813 = vld [vmem:[%s3808 + $0x10] sm:$0xf]
        %v3814 = vld [vmem:[%s3808 + $0x14] sm:$0xf]
        %v3815 = vld [vmem:[%s3808 + $0x18] sm:$0xf]
        %v3816 = vld [vmem:[%s3808 + $0x1c] sm:$0xf]
        %v3817 = vld [vmem:[%s3808 + $0x20] sm:$0xf]
        %v3818 = vld [vmem:[%s3808 + $0x24] sm:$0xf]
        %v3819 = vld [vmem:[%s3808 + $0x28] sm:$0xf]
        %v3820 = vld [vmem:[%s3808 + $0x2c] sm:$0xf]
        %v3821 = vld [vmem:[%s3808 + $0x30] sm:$0xf]
        %v3822 = vld [vmem:[%s3808 + $0x34] sm:$0xf]
        %v3823 = vld [vmem:[%s3808 + $0x38] sm:$0xf]
        %v3824 = vld [vmem:[%s3808 + $0x3c] sm:$0xf]
        %v3841 = vunpack.c.l.b16 %v3809
        %v3842 = vunpack.c.l.b16 %v3810
        %v3843 = vunpack.c.l.b16 %v3811
        %v3844 = vunpack.c.l.b16 %v3812
        %v3845 = vunpack.c.l.b16 %v3813
        %v3846 = vunpack.c.l.b16 %v3814
        %v3847 = vunpack.c.l.b16 %v3815
        %v3848 = vunpack.c.l.b16 %v3816
        %v3849 = vunpack.c.l.b16 %v3817
        %v3850 = vunpack.c.l.b16 %v3818
        %v3851 = vunpack.c.l.b16 %v3819
        %v3852 = vunpack.c.l.b16 %v3820
        %v3853 = vunpack.c.l.b16 %v3821
        %v3854 = vunpack.c.l.b16 %v3822
        %v3855 = vunpack.c.l.b16 %v3823
        %v3856 = vunpack.c.l.b16 %v3824
        %v3857 = vpack.c.b16 %v3842, %v3841
        %v3858 = vpack.c.b16 %v3844, %v3843
        %v3859 = vpack.c.b16 %v3846, %v3845
        %v3860 = vpack.c.b16 %v3848, %v3847
        %v3861 = vpack.c.b16 %v3850, %v3849
        %v3862 = vpack.c.b16 %v3852, %v3851
        %v3863 = vpack.c.b16 %v3854, %v3853
        %v3864 = vpack.c.b16 %v3856, %v3855
        %3873 = vmatprep.subr.bf16.mxu0 0
        %3874 = vmatpush1.bf16.msra.mxu0 %v3857
        %3875 = vmatprep.subr.bf16.mxu0 0
        %3876 = vmatpush1.bf16.msra.mxu0 %v3858
        %3877 = vmatprep.subr.bf16.mxu0 0
        %3878 = vmatpush1.bf16.msra.mxu0 %v3859
        %3879 = vmatprep.subr.bf16.mxu0 0
        %3880 = vmatpush1.bf16.msra.mxu0 %v3860
        %3881 = vmatprep.subr.bf16.mxu0 0
        %3882 = vmatpush1.bf16.msra.mxu0 %v3861
        %3883 = vmatprep.subr.bf16.mxu0 0
        %3884 = vmatpush1.bf16.msra.mxu0 %v3862
        %3885 = vmatprep.subr.bf16.mxu0 0
        %3886 = vmatpush1.bf16.msra.mxu0 %v3863
        %3887 = vmatprep.subr.bf16.mxu0 0
        %3888 = vmatpush1.bf16.msra.mxu0 %v3864
        %3889 = vmatprep.subr.bf16.mxu0 0
        %3890 = vmatpush1.bf16.msra.mxu0 0
        %3891 = vmatprep.subr.bf16.mxu0 0
        %3892 = vmatpush1.bf16.msra.mxu0 0
        %3893 = vmatprep.subr.bf16.mxu0 0
        %3894 = vmatpush1.bf16.msra.mxu0 0
        %3895 = vmatprep.subr.bf16.mxu0 0
        %3896 = vmatpush1.bf16.msra.mxu0 0
        %3897 = vmatprep.subr.bf16.mxu0 0
        %3898 = vmatpush1.bf16.msra.mxu0 0
        %3899 = vmatprep.subr.bf16.mxu0 0
        %3900 = vmatpush1.bf16.msra.mxu0 0
        %3901 = vmatprep.subr.bf16.mxu0 0
        %3902 = vmatpush1.bf16.msra.mxu0 0
        %3903 = vmatprep.subr.bf16.mxu0 0
        %3904 = vmatpush1.bf16.msra.mxu0 0
        %3905 = vmatprep.mubr.bf16.mxu0 0
        %3906 = vmatmul.mubr.bf16.gmra.mrb[0].mxu0 %v3805
        %v3907 = vpop.f32.mrb[0].mxu0
        %v3908 = vadd.f32 0.0, %v3907
        %v3909 = vpop.f32.mrb[0].mxu0
        %v3910 = vpop.f32.mrb[0].mxu0
        %v3911 = vadd.f32 0.0, %v3910
        %v3912 = vpop.f32.mrb[0].mxu0
        %3913 = vmatprep.mubr.bf16.mxu0 0
        %3914 = vmatmul.mubr.bf16.gmra.mrb[0].mxu0 %v3806
        %v3915 = vpop.f32.mrb[0].mxu0
        %v3916 = vadd.f32 0.0, %v3915
        %v3917 = vpop.f32.mrb[0].mxu0
        %v3918 = vpop.f32.mrb[0].mxu0
        %v3919 = vadd.f32 0.0, %v3918
        %v3920 = vpop.f32.mrb[0].mxu0
        %3921 = vmatprep.mubr.bf16.mxu0 0
        %3922 = vmatmul.mubr.bf16.gmra.mrb[0].mxu0 %v3807
        %v3923 = vpop.f32.mrb[0].mxu0
        %v3924 = vadd.f32 0.0, %v3923
        %v3925 = vpop.f32.mrb[0].mxu0
        %v3926 = vpop.f32.mrb[0].mxu0
        %v3927 = vadd.f32 0.0, %v3926
        %v3928 = vpop.f32.mrb[0].mxu0
        %3929 = vdwg.mxu0
        %v3930 = vadd.f32 %v3792, %v3908
        %v3931 = vadd.f32 %v3793, %v3911
        %v3932 = vadd.f32 %v3794, %v3916
        %v3933 = vadd.f32 %v3795, %v3919
        %v3934 = vadd.f32 %v3796, %v3924
        %v3935 = vadd.f32 %v3797, %v3927
        %3936 = vst [vmem:[#allocation5] sm:$0xff] %v3930
        %3937 = vst [vmem:[#allocation5 + $0x8] sm:$0xff] %v3931
        %3938 = vst [vmem:[#allocation5 + $0x10] sm:$0xff] %v3932
        %3939 = vst [vmem:[#allocation5 + $0x18] sm:$0xff] %v3933
        %3940 = vst [vmem:[#allocation5 + $0x20] sm:$0xff] %v3934
        %3941 = vst [vmem:[#allocation5 + $0x28] sm:$0xff] %v3935
        %v3942 = vld [vmem:[#allocation5] sm:$0xff]
        %v3943 = vld [vmem:[#allocation5 + $0x8] sm:$0xff]
        %v3944 = vld [vmem:[#allocation5 + $0x10] sm:$0xff]
        %v3945 = vld [vmem:[#allocation5 + $0x18] sm:$0xff]
        %v3946 = vld [vmem:[#allocation5 + $0x20] sm:$0xff]
        %v3947 = vld [vmem:[#allocation5 + $0x28] sm:$0xff]
        %v3948 = vld [vmem:[%s2899] sm:$0xff]
        %v3949 = vld [vmem:[%s2899 + $0x8] sm:$0xff]
        %v3950 = vld [vmem:[%s2899 + $0x10] sm:$0xff]
        %v3951 = vld [vmem:[%s2899 + $0x18] sm:$0xff]
        %v3952 = vld [vmem:[%s2899 + $0x20] sm:$0xff]
        %v3953 = vld [vmem:[%s2899 + $0x28] sm:$0xff]
        %v3954 = vpack.c.bf16 %v3949, %v3948
        %v3955 = vpack.c.bf16 %v3951, %v3950
        %v3956 = vpack.c.bf16 %v3953, %v3952
        %s3957 = scalar_lea.vmem [#allocation12], 448
        %v3958 = vld [vmem:[%s3957] sm:$0xf]
        %v3959 = vld [vmem:[%s3957 + $0x4] sm:$0xf]
        %v3960 = vld [vmem:[%s3957 + $0x8] sm:$0xf]
        %v3961 = vld [vmem:[%s3957 + $0xc] sm:$0xf]
        %v3962 = vld [vmem:[%s3957 + $0x10] sm:$0xf]
        %v3963 = vld [vmem:[%s3957 + $0x14] sm:$0xf]
        %v3964 = vld [vmem:[%s3957 + $0x18] sm:$0xf]
        %v3965 = vld [vmem:[%s3957 + $0x1c] sm:$0xf]
        %v3966 = vld [vmem:[%s3957 + $0x20] sm:$0xf]
        %v3967 = vld [vmem:[%s3957 + $0x24] sm:$0xf]
        %v3968 = vld [vmem:[%s3957 + $0x28] sm:$0xf]
        %v3969 = vld [vmem:[%s3957 + $0x2c] sm:$0xf]
        %v3970 = vld [vmem:[%s3957 + $0x30] sm:$0xf]
        %v3971 = vld [vmem:[%s3957 + $0x34] sm:$0xf]
        %v3972 = vld [vmem:[%s3957 + $0x38] sm:$0xf]
        %v3973 = vld [vmem:[%s3957 + $0x3c] sm:$0xf]
        %v3990 = vunpack.c.l.b16 %v3958
        %v3991 = vunpack.c.l.b16 %v3959
        %v3992 = vunpack.c.l.b16 %v3960
        %v3993 = vunpack.c.l.b16 %v3961
        %v3994 = vunpack.c.l.b16 %v3962
        %v3995 = vunpack.c.l.b16 %v3963
        %v3996 = vunpack.c.l.b16 %v3964
        %v3997 = vunpack.c.l.b16 %v3965
        %v3998 = vunpack.c.l.b16 %v3966
        %v3999 = vunpack.c.l.b16 %v3967
        %v4000 = vunpack.c.l.b16 %v3968
        %v4001 = vunpack.c.l.b16 %v3969
        %v4002 = vunpack.c.l.b16 %v3970
        %v4003 = vunpack.c.l.b16 %v3971
        %v4004 = vunpack.c.l.b16 %v3972
        %v4005 = vunpack.c.l.b16 %v3973
        %v4006 = vpack.c.b16 %v3991, %v3990
        %v4007 = vpack.c.b16 %v3993, %v3992
        %v4008 = vpack.c.b16 %v3995, %v3994
        %v4009 = vpack.c.b16 %v3997, %v3996
        %v4010 = vpack.c.b16 %v3999, %v3998
        %v4011 = vpack.c.b16 %v4001, %v4000
        %v4012 = vpack.c.b16 %v4003, %v4002
        %v4013 = vpack.c.b16 %v4005, %v4004
        %4022 = vmatprep.subr.bf16.mxu0 0
        %4023 = vmatpush1.bf16.msra.mxu0 %v4006
        %4024 = vmatprep.subr.bf16.mxu0 0
        %4025 = vmatpush1.bf16.msra.mxu0 %v4007
        %4026 = vmatprep.subr.bf16.mxu0 0
        %4027 = vmatpush1.bf16.msra.mxu0 %v4008
        %4028 = vmatprep.subr.bf16.mxu0 0
        %4029 = vmatpush1.bf16.msra.mxu0 %v4009
        %4030 = vmatprep.subr.bf16.mxu0 0
        %4031 = vmatpush1.bf16.msra.mxu0 %v4010
        %4032 = vmatprep.subr.bf16.mxu0 0
        %4033 = vmatpush1.bf16.msra.mxu0 %v4011
        %4034 = vmatprep.subr.bf16.mxu0 0
        %4035 = vmatpush1.bf16.msra.mxu0 %v4012
        %4036 = vmatprep.subr.bf16.mxu0 0
        %4037 = vmatpush1.bf16.msra.mxu0 %v4013
        %4038 = vmatprep.subr.bf16.mxu0 0
        %4039 = vmatpush1.bf16.msra.mxu0 0
        %4040 = vmatprep.subr.bf16.mxu0 0
        %4041 = vmatpush1.bf16.msra.mxu0 0
        %4042 = vmatprep.subr.bf16.mxu0 0
        %4043 = vmatpush1.bf16.msra.mxu0 0
        %4044 = vmatprep.subr.bf16.mxu0 0
        %4045 = vmatpush1.bf16.msra.mxu0 0
        %4046 = vmatprep.subr.bf16.mxu0 0
        %4047 = vmatpush1.bf16.msra.mxu0 0
        %4048 = vmatprep.subr.bf16.mxu0 0
        %4049 = vmatpush1.bf16.msra.mxu0 0
        %4050 = vmatprep.subr.bf16.mxu0 0
        %4051 = vmatpush1.bf16.msra.mxu0 0
        %4052 = vmatprep.subr.bf16.mxu0 0
        %4053 = vmatpush1.bf16.msra.mxu0 0
        %4054 = vmatprep.mubr.bf16.mxu0 0
        %4055 = vmatmul.mubr.bf16.gmra.mrb[0].mxu0 %v3954
        %v4056 = vpop.f32.mrb[0].mxu0
        %v4057 = vadd.f32 0.0, %v4056
        %v4058 = vpop.f32.mrb[0].mxu0
        %v4059 = vpop.f32.mrb[0].mxu0
        %v4060 = vadd.f32 0.0, %v4059
        %v4061 = vpop.f32.mrb[0].mxu0
        %4062 = vmatprep.mubr.bf16.mxu0 0
        %4063 = vmatmul.mubr.bf16.gmra.mrb[0].mxu0 %v3955
        %v4064 = vpop.f32.mrb[0].mxu0
        %v4065 = vadd.f32 0.0, %v4064
        %v4066 = vpop.f32.mrb[0].mxu0
        %v4067 = vpop.f32.mrb[0].mxu0
        %v4068 = vadd.f32 0.0, %v4067
        %v4069 = vpop.f32.mrb[0].mxu0
        %4070 = vmatprep.mubr.bf16.mxu0 0
        %4071 = vmatmul.mubr.bf16.gmra.mrb[0].mxu0 %v3956
        %v4072 = vpop.f32.mrb[0].mxu0
        %v4073 = vadd.f32 0.0, %v4072
        %v4074 = vpop.f32.mrb[0].mxu0
        %v4075 = vpop.f32.mrb[0].mxu0
        %v4076 = vadd.f32 0.0, %v4075
        %v4077 = vpop.f32.mrb[0].mxu0
        %4078 = vdwg.mxu0
        %v4079 = vadd.f32 %v3942, %v4057
        %v4080 = vadd.f32 %v3943, %v4060
        %v4081 = vadd.f32 %v3944, %v4065
        %v4082 = vadd.f32 %v3945, %v4068
        %v4083 = vadd.f32 %v3946, %v4073
        %v4084 = vadd.f32 %v3947, %v4076
        %4085 = vst [vmem:[#allocation5] sm:$0xff] %v4079
        %4086 = vst [vmem:[#allocation5 + $0x8] sm:$0xff] %v4080
        %4087 = vst [vmem:[#allocation5 + $0x10] sm:$0xff] %v4081
        %4088 = vst [vmem:[#allocation5 + $0x18] sm:$0xff] %v4082
        %4089 = vst [vmem:[#allocation5 + $0x20] sm:$0xff] %v4083
        %4090 = vst [vmem:[#allocation5 + $0x28] sm:$0xff] %v4084
        %v4091 = vld [vmem:[#allocation5] sm:$0xff]
        %v4092 = vld [vmem:[#allocation5 + $0x8] sm:$0xff]
        %v4093 = vld [vmem:[#allocation5 + $0x10] sm:$0xff]
        %v4094 = vld [vmem:[#allocation5 + $0x18] sm:$0xff]
        %v4095 = vld [vmem:[#allocation5 + $0x20] sm:$0xff]
        %v4096 = vld [vmem:[#allocation5 + $0x28] sm:$0xff]
        %v4097 = vld [vmem:[#allocation14] sm:$0x1]
        %v4099 = vlaneseq
        %v4100 = vshrl.u32 %v4099, 7
        %v4101 = vsub.s32 0, %v4100
        %v4102 = vrot.slane %v4097, %v4101
        %v4104 = vadd.f32 %v4091, %v4102
        %v4105 = vadd.f32 %v4092, %v4102
        %v4106 = vadd.f32 %v4093, %v4102
        %v4107 = vadd.f32 %v4094, %v4102
        %v4108 = vadd.f32 %v4095, %v4102
        %v4109 = vadd.f32 %v4096, %v4102
        %v4110 = vadd.f32 %v4104, %v4105
        %v4111 = vadd.f32 %v4107, %v4108
        %v4112 = vadd.f32 %v4110, %v4106
        %v4113 = vadd.f32 %v4111, %v4109
        %v4114 = vmul.f32 %v4112, 0.33333334
        %v4115 = vmul.f32 %v4113, 0.33333334
        %v4116 = vmax.f32 %v4114, 0.0
        %v4117 = vmax.f32 %v4115, 0.0
        %4118 = vst [vmem:[#allocation4] sm:$0xff] 0.0
        %4119 = vst [vmem:[#allocation4 + $0x8] sm:$0xff] 0.0
        %4120 = vst [vmem:[#allocation4 + $0x10] sm:$0xff] 0.0
        %4121 = vst [vmem:[#allocation4 + $0x18] sm:$0xff] 0.0
        %4122 = vst [vmem:[#allocation4 + $0x20] sm:$0xff] 0.0
        %4123 = vst [vmem:[#allocation4 + $0x28] sm:$0xff] 0.0
        %4124 = vst [vmem:[#allocation4 + $0x30] sm:$0xff] 0.0
        %s4125 = scalar_lea.vmem [#allocation4], 56
        %4126 = vst [vmem:[%s4125] sm:$0xff] %v4116
        %4127 = vst [vmem:[%s4125 + $0x8] sm:$0xff] %v4117
        %v4128 = vld [vmem:[#allocation4] sm:$0xff]
        %v4129 = vld [vmem:[#allocation4 + $0x8] sm:$0xff]
        %v4130 = vld [vmem:[#allocation15] sm:$0xff]
        %v4131 = vld [vmem:[#allocation15 + $0x8] sm:$0xff]
        %v4132 = vld [vmem:[#allocation15 + $0x10] sm:$0xff]
        %v4133 = vld [vmem:[#allocation15 + $0x18] sm:$0xff]
        %v4134 = vld [vmem:[#allocation15 + $0x20] sm:$0xff]
        %v4135 = vld [vmem:[#allocation15 + $0x28] sm:$0xff]
        %v4136 = vld [vmem:[#allocation15 + $0x30] sm:$0xff]
        %v4137 = vld [vmem:[#allocation15 + $0x38] sm:$0xff]
        %v4138 = vld [vmem:[#allocation15 + $0x40] sm:$0xff]
        %v4139 = vld [vmem:[#allocation15 + $0x48] sm:$0xff]
        %v4140 = vld [vmem:[#allocation15 + $0x50] sm:$0xff]
        %v4141 = vld [vmem:[#allocation15 + $0x58] sm:$0xff]
        %v4142 = vld [vmem:[#allocation15 + $0x60] sm:$0xff]
        %v4143 = vld [vmem:[#allocation15 + $0x68] sm:$0xff]
        %v4144 = vld [vmem:[#allocation15 + $0x70] sm:$0xff]
        %v4145 = vld [vmem:[#allocation15 + $0x78] sm:$0xff]
        %s4146 = scalar_lea.vmem [#allocation4], 8
        %v4147 = vld [vmem:[%s4146] sm:$0xff]
        %v4148 = vld [vmem:[%s4146 + $0x8] sm:$0xff]
        %s4149 = scalar_lea.vmem [#allocation15], 128
        %v4150 = vld [vmem:[%s4149] sm:$0xff]
        %v4151 = vld [vmem:[%s4149 + $0x8] sm:$0xff]
        %v4152 = vld [vmem:[%s4149 + $0x10] sm:$0xff]
        %v4153 = vld [vmem:[%s4149 + $0x18] sm:$0xff]
        %v4154 = vld [vmem:[%s4149 + $0x20] sm:$0xff]
        %v4155 = vld [vmem:[%s4149 + $0x28] sm:$0xff]
        %v4156 = vld [vmem:[%s4149 + $0x30] sm:$0xff]
        %v4157 = vld [vmem:[%s4149 + $0x38] sm:$0xff]
        %v4158 = vld [vmem:[%s4149 + $0x40] sm:$0xff]
        %v4159 = vld [vmem:[%s4149 + $0x48] sm:$0xff]
        %v4160 = vld [vmem:[%s4149 + $0x50] sm:$0xff]
        %v4161 = vld [vmem:[%s4149 + $0x58] sm:$0xff]
        %v4162 = vld [vmem:[%s4149 + $0x60] sm:$0xff]
        %v4163 = vld [vmem:[%s4149 + $0x68] sm:$0xff]
        %v4164 = vld [vmem:[%s4149 + $0x70] sm:$0xff]
        %v4165 = vld [vmem:[%s4149 + $0x78] sm:$0xff]
        %4166 = vmatprep.subr.mxu0 0.0
        %4167 = vmatpush1.msra.mxu0 %v4150
        %4168 = vmatprep.subr.mxu0 0.0
        %4169 = vmatpush1.msra.mxu0 %v4151
        %4170 = vmatprep.subr.mxu0 0.0
        %4171 = vmatpush1.msra.mxu0 %v4152
        %4172 = vmatprep.subr.mxu0 0.0
        %4173 = vmatpush1.msra.mxu0 %v4153
        %4174 = vmatprep.subr.mxu0 0.0
        %4175 = vmatpush1.msra.mxu0 %v4154
        %4176 = vmatprep.subr.mxu0 0.0
        %4177 = vmatpush1.msra.mxu0 %v4155
        %4178 = vmatprep.subr.mxu0 0.0
        %4179 = vmatpush1.msra.mxu0 %v4156
        %4180 = vmatprep.subr.mxu0 0.0
        %4181 = vmatpush1.msra.mxu0 %v4157
        %4182 = vmatprep.subr.mxu0 0.0
        %4183 = vmatpush1.msra.mxu0 %v4158
        %4184 = vmatprep.subr.mxu0 0.0
        %4185 = vmatpush1.msra.mxu0 %v4159
        %4186 = vmatprep.subr.mxu0 0.0
        %4187 = vmatpush1.msra.mxu0 %v4160
        %4188 = vmatprep.subr.mxu0 0.0
        %4189 = vmatpush1.msra.mxu0 %v4161
        %4190 = vmatprep.subr.mxu0 0.0
        %4191 = vmatpush1.msra.mxu0 %v4162
        %4192 = vmatprep.subr.mxu0 0.0
        %4193 = vmatpush1.msra.mxu0 %v4163
        %4194 = vmatprep.subr.mxu0 0.0
        %4195 = vmatpush1.msra.mxu0 %v4164
        %4196 = vmatprep.subr.mxu0 0.0
        %4197 = vmatpush1.msra.mxu0 %v4165
        %4198 = vmatprep.subr.mxu0 0.0
        %4199 = vmatpush1.msra.mxu0 0.0
        %4200 = vmatprep.subr.mxu0 0.0
        %4201 = vmatpush1.msra.mxu0 0.0
        %4202 = vmatprep.subr.mxu0 0.0
        %4203 = vmatpush1.msra.mxu0 0.0
        %4204 = vmatprep.subr.mxu0 0.0
        %4205 = vmatpush1.msra.mxu0 0.0
        %4206 = vmatprep.subr.mxu0 0.0
        %4207 = vmatpush1.msra.mxu0 0.0
        %4208 = vmatprep.subr.mxu0 0.0
        %4209 = vmatpush1.msra.mxu0 0.0
        %4210 = vmatprep.subr.mxu0 0.0
        %4211 = vmatpush1.msra.mxu0 0.0
        %4212 = vmatprep.subr.mxu0 0.0
        %4213 = vmatpush1.msra.mxu0 0.0
        %4214 = vmatprep.subr.mxu0 0.0
        %4215 = vmatpush1.msra.mxu0 0.0
        %4216 = vmatprep.subr.mxu0 0.0
        %4217 = vmatpush1.msra.mxu0 0.0
        %4218 = vmatprep.subr.mxu0 0.0
        %4219 = vmatpush1.msra.mxu0 0.0
        %4220 = vmatprep.subr.mxu0 0.0
        %4221 = vmatpush1.msra.mxu0 0.0
        %4222 = vmatprep.subr.mxu0 0.0
        %4223 = vmatpush1.msra.mxu0 0.0
        %4224 = vmatprep.subr.mxu0 0.0
        %4225 = vmatpush1.msra.mxu0 0.0
        %4226 = vmatprep.subr.mxu0 0.0
        %4227 = vmatpush1.msra.mxu0 0.0
        %4228 = vmatprep.subr.mxu0 0.0
        %4229 = vmatpush1.msra.mxu0 0.0
        %4230 = vmatprep.mubr.f32.mxu0 0.0
        %4231 = vmatmul.mubr.f32.gmra.mrb[0].mxu0 %v4147
        %v4232 = vpop.f32.mrb[0].mxu0
        %v4233 = vadd.f32 0.0, %v4232
        %v4234 = vpop.f32.mrb[0].mxu0
        %4235 = vmatprep.mubr.f32.mxu0 0.0
        %4236 = vmatmul.mubr.f32.gmra.mrb[0].mxu0 %v4148
        %v4237 = vpop.f32.mrb[0].mxu0
        %v4238 = vadd.f32 0.0, %v4237
        %v4239 = vpop.f32.mrb[0].mxu0
        %4240 = vdwg.mxu0
        %4241 = vmatprep.subr.mxu0 0.0
        %4242 = vmatpush1.msra.mxu0 %v4130
        %4243 = vmatprep.subr.mxu0 0.0
        %4244 = vmatpush1.msra.mxu0 %v4131
        %4245 = vmatprep.subr.mxu0 0.0
        %4246 = vmatpush1.msra.mxu0 %v4132
        %4247 = vmatprep.subr.mxu0 0.0
        %4248 = vmatpush1.msra.mxu0 %v4133
        %4249 = vmatprep.subr.mxu0 0.0
        %4250 = vmatpush1.msra.mxu0 %v4134
        %4251 = vmatprep.subr.mxu0 0.0
        %4252 = vmatpush1.msra.mxu0 %v4135
        %4253 = vmatprep.subr.mxu0 0.0
        %4254 = vmatpush1.msra.mxu0 %v4136
        %4255 = vmatprep.subr.mxu0 0.0
        %4256 = vmatpush1.msra.mxu0 %v4137
        %4257 = vmatprep.subr.mxu0 0.0
        %4258 = vmatpush1.msra.mxu0 %v4138
        %4259 = vmatprep.subr.mxu0 0.0
        %4260 = vmatpush1.msra.mxu0 %v4139
        %4261 = vmatprep.subr.mxu0 0.0
        %4262 = vmatpush1.msra.mxu0 %v4140
        %4263 = vmatprep.subr.mxu0 0.0
        %4264 = vmatpush1.msra.mxu0 %v4141
        %4265 = vmatprep.subr.mxu0 0.0
        %4266 = vmatpush1.msra.mxu0 %v4142
        %4267 = vmatprep.subr.mxu0 0.0
        %4268 = vmatpush1.msra.mxu0 %v4143
        %4269 = vmatprep.subr.mxu0 0.0
        %4270 = vmatpush1.msra.mxu0 %v4144
        %4271 = vmatprep.subr.mxu0 0.0
        %4272 = vmatpush1.msra.mxu0 %v4145
        %4273 = vmatprep.subr.mxu0 0.0
        %4274 = vmatpush1.msra.mxu0 0.0
        %4275 = vmatprep.subr.mxu0 0.0
        %4276 = vmatpush1.msra.mxu0 0.0
        %4277 = vmatprep.subr.mxu0 0.0
        %4278 = vmatpush1.msra.mxu0 0.0
        %4279 = vmatprep.subr.mxu0 0.0
        %4280 = vmatpush1.msra.mxu0 0.0
        %4281 = vmatprep.subr.mxu0 0.0
        %4282 = vmatpush1.msra.mxu0 0.0
        %4283 = vmatprep.subr.mxu0 0.0
        %4284 = vmatpush1.msra.mxu0 0.0
        %4285 = vmatprep.subr.mxu0 0.0
        %4286 = vmatpush1.msra.mxu0 0.0
        %4287 = vmatprep.subr.mxu0 0.0
        %4288 = vmatpush1.msra.mxu0 0.0
        %4289 = vmatprep.subr.mxu0 0.0
        %4290 = vmatpush1.msra.mxu0 0.0
        %4291 = vmatprep.subr.mxu0 0.0
        %4292 = vmatpush1.msra.mxu0 0.0
        %4293 = vmatprep.subr.mxu0 0.0
        %4294 = vmatpush1.msra.mxu0 0.0
        %4295 = vmatprep.subr.mxu0 0.0
        %4296 = vmatpush1.msra.mxu0 0.0
        %4297 = vmatprep.subr.mxu0 0.0
        %4298 = vmatpush1.msra.mxu0 0.0
        %4299 = vmatprep.subr.mxu0 0.0
        %4300 = vmatpush1.msra.mxu0 0.0
        %4301 = vmatprep.subr.mxu0 0.0
        %4302 = vmatpush1.msra.mxu0 0.0
        %4303 = vmatprep.subr.mxu0 0.0
        %4304 = vmatpush1.msra.mxu0 0.0
        %4305 = vmatprep.mubr.f32.mxu0 0.0
        %4306 = vmatmul.mubr.f32.gmra.mrb[0].mxu0 %v4128
        %v4307 = vpop.f32.mrb[0].mxu0
        %v4308 = vadd.f32 %v4233, %v4307
        %v4309 = vpop.f32.mrb[0].mxu0
        %4310 = vmatprep.mubr.f32.mxu0 0.0
        %4311 = vmatmul.mubr.f32.gmra.mrb[0].mxu0 %v4129
        %v4312 = vpop.f32.mrb[0].mxu0
        %v4313 = vadd.f32 %v4238, %v4312
        %v4314 = vpop.f32.mrb[0].mxu0
        %4315 = vdwg.mxu0
        %s4316 = scalar_lea.vmem [#allocation4], 16
        %v4317 = vld [vmem:[%s4316] sm:$0xff]
        %v4318 = vld [vmem:[%s4316 + $0x8] sm:$0xff]
        %s4319 = scalar_lea.vmem [#allocation15], 256
        %v4320 = vld [vmem:[%s4319] sm:$0xff]
        %v4321 = vld [vmem:[%s4319 + $0x8] sm:$0xff]
        %v4322 = vld [vmem:[%s4319 + $0x10] sm:$0xff]
        %v4323 = vld [vmem:[%s4319 + $0x18] sm:$0xff]
        %v4324 = vld [vmem:[%s4319 + $0x20] sm:$0xff]
        %v4325 = vld [vmem:[%s4319 + $0x28] sm:$0xff]
        %v4326 = vld [vmem:[%s4319 + $0x30] sm:$0xff]
        %v4327 = vld [vmem:[%s4319 + $0x38] sm:$0xff]
        %v4328 = vld [vmem:[%s4319 + $0x40] sm:$0xff]
        %v4329 = vld [vmem:[%s4319 + $0x48] sm:$0xff]
        %v4330 = vld [vmem:[%s4319 + $0x50] sm:$0xff]
        %v4331 = vld [vmem:[%s4319 + $0x58] sm:$0xff]
        %v4332 = vld [vmem:[%s4319 + $0x60] sm:$0xff]
        %v4333 = vld [vmem:[%s4319 + $0x68] sm:$0xff]
        %v4334 = vld [vmem:[%s4319 + $0x70] sm:$0xff]
        %v4335 = vld [vmem:[%s4319 + $0x78] sm:$0xff]
        %4336 = vmatprep.subr.mxu0 0.0
        %4337 = vmatpush1.msra.mxu0 %v4320
        %4338 = vmatprep.subr.mxu0 0.0
        %4339 = vmatpush1.msra.mxu0 %v4321
        %4340 = vmatprep.subr.mxu0 0.0
        %4341 = vmatpush1.msra.mxu0 %v4322
        %4342 = vmatprep.subr.mxu0 0.0
        %4343 = vmatpush1.msra.mxu0 %v4323
        %4344 = vmatprep.subr.mxu0 0.0
        %4345 = vmatpush1.msra.mxu0 %v4324
        %4346 = vmatprep.subr.mxu0 0.0
        %4347 = vmatpush1.msra.mxu0 %v4325
        %4348 = vmatprep.subr.mxu0 0.0
        %4349 = vmatpush1.msra.mxu0 %v4326
        %4350 = vmatprep.subr.mxu0 0.0
        %4351 = vmatpush1.msra.mxu0 %v4327
        %4352 = vmatprep.subr.mxu0 0.0
        %4353 = vmatpush1.msra.mxu0 %v4328
        %4354 = vmatprep.subr.mxu0 0.0
        %4355 = vmatpush1.msra.mxu0 %v4329
        %4356 = vmatprep.subr.mxu0 0.0
        %4357 = vmatpush1.msra.mxu0 %v4330
        %4358 = vmatprep.subr.mxu0 0.0
        %4359 = vmatpush1.msra.mxu0 %v4331
        %4360 = vmatprep.subr.mxu0 0.0
        %4361 = vmatpush1.msra.mxu0 %v4332
        %4362 = vmatprep.subr.mxu0 0.0
        %4363 = vmatpush1.msra.mxu0 %v4333
        %4364 = vmatprep.subr.mxu0 0.0
        %4365 = vmatpush1.msra.mxu0 %v4334
        %4366 = vmatprep.subr.mxu0 0.0
        %4367 = vmatpush1.msra.mxu0 %v4335
        %4368 = vmatprep.subr.mxu0 0.0
        %4369 = vmatpush1.msra.mxu0 0.0
        %4370 = vmatprep.subr.mxu0 0.0
        %4371 = vmatpush1.msra.mxu0 0.0
        %4372 = vmatprep.subr.mxu0 0.0
        %4373 = vmatpush1.msra.mxu0 0.0
        %4374 = vmatprep.subr.mxu0 0.0
        %4375 = vmatpush1.msra.mxu0 0.0
        %4376 = vmatprep.subr.mxu0 0.0
        %4377 = vmatpush1.msra.mxu0 0.0
        %4378 = vmatprep.subr.mxu0 0.0
        %4379 = vmatpush1.msra.mxu0 0.0
        %4380 = vmatprep.subr.mxu0 0.0
        %4381 = vmatpush1.msra.mxu0 0.0
        %4382 = vmatprep.subr.mxu0 0.0
        %4383 = vmatpush1.msra.mxu0 0.0
        %4384 = vmatprep.subr.mxu0 0.0
        %4385 = vmatpush1.msra.mxu0 0.0
        %4386 = vmatprep.subr.mxu0 0.0
        %4387 = vmatpush1.msra.mxu0 0.0
        %4388 = vmatprep.subr.mxu0 0.0
        %4389 = vmatpush1.msra.mxu0 0.0
        %4390 = vmatprep.subr.mxu0 0.0
        %4391 = vmatpush1.msra.mxu0 0.0
        %4392 = vmatprep.subr.mxu0 0.0
        %4393 = vmatpush1.msra.mxu0 0.0
        %4394 = vmatprep.subr.mxu0 0.0
        %4395 = vmatpush1.msra.mxu0 0.0
        %4396 = vmatprep.subr.mxu0 0.0
        %4397 = vmatpush1.msra.mxu0 0.0
        %4398 = vmatprep.subr.mxu0 0.0
        %4399 = vmatpush1.msra.mxu0 0.0
        %4400 = vmatprep.mubr.f32.mxu0 0.0
        %4401 = vmatmul.mubr.f32.gmra.mrb[0].mxu0 %v4317
        %v4402 = vpop.f32.mrb[0].mxu0
        %v4403 = vadd.f32 0.0, %v4402
        %v4404 = vpop.f32.mrb[0].mxu0
        %4405 = vmatprep.mubr.f32.mxu0 0.0
        %4406 = vmatmul.mubr.f32.gmra.mrb[0].mxu0 %v4318
        %v4407 = vpop.f32.mrb[0].mxu0
        %v4408 = vadd.f32 0.0, %v4407
        %v4409 = vpop.f32.mrb[0].mxu0
        %4410 = vdwg.mxu0
        %v4411 = vadd.f32 %v4308, %v4403
        %v4412 = vadd.f32 %v4313, %v4408
        %s4413 = scalar_lea.vmem [#allocation4], 24
        %v4414 = vld [vmem:[%s4413] sm:$0xff]
        %v4415 = vld [vmem:[%s4413 + $0x8] sm:$0xff]
        %s4416 = scalar_lea.vmem [#allocation15], 384
        %v4417 = vld [vmem:[%s4416] sm:$0xff]
        %v4418 = vld [vmem:[%s4416 + $0x8] sm:$0xff]
        %v4419 = vld [vmem:[%s4416 + $0x10] sm:$0xff]
        %v4420 = vld [vmem:[%s4416 + $0x18] sm:$0xff]
        %v4421 = vld [vmem:[%s4416 + $0x20] sm:$0xff]
        %v4422 = vld [vmem:[%s4416 + $0x28] sm:$0xff]
        %v4423 = vld [vmem:[%s4416 + $0x30] sm:$0xff]
        %v4424 = vld [vmem:[%s4416 + $0x38] sm:$0xff]
        %v4425 = vld [vmem:[%s4416 + $0x40] sm:$0xff]
        %v4426 = vld [vmem:[%s4416 + $0x48] sm:$0xff]
        %v4427 = vld [vmem:[%s4416 + $0x50] sm:$0xff]
        %v4428 = vld [vmem:[%s4416 + $0x58] sm:$0xff]
        %v4429 = vld [vmem:[%s4416 + $0x60] sm:$0xff]
        %v4430 = vld [vmem:[%s4416 + $0x68] sm:$0xff]
        %v4431 = vld [vmem:[%s4416 + $0x70] sm:$0xff]
        %v4432 = vld [vmem:[%s4416 + $0x78] sm:$0xff]
        %4433 = vmatprep.subr.mxu0 0.0
        %4434 = vmatpush1.msra.mxu0 %v4417
        %4435 = vmatprep.subr.mxu0 0.0
        %4436 = vmatpush1.msra.mxu0 %v4418
        %4437 = vmatprep.subr.mxu0 0.0
        %4438 = vmatpush1.msra.mxu0 %v4419
        %4439 = vmatprep.subr.mxu0 0.0
        %4440 = vmatpush1.msra.mxu0 %v4420
        %4441 = vmatprep.subr.mxu0 0.0
        %4442 = vmatpush1.msra.mxu0 %v4421
        %4443 = vmatprep.subr.mxu0 0.0
        %4444 = vmatpush1.msra.mxu0 %v4422
        %4445 = vmatprep.subr.mxu0 0.0
        %4446 = vmatpush1.msra.mxu0 %v4423
        %4447 = vmatprep.subr.mxu0 0.0
        %4448 = vmatpush1.msra.mxu0 %v4424
        %4449 = vmatprep.subr.mxu0 0.0
        %4450 = vmatpush1.msra.mxu0 %v4425
        %4451 = vmatprep.subr.mxu0 0.0
        %4452 = vmatpush1.msra.mxu0 %v4426
        %4453 = vmatprep.subr.mxu0 0.0
        %4454 = vmatpush1.msra.mxu0 %v4427
        %4455 = vmatprep.subr.mxu0 0.0
        %4456 = vmatpush1.msra.mxu0 %v4428
        %4457 = vmatprep.subr.mxu0 0.0
        %4458 = vmatpush1.msra.mxu0 %v4429
        %4459 = vmatprep.subr.mxu0 0.0
        %4460 = vmatpush1.msra.mxu0 %v4430
        %4461 = vmatprep.subr.mxu0 0.0
        %4462 = vmatpush1.msra.mxu0 %v4431
        %4463 = vmatprep.subr.mxu0 0.0
        %4464 = vmatpush1.msra.mxu0 %v4432
        %4465 = vmatprep.subr.mxu0 0.0
        %4466 = vmatpush1.msra.mxu0 0.0
        %4467 = vmatprep.subr.mxu0 0.0
        %4468 = vmatpush1.msra.mxu0 0.0
        %4469 = vmatprep.subr.mxu0 0.0
        %4470 = vmatpush1.msra.mxu0 0.0
        %4471 = vmatprep.subr.mxu0 0.0
        %4472 = vmatpush1.msra.mxu0 0.0
        %4473 = vmatprep.subr.mxu0 0.0
        %4474 = vmatpush1.msra.mxu0 0.0
        %4475 = vmatprep.subr.mxu0 0.0
        %4476 = vmatpush1.msra.mxu0 0.0
        %4477 = vmatprep.subr.mxu0 0.0
        %4478 = vmatpush1.msra.mxu0 0.0
        %4479 = vmatprep.subr.mxu0 0.0
        %4480 = vmatpush1.msra.mxu0 0.0
        %4481 = vmatprep.subr.mxu0 0.0
        %4482 = vmatpush1.msra.mxu0 0.0
        %4483 = vmatprep.subr.mxu0 0.0
        %4484 = vmatpush1.msra.mxu0 0.0
        %4485 = vmatprep.subr.mxu0 0.0
        %4486 = vmatpush1.msra.mxu0 0.0
        %4487 = vmatprep.subr.mxu0 0.0
        %4488 = vmatpush1.msra.mxu0 0.0
        %4489 = vmatprep.subr.mxu0 0.0
        %4490 = vmatpush1.msra.mxu0 0.0
        %4491 = vmatprep.subr.mxu0 0.0
        %4492 = vmatpush1.msra.mxu0 0.0
        %4493 = vmatprep.subr.mxu0 0.0
        %4494 = vmatpush1.msra.mxu0 0.0
        %4495 = vmatprep.subr.mxu0 0.0
        %4496 = vmatpush1.msra.mxu0 0.0
        %4497 = vmatprep.mubr.f32.mxu0 0.0
        %4498 = vmatmul.mubr.f32.gmra.mrb[0].mxu0 %v4414
        %v4499 = vpop.f32.mrb[0].mxu0
        %v4500 = vadd.f32 0.0, %v4499
        %v4501 = vpop.f32.mrb[0].mxu0
        %4502 = vmatprep.mubr.f32.mxu0 0.0
        %4503 = vmatmul.mubr.f32.gmra.mrb[0].mxu0 %v4415
        %v4504 = vpop.f32.mrb[0].mxu0
        %v4505 = vadd.f32 0.0, %v4504
        %v4506 = vpop.f32.mrb[0].mxu0
        %4507 = vdwg.mxu0
        %v4508 = vadd.f32 %v4411, %v4500
        %v4509 = vadd.f32 %v4412, %v4505
        %s4510 = scalar_lea.vmem [#allocation4], 32
        %v4511 = vld [vmem:[%s4510] sm:$0xff]
        %v4512 = vld [vmem:[%s4510 + $0x8] sm:$0xff]
        %s4513 = scalar_lea.vmem [#allocation15], 512
        %v4514 = vld [vmem:[%s4513] sm:$0xff]
        %v4515 = vld [vmem:[%s4513 + $0x8] sm:$0xff]
        %v4516 = vld [vmem:[%s4513 + $0x10] sm:$0xff]
        %v4517 = vld [vmem:[%s4513 + $0x18] sm:$0xff]
        %v4518 = vld [vmem:[%s4513 + $0x20] sm:$0xff]
        %v4519 = vld [vmem:[%s4513 + $0x28] sm:$0xff]
        %v4520 = vld [vmem:[%s4513 + $0x30] sm:$0xff]
        %v4521 = vld [vmem:[%s4513 + $0x38] sm:$0xff]
        %v4522 = vld [vmem:[%s4513 + $0x40] sm:$0xff]
        %v4523 = vld [vmem:[%s4513 + $0x48] sm:$0xff]
        %v4524 = vld [vmem:[%s4513 + $0x50] sm:$0xff]
        %v4525 = vld [vmem:[%s4513 + $0x58] sm:$0xff]
        %v4526 = vld [vmem:[%s4513 + $0x60] sm:$0xff]
        %v4527 = vld [vmem:[%s4513 + $0x68] sm:$0xff]
        %v4528 = vld [vmem:[%s4513 + $0x70] sm:$0xff]
        %v4529 = vld [vmem:[%s4513 + $0x78] sm:$0xff]
        %4530 = vmatprep.subr.mxu0 0.0
        %4531 = vmatpush1.msra.mxu0 %v4514
        %4532 = vmatprep.subr.mxu0 0.0
        %4533 = vmatpush1.msra.mxu0 %v4515
        %4534 = vmatprep.subr.mxu0 0.0
        %4535 = vmatpush1.msra.mxu0 %v4516
        %4536 = vmatprep.subr.mxu0 0.0
        %4537 = vmatpush1.msra.mxu0 %v4517
        %4538 = vmatprep.subr.mxu0 0.0
        %4539 = vmatpush1.msra.mxu0 %v4518
        %4540 = vmatprep.subr.mxu0 0.0
        %4541 = vmatpush1.msra.mxu0 %v4519
        %4542 = vmatprep.subr.mxu0 0.0
        %4543 = vmatpush1.msra.mxu0 %v4520
        %4544 = vmatprep.subr.mxu0 0.0
        %4545 = vmatpush1.msra.mxu0 %v4521
        %4546 = vmatprep.subr.mxu0 0.0
        %4547 = vmatpush1.msra.mxu0 %v4522
        %4548 = vmatprep.subr.mxu0 0.0
        %4549 = vmatpush1.msra.mxu0 %v4523
        %4550 = vmatprep.subr.mxu0 0.0
        %4551 = vmatpush1.msra.mxu0 %v4524
        %4552 = vmatprep.subr.mxu0 0.0
        %4553 = vmatpush1.msra.mxu0 %v4525
        %4554 = vmatprep.subr.mxu0 0.0
        %4555 = vmatpush1.msra.mxu0 %v4526
        %4556 = vmatprep.subr.mxu0 0.0
        %4557 = vmatpush1.msra.mxu0 %v4527
        %4558 = vmatprep.subr.mxu0 0.0
        %4559 = vmatpush1.msra.mxu0 %v4528
        %4560 = vmatprep.subr.mxu0 0.0
        %4561 = vmatpush1.msra.mxu0 %v4529
        %4562 = vmatprep.subr.mxu0 0.0
        %4563 = vmatpush1.msra.mxu0 0.0
        %4564 = vmatprep.subr.mxu0 0.0
        %4565 = vmatpush1.msra.mxu0 0.0
        %4566 = vmatprep.subr.mxu0 0.0
        %4567 = vmatpush1.msra.mxu0 0.0
        %4568 = vmatprep.subr.mxu0 0.0
        %4569 = vmatpush1.msra.mxu0 0.0
        %4570 = vmatprep.subr.mxu0 0.0
        %4571 = vmatpush1.msra.mxu0 0.0
        %4572 = vmatprep.subr.mxu0 0.0
        %4573 = vmatpush1.msra.mxu0 0.0
        %4574 = vmatprep.subr.mxu0 0.0
        %4575 = vmatpush1.msra.mxu0 0.0
        %4576 = vmatprep.subr.mxu0 0.0
        %4577 = vmatpush1.msra.mxu0 0.0
        %4578 = vmatprep.subr.mxu0 0.0
        %4579 = vmatpush1.msra.mxu0 0.0
        %4580 = vmatprep.subr.mxu0 0.0
        %4581 = vmatpush1.msra.mxu0 0.0
        %4582 = vmatprep.subr.mxu0 0.0
        %4583 = vmatpush1.msra.mxu0 0.0
        %4584 = vmatprep.subr.mxu0 0.0
        %4585 = vmatpush1.msra.mxu0 0.0
        %4586 = vmatprep.subr.mxu0 0.0
        %4587 = vmatpush1.msra.mxu0 0.0
        %4588 = vmatprep.subr.mxu0 0.0
        %4589 = vmatpush1.msra.mxu0 0.0
        %4590 = vmatprep.subr.mxu0 0.0
        %4591 = vmatpush1.msra.mxu0 0.0
        %4592 = vmatprep.subr.mxu0 0.0
        %4593 = vmatpush1.msra.mxu0 0.0
        %4594 = vmatprep.mubr.f32.mxu0 0.0
        %4595 = vmatmul.mubr.f32.gmra.mrb[0].mxu0 %v4511
        %v4596 = vpop.f32.mrb[0].mxu0
        %v4597 = vadd.f32 0.0, %v4596
        %v4598 = vpop.f32.mrb[0].mxu0
        %4599 = vmatprep.mubr.f32.mxu0 0.0
        %4600 = vmatmul.mubr.f32.gmra.mrb[0].mxu0 %v4512
        %v4601 = vpop.f32.mrb[0].mxu0
        %v4602 = vadd.f32 0.0, %v4601
        %v4603 = vpop.f32.mrb[0].mxu0
        %4604 = vdwg.mxu0
        %v4605 = vadd.f32 %v4508, %v4597
        %v4606 = vadd.f32 %v4509, %v4602
        %s4607 = scalar_lea.vmem [#allocation4], 40
        %v4608 = vld [vmem:[%s4607] sm:$0xff]
        %v4609 = vld [vmem:[%s4607 + $0x8] sm:$0xff]
        %s4610 = scalar_lea.vmem [#allocation15], 640
        %v4611 = vld [vmem:[%s4610] sm:$0xff]
        %v4612 = vld [vmem:[%s4610 + $0x8] sm:$0xff]
        %v4613 = vld [vmem:[%s4610 + $0x10] sm:$0xff]
        %v4614 = vld [vmem:[%s4610 + $0x18] sm:$0xff]
        %v4615 = vld [vmem:[%s4610 + $0x20] sm:$0xff]
        %v4616 = vld [vmem:[%s4610 + $0x28] sm:$0xff]
        %v4617 = vld [vmem:[%s4610 + $0x30] sm:$0xff]
        %v4618 = vld [vmem:[%s4610 + $0x38] sm:$0xff]
        %v4619 = vld [vmem:[%s4610 + $0x40] sm:$0xff]
        %v4620 = vld [vmem:[%s4610 + $0x48] sm:$0xff]
        %v4621 = vld [vmem:[%s4610 + $0x50] sm:$0xff]
        %v4622 = vld [vmem:[%s4610 + $0x58] sm:$0xff]
        %v4623 = vld [vmem:[%s4610 + $0x60] sm:$0xff]
        %v4624 = vld [vmem:[%s4610 + $0x68] sm:$0xff]
        %v4625 = vld [vmem:[%s4610 + $0x70] sm:$0xff]
        %v4626 = vld [vmem:[%s4610 + $0x78] sm:$0xff]
        %4627 = vmatprep.subr.mxu0 0.0
        %4628 = vmatpush1.msra.mxu0 %v4611
        %4629 = vmatprep.subr.mxu0 0.0
        %4630 = vmatpush1.msra.mxu0 %v4612
        %4631 = vmatprep.subr.mxu0 0.0
        %4632 = vmatpush1.msra.mxu0 %v4613
        %4633 = vmatprep.subr.mxu0 0.0
        %4634 = vmatpush1.msra.mxu0 %v4614
        %4635 = vmatprep.subr.mxu0 0.0
        %4636 = vmatpush1.msra.mxu0 %v4615
        %4637 = vmatprep.subr.mxu0 0.0
        %4638 = vmatpush1.msra.mxu0 %v4616
        %4639 = vmatprep.subr.mxu0 0.0
        %4640 = vmatpush1.msra.mxu0 %v4617
        %4641 = vmatprep.subr.mxu0 0.0
        %4642 = vmatpush1.msra.mxu0 %v4618
        %4643 = vmatprep.subr.mxu0 0.0
        %4644 = vmatpush1.msra.mxu0 %v4619
        %4645 = vmatprep.subr.mxu0 0.0
        %4646 = vmatpush1.msra.mxu0 %v4620
        %4647 = vmatprep.subr.mxu0 0.0
        %4648 = vmatpush1.msra.mxu0 %v4621
        %4649 = vmatprep.subr.mxu0 0.0
        %4650 = vmatpush1.msra.mxu0 %v4622
        %4651 = vmatprep.subr.mxu0 0.0
        %4652 = vmatpush1.msra.mxu0 %v4623
        %4653 = vmatprep.subr.mxu0 0.0
        %4654 = vmatpush1.msra.mxu0 %v4624
        %4655 = vmatprep.subr.mxu0 0.0
        %4656 = vmatpush1.msra.mxu0 %v4625
        %4657 = vmatprep.subr.mxu0 0.0
        %4658 = vmatpush1.msra.mxu0 %v4626
        %4659 = vmatprep.subr.mxu0 0.0
        %4660 = vmatpush1.msra.mxu0 0.0
        %4661 = vmatprep.subr.mxu0 0.0
        %4662 = vmatpush1.msra.mxu0 0.0
        %4663 = vmatprep.subr.mxu0 0.0
        %4664 = vmatpush1.msra.mxu0 0.0
        %4665 = vmatprep.subr.mxu0 0.0
        %4666 = vmatpush1.msra.mxu0 0.0
        %4667 = vmatprep.subr.mxu0 0.0
        %4668 = vmatpush1.msra.mxu0 0.0
        %4669 = vmatprep.subr.mxu0 0.0
        %4670 = vmatpush1.msra.mxu0 0.0
        %4671 = vmatprep.subr.mxu0 0.0
        %4672 = vmatpush1.msra.mxu0 0.0
        %4673 = vmatprep.subr.mxu0 0.0
        %4674 = vmatpush1.msra.mxu0 0.0
        %4675 = vmatprep.subr.mxu0 0.0
        %4676 = vmatpush1.msra.mxu0 0.0
        %4677 = vmatprep.subr.mxu0 0.0
        %4678 = vmatpush1.msra.mxu0 0.0
        %4679 = vmatprep.subr.mxu0 0.0
        %4680 = vmatpush1.msra.mxu0 0.0
        %4681 = vmatprep.subr.mxu0 0.0
        %4682 = vmatpush1.msra.mxu0 0.0
        %4683 = vmatprep.subr.mxu0 0.0
        %4684 = vmatpush1.msra.mxu0 0.0
        %4685 = vmatprep.subr.mxu0 0.0
        %4686 = vmatpush1.msra.mxu0 0.0
        %4687 = vmatprep.subr.mxu0 0.0
        %4688 = vmatpush1.msra.mxu0 0.0
        %4689 = vmatprep.subr.mxu0 0.0
        %4690 = vmatpush1.msra.mxu0 0.0
        %4691 = vmatprep.mubr.f32.mxu0 0.0
        %4692 = vmatmul.mubr.f32.gmra.mrb[0].mxu0 %v4608
        %v4693 = vpop.f32.mrb[0].mxu0
        %v4694 = vadd.f32 0.0, %v4693
        %v4695 = vpop.f32.mrb[0].mxu0
        %4696 = vmatprep.mubr.f32.mxu0 0.0
        %4697 = vmatmul.mubr.f32.gmra.mrb[0].mxu0 %v4609
        %v4698 = vpop.f32.mrb[0].mxu0
        %v4699 = vadd.f32 0.0, %v4698
        %v4700 = vpop.f32.mrb[0].mxu0
        %4701 = vdwg.mxu0
        %v4702 = vadd.f32 %v4605, %v4694
        %v4703 = vadd.f32 %v4606, %v4699
        %s4704 = scalar_lea.vmem [#allocation4], 48
        %v4705 = vld [vmem:[%s4704] sm:$0xff]
        %v4706 = vld [vmem:[%s4704 + $0x8] sm:$0xff]
        %s4707 = scalar_lea.vmem [#allocation15], 768
        %v4708 = vld [vmem:[%s4707] sm:$0xff]
        %v4709 = vld [vmem:[%s4707 + $0x8] sm:$0xff]
        %v4710 = vld [vmem:[%s4707 + $0x10] sm:$0xff]
        %v4711 = vld [vmem:[%s4707 + $0x18] sm:$0xff]
        %v4712 = vld [vmem:[%s4707 + $0x20] sm:$0xff]
        %v4713 = vld [vmem:[%s4707 + $0x28] sm:$0xff]
        %v4714 = vld [vmem:[%s4707 + $0x30] sm:$0xff]
        %v4715 = vld [vmem:[%s4707 + $0x38] sm:$0xff]
        %v4716 = vld [vmem:[%s4707 + $0x40] sm:$0xff]
        %v4717 = vld [vmem:[%s4707 + $0x48] sm:$0xff]
        %v4718 = vld [vmem:[%s4707 + $0x50] sm:$0xff]
        %v4719 = vld [vmem:[%s4707 + $0x58] sm:$0xff]
        %v4720 = vld [vmem:[%s4707 + $0x60] sm:$0xff]
        %v4721 = vld [vmem:[%s4707 + $0x68] sm:$0xff]
        %v4722 = vld [vmem:[%s4707 + $0x70] sm:$0xff]
        %v4723 = vld [vmem:[%s4707 + $0x78] sm:$0xff]
        %4724 = vmatprep.subr.mxu0 0.0
        %4725 = vmatpush1.msra.mxu0 %v4708
        %4726 = vmatprep.subr.mxu0 0.0
        %4727 = vmatpush1.msra.mxu0 %v4709
        %4728 = vmatprep.subr.mxu0 0.0
        %4729 = vmatpush1.msra.mxu0 %v4710
        %4730 = vmatprep.subr.mxu0 0.0
        %4731 = vmatpush1.msra.mxu0 %v4711
        %4732 = vmatprep.subr.mxu0 0.0
        %4733 = vmatpush1.msra.mxu0 %v4712
        %4734 = vmatprep.subr.mxu0 0.0
        %4735 = vmatpush1.msra.mxu0 %v4713
        %4736 = vmatprep.subr.mxu0 0.0
        %4737 = vmatpush1.msra.mxu0 %v4714
        %4738 = vmatprep.subr.mxu0 0.0
        %4739 = vmatpush1.msra.mxu0 %v4715
        %4740 = vmatprep.subr.mxu0 0.0
        %4741 = vmatpush1.msra.mxu0 %v4716
        %4742 = vmatprep.subr.mxu0 0.0
        %4743 = vmatpush1.msra.mxu0 %v4717
        %4744 = vmatprep.subr.mxu0 0.0
        %4745 = vmatpush1.msra.mxu0 %v4718
        %4746 = vmatprep.subr.mxu0 0.0
        %4747 = vmatpush1.msra.mxu0 %v4719
        %4748 = vmatprep.subr.mxu0 0.0
        %4749 = vmatpush1.msra.mxu0 %v4720
        %4750 = vmatprep.subr.mxu0 0.0
        %4751 = vmatpush1.msra.mxu0 %v4721
        %4752 = vmatprep.subr.mxu0 0.0
        %4753 = vmatpush1.msra.mxu0 %v4722
        %4754 = vmatprep.subr.mxu0 0.0
        %4755 = vmatpush1.msra.mxu0 %v4723
        %4756 = vmatprep.subr.mxu0 0.0
        %4757 = vmatpush1.msra.mxu0 0.0
        %4758 = vmatprep.subr.mxu0 0.0
        %4759 = vmatpush1.msra.mxu0 0.0
        %4760 = vmatprep.subr.mxu0 0.0
        %4761 = vmatpush1.msra.mxu0 0.0
        %4762 = vmatprep.subr.mxu0 0.0
        %4763 = vmatpush1.msra.mxu0 0.0
        %4764 = vmatprep.subr.mxu0 0.0
        %4765 = vmatpush1.msra.mxu0 0.0
        %4766 = vmatprep.subr.mxu0 0.0
        %4767 = vmatpush1.msra.mxu0 0.0
        %4768 = vmatprep.subr.mxu0 0.0
        %4769 = vmatpush1.msra.mxu0 0.0
        %4770 = vmatprep.subr.mxu0 0.0
        %4771 = vmatpush1.msra.mxu0 0.0
        %4772 = vmatprep.subr.mxu0 0.0
        %4773 = vmatpush1.msra.mxu0 0.0
        %4774 = vmatprep.subr.mxu0 0.0
        %4775 = vmatpush1.msra.mxu0 0.0
        %4776 = vmatprep.subr.mxu0 0.0
        %4777 = vmatpush1.msra.mxu0 0.0
        %4778 = vmatprep.subr.mxu0 0.0
        %4779 = vmatpush1.msra.mxu0 0.0
        %4780 = vmatprep.subr.mxu0 0.0
        %4781 = vmatpush1.msra.mxu0 0.0
        %4782 = vmatprep.subr.mxu0 0.0
        %4783 = vmatpush1.msra.mxu0 0.0
        %4784 = vmatprep.subr.mxu0 0.0
        %4785 = vmatpush1.msra.mxu0 0.0
        %4786 = vmatprep.subr.mxu0 0.0
        %4787 = vmatpush1.msra.mxu0 0.0
        %4788 = vmatprep.mubr.f32.mxu0 0.0
        %4789 = vmatmul.mubr.f32.gmra.mrb[0].mxu0 %v4705
        %v4790 = vpop.f32.mrb[0].mxu0
        %v4791 = vadd.f32 0.0, %v4790
        %v4792 = vpop.f32.mrb[0].mxu0
        %4793 = vmatprep.mubr.f32.mxu0 0.0
        %4794 = vmatmul.mubr.f32.gmra.mrb[0].mxu0 %v4706
        %v4795 = vpop.f32.mrb[0].mxu0
        %v4796 = vadd.f32 0.0, %v4795
        %v4797 = vpop.f32.mrb[0].mxu0
        %4798 = vdwg.mxu0
        %v4799 = vadd.f32 %v4702, %v4791
        %v4800 = vadd.f32 %v4703, %v4796
        %v4801 = vld [vmem:[%s4125] sm:$0xff]
        %v4802 = vld [vmem:[%s4125 + $0x8] sm:$0xff]
        %s4803 = scalar_lea.vmem [#allocation15], 896
        %v4804 = vld [vmem:[%s4803] sm:$0xff]
        %v4805 = vld [vmem:[%s4803 + $0x8] sm:$0xff]
        %v4806 = vld [vmem:[%s4803 + $0x10] sm:$0xff]
        %v4807 = vld [vmem:[%s4803 + $0x18] sm:$0xff]
        %v4808 = vld [vmem:[%s4803 + $0x20] sm:$0xff]
        %v4809 = vld [vmem:[%s4803 + $0x28] sm:$0xff]
        %v4810 = vld [vmem:[%s4803 + $0x30] sm:$0xff]
        %v4811 = vld [vmem:[%s4803 + $0x38] sm:$0xff]
        %v4812 = vld [vmem:[%s4803 + $0x40] sm:$0xff]
        %v4813 = vld [vmem:[%s4803 + $0x48] sm:$0xff]
        %v4814 = vld [vmem:[%s4803 + $0x50] sm:$0xff]
        %v4815 = vld [vmem:[%s4803 + $0x58] sm:$0xff]
        %v4816 = vld [vmem:[%s4803 + $0x60] sm:$0xff]
        %v4817 = vld [vmem:[%s4803 + $0x68] sm:$0xff]
        %v4818 = vld [vmem:[%s4803 + $0x70] sm:$0xff]
        %v4819 = vld [vmem:[%s4803 + $0x78] sm:$0xff]
        %4820 = vmatprep.subr.mxu0 0.0
        %4821 = vmatpush1.msra.mxu0 %v4804
        %4822 = vmatprep.subr.mxu0 0.0
        %4823 = vmatpush1.msra.mxu0 %v4805
        %4824 = vmatprep.subr.mxu0 0.0
        %4825 = vmatpush1.msra.mxu0 %v4806
        %4826 = vmatprep.subr.mxu0 0.0
        %4827 = vmatpush1.msra.mxu0 %v4807
        %4828 = vmatprep.subr.mxu0 0.0
        %4829 = vmatpush1.msra.mxu0 %v4808
        %4830 = vmatprep.subr.mxu0 0.0
        %4831 = vmatpush1.msra.mxu0 %v4809
        %4832 = vmatprep.subr.mxu0 0.0
        %4833 = vmatpush1.msra.mxu0 %v4810
        %4834 = vmatprep.subr.mxu0 0.0
        %4835 = vmatpush1.msra.mxu0 %v4811
        %4836 = vmatprep.subr.mxu0 0.0
        %4837 = vmatpush1.msra.mxu0 %v4812
        %4838 = vmatprep.subr.mxu0 0.0
        %4839 = vmatpush1.msra.mxu0 %v4813
        %4840 = vmatprep.subr.mxu0 0.0
        %4841 = vmatpush1.msra.mxu0 %v4814
        %4842 = vmatprep.subr.mxu0 0.0
        %4843 = vmatpush1.msra.mxu0 %v4815
        %4844 = vmatprep.subr.mxu0 0.0
        %4845 = vmatpush1.msra.mxu0 %v4816
        %4846 = vmatprep.subr.mxu0 0.0
        %4847 = vmatpush1.msra.mxu0 %v4817
        %4848 = vmatprep.subr.mxu0 0.0
        %4849 = vmatpush1.msra.mxu0 %v4818
        %4850 = vmatprep.subr.mxu0 0.0
        %4851 = vmatpush1.msra.mxu0 %v4819
        %4852 = vmatprep.subr.mxu0 0.0
        %4853 = vmatpush1.msra.mxu0 0.0
        %4854 = vmatprep.subr.mxu0 0.0
        %4855 = vmatpush1.msra.mxu0 0.0
        %4856 = vmatprep.subr.mxu0 0.0
        %4857 = vmatpush1.msra.mxu0 0.0
        %4858 = vmatprep.subr.mxu0 0.0
        %4859 = vmatpush1.msra.mxu0 0.0
        %4860 = vmatprep.subr.mxu0 0.0
        %4861 = vmatpush1.msra.mxu0 0.0
        %4862 = vmatprep.subr.mxu0 0.0
        %4863 = vmatpush1.msra.mxu0 0.0
        %4864 = vmatprep.subr.mxu0 0.0
        %4865 = vmatpush1.msra.mxu0 0.0
        %4866 = vmatprep.subr.mxu0 0.0
        %4867 = vmatpush1.msra.mxu0 0.0
        %4868 = vmatprep.subr.mxu0 0.0
        %4869 = vmatpush1.msra.mxu0 0.0
        %4870 = vmatprep.subr.mxu0 0.0
        %4871 = vmatpush1.msra.mxu0 0.0
        %4872 = vmatprep.subr.mxu0 0.0
        %4873 = vmatpush1.msra.mxu0 0.0
        %4874 = vmatprep.subr.mxu0 0.0
        %4875 = vmatpush1.msra.mxu0 0.0
        %4876 = vmatprep.subr.mxu0 0.0
        %4877 = vmatpush1.msra.mxu0 0.0
        %4878 = vmatprep.subr.mxu0 0.0
        %4879 = vmatpush1.msra.mxu0 0.0
        %4880 = vmatprep.subr.mxu0 0.0
        %4881 = vmatpush1.msra.mxu0 0.0
        %4882 = vmatprep.subr.mxu0 0.0
        %4883 = vmatpush1.msra.mxu0 0.0
        %4884 = vmatprep.mubr.f32.mxu0 0.0
        %4885 = vmatmul.mubr.f32.gmra.mrb[0].mxu0 %v4801
        %v4886 = vpop.f32.mrb[0].mxu0
        %v4887 = vadd.f32 0.0, %v4886
        %v4888 = vpop.f32.mrb[0].mxu0
        %4889 = vmatprep.mubr.f32.mxu0 0.0
        %4890 = vmatmul.mubr.f32.gmra.mrb[0].mxu0 %v4802
        %v4891 = vpop.f32.mrb[0].mxu0
        %v4892 = vadd.f32 0.0, %v4891
        %v4893 = vpop.f32.mrb[0].mxu0
        %4894 = vdwg.mxu0
        %v4895 = vadd.f32 %v4799, %v4887
        %v4896 = vadd.f32 %v4800, %v4892
        %v4897 = vld [vmem:[#allocation17] sm:$0x1]
        %v4899 = vlaneseq
        %v4900 = vshrl.u32 %v4899, 7
        %v4901 = vsub.s32 0, %v4900
        %v4902 = vrot.slane %v4897, %v4901
        %v4904 = vadd.f32 %v4895, %v4902
        %v4905 = vadd.f32 %v4896, %v4902
        %v4906 = vtanh.pop %v4904
        %v4907 = vtanh.pop %v4905
        %vm4908 = vcmask 31744
        %4909 = vst.msk [vmem:[%s376] sm:$0xff] %vm4908, %v4906
        %4910 = vst.msk [vmem:[%s376 + $0x8] sm:$0xff] %vm4908, %v4907
        %s4911 = sand.u32 %s187, 1
        %s4912 = scalar_lea.sflag [#allocation8], %s4911
        %s4913 = sand.u32 %s187, 1
        %s4914 = smul.addr %s4913, 16
        %s4915 = scalar_lea.vmem [#allocation18], %s4914
        // Predicated region
        $region77: #{conv_block_forward.1} parent=47 // pred_check
          %p4916 = pneg %p197
        $region78: #{conv_block_forward.1} parent=47 // pred_check_branch
          %4918 = sbr.rel (%p4916) target = $region80
        $region79: #{conv_block_forward.1} parent=47 // pred_region
          %s4920 = ssub.s32 256, 256
          %4921 = vsyncadd %s4912, %s4920
          %s4922 = smul.addr %s27, 128
          %s4923 = scalar_lea.hbm %s7, %s4922
          %s4924 = sshll.u32 %s4915, 4
          %s4925 = int_to_ptr.vmem [resolvable:$true] %s4924
          %4930 = dma.vmem_to_hbm [thread:$0]  %s4925, 256, %s4923, %s4912, 128, 256, 8
        $region80: #{conv_block_forward.1} parent=47 // pred_fallthru
          _
      $region48: #{conv_block_forward.1} parent=5 // pred_fallthru
        _
      %p4931 = scmp.le.s32.totalorder 2, %s22
      // Predicated region
      $region81: #{conv_block_forward.1} parent=5 // pred_check
        %p4932 = pneg %p4931
      $region82: #{conv_block_forward.1} parent=5 // pred_check_branch
        %4934 = sbr.rel (%p4932) target = $region84
      $region83: #{conv_block_forward.1} parent=5 // pred_region
        %s4935 = ssub.s32 %s22, 2
        // Predicated region
        $region85: #{conv_block_forward.1} parent=83 // pred_check
          %p4936 = pneg %p203
        $region86: #{conv_block_forward.1} parent=83 // pred_check_branch
          %4938 = sbr.rel (%p4936) target = $region88
        $region87: #{conv_block_forward.1} parent=83 // pred_region
          %s4939 = sand.u32 %s188, 1
          %s4940 = scalar_lea.sflag [#allocation8], %s4939
          %s4941 = sand.u32 %s188, 1
          %s4942 = smul.addr %s4941, 16
          %s4943 = scalar_lea.vmem [#allocation18], %s4942
          %4944 = dma.done %s4940, 256
        $region88: #{conv_block_forward.1} parent=83 // pred_fallthru
          _
      $region84: #{conv_block_forward.1} parent=5 // pred_fallthru
        _
    $region6: #{conv_block_forward.1} parent=1 // loop_footer
      %s26 = sadd.s32 1, %s22
    $region7: #{conv_block_forward.1} parent=1 // loop_footer_branch
      %21 = sbr.rel target = $region3
    $region8: #{conv_block_forward.1} parent=1 // loop_exit
      _
    %4945 = vsyncpa [#allocation7], 1
    %s4946 = scalar_lea.sflag [#allocation7], 1
    %4947 = vsyncpa %s4946, 1
    %4948 = vsyncpa [#allocation10], 1
    %4949 = vsyncpa [#allocation13], 1
    %4950 = vsyncpa [#allocation16], 1
    %4951 = vsyncpa [#allocation8], 1
    %s4952 = scalar_lea.sflag [#allocation8], 1
    %4953 = vsyncpa %s4952, 1

</llo_original>
